<compile_context>
chip_gen: v7x
topology: tpu7x:2x2x1
jax: 0.10.0
libtpu: 0.0.40
codegen_flags: <defaults>
</compile_context>

<pallas_src>
import functools

import jax
import jax.numpy as jnp
from jax import lax
from jax.experimental import pallas as pl
from jax.experimental.pallas import tpu as pltpu

D_HIDDEN = 1024
LN_EPS = 1e-12


def _round_up(n, m):
    return ((n + m - 1) // m) * m


def fc_cls_kernel(x_ref, w1_ref, gamma_ref, w2_ref, out_ref):
    # x_ref:     (TB, 1024)    bf16 input tile
    # w1_ref:    (1024, 1024)  bf16 classifier_fc.weight, pre-transposed (resident)
    # gamma_ref: (1, 1024)     f32 LayerNorm weight (resident)
    # w2_ref:    (1024, C_pad) bf16 classifier.weight, pre-transposed + lane-padded
    # out_ref:   (TB, C_pad)   f32
    x = x_ref[...]

    # Linear 1 (no bias): bf16 operands, f32 accumulation on the MXU.
    h = jnp.dot(x, w1_ref[...], preferred_element_type=jnp.float32)

    # LayerNorm over last dim, eps=1e-12, biased variance (PyTorch semantics).
    # One-pass stats: var = E[h^2] - mean^2, all in f32.
    inv_d = jnp.float32(1.0 / D_HIDDEN)
    mean = jnp.sum(h, axis=-1, keepdims=True) * inv_d
    mean_sq = jnp.sum(h * h, axis=-1, keepdims=True) * inv_d
    var = jnp.maximum(mean_sq - mean * mean, 0.0)
    hn = (h - mean) * lax.rsqrt(var + LN_EPS) * gamma_ref[...]
    # beta is frozen at zero in the module -> no bias add.

    # Tanh in f32 (EUP), then cast to bf16 only as the MXU operand.
    a = jnp.tanh(hn).astype(w2_ref.dtype)

    # Linear 2 (no bias): lane-dense (C_pad multiple of 128) output store.
    out_ref[...] = jnp.dot(a, w2_ref[...],
                           preferred_element_type=jnp.float32).astype(out_ref.dtype)


@functools.partial(jax.jit, static_argnames=("tile_b",))
def fc_cls_forward(x, w1_t, gamma, w2_t, *, tile_b=256):
    B, D = x.shape
    assert D == D_HIDDEN
    C = w2_t.shape[1]
    C_pad = _round_up(C, 128)          # lane-dense output store
    out_dtype = x.dtype
    mxu_dtype = jnp.bfloat16

    # bf16 MXU operands; pad classifier weight with zero columns to C_pad.
    x_mxu = x.astype(mxu_dtype)
    w1_mxu = w1_t.astype(mxu_dtype)
    w2_mxu = w2_t.astype(mxu_dtype)
    if C_pad != C:
        w2_mxu = jnp.pad(w2_mxu, ((0, 0), (0, C_pad - C)))
    gamma2d = gamma.reshape(1, D).astype(jnp.float32)

    # Batch tile: as large as possible (default 256), multiple of 8; when B is
    # big enough, keep >= 2 grid steps so both TensorCores are used on v7x.
    tb = min(tile_b, _round_up(B, 8))
    if B > 8 and pl.cdiv(B, tb) < 2:
        tb = max(8, _round_up(pl.cdiv(B, 2), 8))
    grid = (pl.cdiv(B, tb),)
    # Note: padded rows of a partial last tile flow through LN/tanh on garbage
    # data, but rows are independent end-to-end and padded rows are never
    # written back, so valid outputs are unaffected.

    itemsize = lambda a: a.size * jnp.dtype(a.dtype).itemsize
    cost = pl.CostEstimate(
        flops=2 * B * D * (D + C_pad),
        transcendentals=B * D,  # tanh
        bytes_accessed=(itemsize(x_mxu) + itemsize(w1_mxu) + itemsize(gamma2d)
                        + itemsize(w2_mxu) + B * C_pad * jnp.dtype(out_dtype).itemsize),
    )

    out = pl.pallas_call(
        fc_cls_kernel,
        out_shape=jax.ShapeDtypeStruct((B, C_pad), out_dtype),
        grid_spec=pltpu.PrefetchScalarGridSpec(
            num_scalar_prefetch=0,
            grid=grid,
            in_specs=[
                pl.BlockSpec((tb, D), lambda i: (i, 0)),       # x tile
                pl.BlockSpec((D, D), lambda i: (0, 0)),        # W1^T (resident)
                pl.BlockSpec((1, D), lambda i: (0, 0)),        # gamma (resident)
                pl.BlockSpec((D, C_pad), lambda i: (0, 0)),    # W2^T (resident)
            ],
            out_specs=pl.BlockSpec((tb, C_pad), lambda i: (i, 0)),
        ),
        compiler_params=pltpu.CompilerParams(
            dimension_semantics=("parallel",),
        ),
        cost_estimate=cost,
    )(x_mxu, w1_mxu, gamma2d, w2_mxu)

    return out[:, :C]


def fc_cls_reference_f32(x, w1_t, gamma, w2_t):
    h = x @ w1_t
    mean = jnp.mean(h, axis=-1, keepdims=True)
    var = jnp.mean((h - mean) ** 2, axis=-1, keepdims=True)
    hn = (h - mean) / jnp.sqrt(var + LN_EPS) * gamma
    return jnp.tanh(hn) @ w2_t


def fc_cls_reference_mxu(x, w1_t, gamma, w2_t):
    # Mimics the kernel's numerics: bf16 MXU operands, f32 everything else.
    h = jnp.dot(x.astype(jnp.bfloat16), w1_t.astype(jnp.bfloat16),
                preferred_element_type=jnp.float32)
    mean = jnp.mean(h, axis=-1, keepdims=True)
    var = jnp.maximum(jnp.mean(h * h, axis=-1, keepdims=True) - mean * mean, 0.0)
    hn = (h - mean) * lax.rsqrt(var + LN_EPS) * gamma
    a = jnp.tanh(hn).astype(jnp.bfloat16)
    return jnp.dot(a, w2_t.astype(jnp.bfloat16), preferred_element_type=jnp.float32)


if __name__ == "__main__":
    num_class = 16
    batch = 16

    key = jax.random.PRNGKey(0)
    k_x, k_w1, k_w2 = jax.random.split(key, 3)

    x = jax.random.normal(k_x, (batch, D_HIDDEN), dtype=jnp.float32)

    # weights_init_classifier: normal(std=0.001). nn.Linear weight is (out, in);
    # pre-transpose to (in, out) so the kernel computes plain x @ W.
    w1_t = (0.001 * jax.random.normal(k_w1, (D_HIDDEN, D_HIDDEN), jnp.float32)).T
    w2_t = (0.001 * jax.random.normal(k_w2, (num_class, D_HIDDEN), jnp.float32)).T

    # LayerNorm affine: weight init = 1 (bias frozen at 0, omitted).
    gamma = jnp.ones((D_HIDDEN,), dtype=jnp.float32)

    out = fc_cls_forward(x, w1_t, gamma, w2_t)
    out = jax.block_until_ready(out)
    assert out.shape == (batch, num_class)
    assert out.dtype == jnp.float32

    ref_mxu = fc_cls_reference_mxu(x, w1_t, gamma, w2_t)   # same numerics as kernel
    ref_f32 = fc_cls_reference_f32(x, w1_t, gamma, w2_t)   # pure f32 module semantics
    assert jnp.allclose(out, ref_mxu, atol=2e-4, rtol=1e-3), \
        float(jnp.max(jnp.abs(out - ref_mxu)))
    assert jnp.allclose(out, ref_f32, atol=5e-3, rtol=5e-2), \
        float(jnp.max(jnp.abs(out - ref_f32)))

    print("KERNEL_OK")
</pallas_src>

<mosaic_0001>
module attributes {stable_mosaic.version = 11 : i64} {
  func.func @fc_cls_kernel(%arg0: i32, %arg1: memref<8x1024xbf16, #tpu.memory_space<vmem>>, %arg2: memref<1024x1024xbf16, #tpu.memory_space<vmem>>, %arg3: memref<1x1024xf32, #tpu.memory_space<vmem>>, %arg4: memref<1024x128xbf16, #tpu.memory_space<vmem>>, %arg5: memref<8x128xf32, #tpu.memory_space<vmem>>) attributes {dimension_semantics = [#tpu.dimension_semantics<parallel>], iteration_bounds = array<i64: 2>, scalar_prefetch = 0 : i64, scratch_operands = 0 : i64, tpu.core_type = #tpu.core_type<tc>, window_params = [{transform_indices = @transform_0, window_bounds = array<i64: 8, 1024>}, {pipeline_mode = #tpu.pipeline_mode<synchronous>, transform_indices = @transform_1, window_bounds = array<i64: 1024, 1024>}, {pipeline_mode = #tpu.pipeline_mode<synchronous>, transform_indices = @transform_2, window_bounds = array<i64: 1, 1024>}, {pipeline_mode = #tpu.pipeline_mode<synchronous>, transform_indices = @transform_3, window_bounds = array<i64: 1024, 128>}, {transform_indices = @transform_4, window_bounds = array<i64: 8, 128>}]} {
    %c0 = arith.constant 0 : index
    %c0_0 = arith.constant 0 : index
    %0 = vector.load %arg1[%c0, %c0_0] : memref<8x1024xbf16, #tpu.memory_space<vmem>>, vector<8x1024xbf16>
    %c0_1 = arith.constant 0 : index
    %c0_2 = arith.constant 0 : index
    %1 = vector.load %arg2[%c0_1, %c0_2] : memref<1024x1024xbf16, #tpu.memory_space<vmem>>, vector<1024x1024xbf16>
    %cst = arith.constant dense<0.000000e+00> : vector<8x1024xf32>
    %2 = tpu.matmul %0, %1, %cst {dimension_numbers = #tpu.dot_dimension_numbers<[1], [0], [0], [1], [0, 0, 1, 1], [], []>} : vector<8x1024xbf16>, vector<1024x1024xbf16>, vector<8x1024xf32> -> vector<8x1024xf32>
    %cst_3 = arith.constant dense<0.000000e+00> : vector<8xf32>
    %3 = vector.multi_reduction <add>, %2, %cst_3 [1] : vector<8x1024xf32> to vector<8xf32>
    %4 = vector.shape_cast %3 : vector<8xf32> to vector<8x1xf32>
    %cst_4 = arith.constant 9.765625E-4 : f32
    %5 = vector.broadcast %cst_4 : f32 to vector<8x1xf32>
    %6 = arith.mulf %4, %5 : vector<8x1xf32>
    %7 = arith.mulf %2, %2 : vector<8x1024xf32>
    %cst_5 = arith.constant dense<0.000000e+00> : vector<8xf32>
    %8 = vector.multi_reduction <add>, %7, %cst_5 [1] : vector<8x1024xf32> to vector<8xf32>
    %9 = vector.shape_cast %8 : vector<8xf32> to vector<8x1xf32>
    %cst_6 = arith.constant 9.765625E-4 : f32
    %10 = vector.broadcast %cst_6 : f32 to vector<8x1xf32>
    %11 = arith.mulf %9, %10 : vector<8x1xf32>
    %12 = arith.mulf %6, %6 : vector<8x1xf32>
    %13 = arith.subf %11, %12 : vector<8x1xf32>
    %cst_7 = arith.constant 0.000000e+00 : f32
    %14 = vector.broadcast %cst_7 : f32 to vector<8x1xf32>
    %15 = arith.maximumf %13, %14 : vector<8x1xf32>
    %16 = vector.broadcast %6 : vector<8x1xf32> to vector<8x1024xf32>
    %17 = arith.subf %2, %16 : vector<8x1024xf32>
    %cst_8 = arith.constant 9.99999996E-13 : f32
    %18 = vector.broadcast %cst_8 : f32 to vector<8x1xf32>
    %19 = arith.addf %15, %18 : vector<8x1xf32>
    %20 = math.rsqrt %19 : vector<8x1xf32>
    %21 = vector.broadcast %20 : vector<8x1xf32> to vector<8x1024xf32>
    %22 = arith.mulf %17, %21 : vector<8x1024xf32>
    %c0_9 = arith.constant 0 : index
    %c0_10 = arith.constant 0 : index
    %23 = vector.load %arg3[%c0_9, %c0_10] : memref<1x1024xf32, #tpu.memory_space<vmem>>, vector<1x1024xf32>
    %24 = vector.broadcast %23 : vector<1x1024xf32> to vector<8x1024xf32>
    %25 = arith.mulf %22, %24 : vector<8x1024xf32>
    %26 = math.tanh %25 : vector<8x1024xf32>
    %27 = arith.truncf %26 : vector<8x1024xf32> to vector<8x1024xbf16>
    %c0_11 = arith.constant 0 : index
    %c0_12 = arith.constant 0 : index
    %28 = vector.load %arg4[%c0_11, %c0_12] : memref<1024x128xbf16, #tpu.memory_space<vmem>>, vector<1024x128xbf16>
    %cst_13 = arith.constant dense<0.000000e+00> : vector<8x128xf32>
    %29 = tpu.matmul %27, %28, %cst_13 {dimension_numbers = #tpu.dot_dimension_numbers<[1], [0], [0], [1], [0, 0, 1, 1], [], []>} : vector<8x1024xbf16>, vector<1024x128xbf16>, vector<8x128xf32> -> vector<8x128xf32>
    %c0_14 = arith.constant 0 : index
    %c0_15 = arith.constant 0 : index
    %30 = vector.load %arg5[%c0_14, %c0_15] : memref<8x128xf32, #tpu.memory_space<vmem>>, vector<8x128xf32>
    tpu.vector_store %arg5[%c0_14, %c0_15], %29 {strides = array<i32>} : memref<8x128xf32, #tpu.memory_space<vmem>>, vector<8x128xf32>,
    return
  }
  func.func @transform_0(%arg0: i32) -> (i32, i32) {
    %c0_i32 = arith.constant 0 : i32
    %c0_i32_0 = arith.constant 0 : i32
    return %arg0, %c0_i32 : i32, i32
  }
  func.func @transform_1(%arg0: i32) -> (i32, i32) {
    %c0_i32 = arith.constant 0 : i32
    %c0_i32_0 = arith.constant 0 : i32
    %c0_i32_1 = arith.constant 0 : i32
    return %c0_i32, %c0_i32_0 : i32, i32
  }
  func.func @transform_2(%arg0: i32) -> (i32, i32) {
    %c0_i32 = arith.constant 0 : i32
    %c0_i32_0 = arith.constant 0 : i32
    %c0_i32_1 = arith.constant 0 : i32
    return %c0_i32, %c0_i32_0 : i32, i32
  }
  func.func @transform_3(%arg0: i32) -> (i32, i32) {
    %c0_i32 = arith.constant 0 : i32
    %c0_i32_0 = arith.constant 0 : i32
    %c0_i32_1 = arith.constant 0 : i32
    return %c0_i32, %c0_i32_0 : i32, i32
  }
  func.func @transform_4(%arg0: i32) -> (i32, i32) {
    %c0_i32 = arith.constant 0 : i32
    %c0_i32_0 = arith.constant 0 : i32
    return %arg0, %c0_i32 : i32, i32
  }
}

</mosaic_0001>

<llo_original>
// kernel: fc_cls_forward.1
$region0: #{fc_cls_forward.1}
  #allocation0 [shape = 'u32[]', space=smem, size = 0x4, offset = 0x4, fixed_abs, tag = 'smem constant byte address 0x4 - core index']
  #allocation1 [shape = 'u32[144,128]{1,0:T(1,128)}', space=vmem, size = 0x12000, scoped, tag = 'internal scratch']
  %s0 = inlined_call_operand.vmem [shape: bf16[16,1024], index: 0, kind: input, shape index: {}]
  %s1 = inlined_call_operand.vmem [shape: bf16[1024,1024], index: 1, kind: input, shape index: {}]
  %s2 = inlined_call_operand.vmem [shape: f32[1,1024], index: 2, kind: input, shape index: {}]
  %s3 = inlined_call_operand.vmem [shape: bf16[1024,128], index: 3, kind: input, shape index: {}]
  %s4 = inlined_call_operand.hbm [shape: f32[16,128], index: 4, kind: output, shape index: {}]
  %s5 = sld [smem:[#allocation0]]
  $region49: #{fc_cls_forward.1} parent=0
    _
  %s7 = ssub.s32 1, %s5
  %s8 = scalar_select 0, %s7, %s5
  $region1: #{fc_cls_forward.1} parent=0
    #allocation2 [shape = 'u8[8192]{0}', space=vmem, size = 0x2000, scoped, tag = 'output window, operand 0']
    #allocation3 [shape = 's32[2]{0}', space=sflag, size = 0x8, scoped, tag = 'scoped memory for fc_cls_forward.1']
    %9 = vsyncpa [#allocation3], 0
    %s10 = scalar_lea.sflag [#allocation3], 1
    %11 = vsyncpa %s10, 0
    loop: start=0, step=1, limit=4
    $region2: #{fc_cls_forward.1} parent=1 // loop_pre_header
      _
    $region3: #{fc_cls_forward.1} parent=1 // loop_header
      %s13 = sphi 0, %s17
      %p14 = scmp.ge.s32.totalorder %s13, 4
      %s23 = sphi 0, %s25
      %s26 = sphi 0, %s23
      %s27 = sphi 0, %s26
      %s43 = sphi 0, %s27
      %s47 = sphi 0, %s47
      %s49 = sphi 0, %s47
      %s50 = sphi 0, %s49
      %s64 = sphi 0, %s50
      %s68 = sphi 0, %s68
      %s70 = sphi 0, %s68
      %s71 = sphi 0, %s70
      %s85 = sphi 0, %s71
      %s89 = sphi 0, %s89
      %s91 = sphi 0, %s89
      %s92 = sphi 0, %s91
      %s106 = sphi 0, %s92
      %s112 = sphi 0, %s114
      %s115 = sphi 0, %s112
      %s116 = sphi 0, %s115
      %s132 = sphi 0, %s116
    $region4: #{fc_cls_forward.1} parent=1 // loop_header_branch
      %16 = sbr.rel (%p14) target = $region8
    $region5: #{fc_cls_forward.1} parent=1 // loop_body
      %s18 = ssub.s32 %s13, 1
      %s19 = ssub.s32 %s13, 2
      %s20 = sadd.s32 %s13, 1
      %s21 = ssub.s32 %s13, %s20
      %p22 = scmp.eq.s32.totalorder %s21, 0
      %s24 = sadd.s32 %s23, 1
      %s25 = scalar_select %p22, %s23, %s24
      %p28 = pneg %p22
      %p29 = scmp.eq.s32.totalorder %s13, 1
      %p30 = por %p28, %p29
      %p31 = scmp.ne.s32.totalorder %s23, %s26
      %p32 = scmp.eq.s32.totalorder %s13, 0
      %p33 = por %p31, %p32
      %p34 = scmp.ne.s32.totalorder %s23, %s26
      %p35 = scmp.eq.s32.totalorder %s18, 1
      %p36 = por %p34, %p35
      %p37 = scmp.ne.s32.totalorder %s26, %s27
      %p38 = scmp.eq.s32.totalorder %s18, 0
      %p39 = por %p37, %p38
      %p40 = scmp.ne.s32.totalorder %s26, %s27
      %p41 = scmp.eq.s32.totalorder %s19, 1
      %p42 = por %p40, %p41
      %p44 = scmp.ne.s32.totalorder %s27, %s43
      %p45 = scmp.eq.s32.totalorder %s19, 0
      %p46 = por %p44, %p45
      %s48 = sadd.s32 %s47, 1
      %p51 = scmp.eq.s32.totalorder %s13, 1
      %p52 = scmp.ne.s32.totalorder %s47, %s49
      %p53 = scmp.eq.s32.totalorder %s13, 0
      %p54 = por %p52, %p53
      %p55 = scmp.ne.s32.totalorder %s47, %s49
      %p56 = scmp.eq.s32.totalorder %s18, 1
      %p57 = por %p55, %p56
      %p58 = scmp.ne.s32.totalorder %s49, %s50
      %p59 = scmp.eq.s32.totalorder %s18, 0
      %p60 = por %p58, %p59
      %p61 = scmp.ne.s32.totalorder %s49, %s50
      %p62 = scmp.eq.s32.totalorder %s19, 1
      %p63 = por %p61, %p62
      %p65 = scmp.ne.s32.totalorder %s50, %s64
      %p66 = scmp.eq.s32.totalorder %s19, 0
      %p67 = por %p65, %p66
      %s69 = sadd.s32 %s68, 1
      %p72 = scmp.eq.s32.totalorder %s13, 1
      %p73 = scmp.ne.s32.totalorder %s68, %s70
      %p74 = scmp.eq.s32.totalorder %s13, 0
      %p75 = por %p73, %p74
      %p76 = scmp.ne.s32.totalorder %s68, %s70
      %p77 = scmp.eq.s32.totalorder %s18, 1
      %p78 = por %p76, %p77
      %p79 = scmp.ne.s32.totalorder %s70, %s71
      %p80 = scmp.eq.s32.totalorder %s18, 0
      %p81 = por %p79, %p80
      %p82 = scmp.ne.s32.totalorder %s70, %s71
      %p83 = scmp.eq.s32.totalorder %s19, 1
      %p84 = por %p82, %p83
      %p86 = scmp.ne.s32.totalorder %s71, %s85
      %p87 = scmp.eq.s32.totalorder %s19, 0
      %p88 = por %p86, %p87
      %s90 = sadd.s32 %s89, 1
      %p93 = scmp.eq.s32.totalorder %s13, 1
      %p94 = scmp.ne.s32.totalorder %s89, %s91
      %p95 = scmp.eq.s32.totalorder %s13, 0
      %p96 = por %p94, %p95
      %p97 = scmp.ne.s32.totalorder %s89, %s91
      %p98 = scmp.eq.s32.totalorder %s18, 1
      %p99 = por %p97, %p98
      %p100 = scmp.ne.s32.totalorder %s91, %s92
      %p101 = scmp.eq.s32.totalorder %s18, 0
      %p102 = por %p100, %p101
      %p103 = scmp.ne.s32.totalorder %s91, %s92
      %p104 = scmp.eq.s32.totalorder %s19, 1
      %p105 = por %p103, %p104
      %p107 = scmp.ne.s32.totalorder %s92, %s106
      %p108 = scmp.eq.s32.totalorder %s19, 0
      %p109 = por %p107, %p108
      %s110 = ssub.s32 %s13, %s20
      %p111 = scmp.eq.s32.totalorder %s110, 0
      %s113 = sadd.s32 %s112, 1
      %s114 = scalar_select %p111, %s112, %s113
      %p117 = pneg %p111
      %p118 = scmp.eq.s32.totalorder %s13, 1
      %p119 = por %p117, %p118
      %p120 = scmp.ne.s32.totalorder %s112, %s115
      %p121 = scmp.eq.s32.totalorder %s13, 0
      %p122 = por %p120, %p121
      %p123 = scmp.ne.s32.totalorder %s112, %s115
      %p124 = scmp.eq.s32.totalorder %s18, 1
      %p125 = por %p123, %p124
      %p126 = scmp.ne.s32.totalorder %s115, %s116
      %p127 = scmp.eq.s32.totalorder %s18, 0
      %p128 = por %p126, %p127
      %p129 = scmp.ne.s32.totalorder %s115, %s116
      %p130 = scmp.eq.s32.totalorder %s19, 1
      %p131 = por %p129, %p130
      %p133 = scmp.ne.s32.totalorder %s116, %s132
      %p134 = scmp.eq.s32.totalorder %s19, 0
      %p135 = por %p133, %p134
      %p136 = scmp.le.s32.totalorder 1, %s13
      %p137 = scmp.lt.s32.totalorder %s13, 3
      %p138 = pnand %p136, %p137
      %p139 = pneg %p138
      // Predicated region
      $region9: #{fc_cls_forward.1} parent=5 // pred_check
        _
      $region10: #{fc_cls_forward.1} parent=5 // pred_check_branch
        %141 = sbr.rel (%p138) target = $region12
      $region11: #{fc_cls_forward.1} parent=5 // pred_region
        %s142 = ssub.s32 %s13, 1
        // Predicated region
        $region13: #{fc_cls_forward.1} parent=11 // pred_check
          %p143 = pneg %p60
        $region14: #{fc_cls_forward.1} parent=11 // pred_check_branch
          %145 = sbr.rel (%p143) target = $region16
        $region15: #{fc_cls_forward.1} parent=11 // pred_region
          _
        $region16: #{fc_cls_forward.1} parent=11 // pred_fallthru
          _
        // Predicated region
        $region17: #{fc_cls_forward.1} parent=11 // pred_check
          %p146 = pneg %p81
        $region18: #{fc_cls_forward.1} parent=11 // pred_check_branch
          %148 = sbr.rel (%p146) target = $region20
        $region19: #{fc_cls_forward.1} parent=11 // pred_region
          _
        $region20: #{fc_cls_forward.1} parent=11 // pred_fallthru
          _
        // Predicated region
        $region21: #{fc_cls_forward.1} parent=11 // pred_check
          %p149 = pneg %p102
        $region22: #{fc_cls_forward.1} parent=11 // pred_check_branch
          %151 = sbr.rel (%p149) target = $region24
        $region23: #{fc_cls_forward.1} parent=11 // pred_region
          _
        $region24: #{fc_cls_forward.1} parent=11 // pred_fallthru
          _
      $region12: #{fc_cls_forward.1} parent=5 // pred_fallthru
        _
      %p152 = scmp.lt.s32.totalorder %s13, 2
      // Predicated region
      $region25: #{fc_cls_forward.1} parent=5 // pred_check
        %p153 = pneg %p152
      $region26: #{fc_cls_forward.1} parent=5 // pred_check_branch
        %155 = sbr.rel (%p153) target = $region28
      $region27: #{fc_cls_forward.1} parent=5 // pred_region
        // Predicated region
        $region29: #{fc_cls_forward.1} parent=27 // pred_check
          %p156 = pneg %p33
        $region30: #{fc_cls_forward.1} parent=27 // pred_check_branch
          %158 = sbr.rel (%p156) target = $region32
        $region31: #{fc_cls_forward.1} parent=27 // pred_region
          %p159 = scmp.lt.s32.totalorder %s13, 1
          %s160 = scalar_select %p159, %s13, 1
          %s161 = smul.addr %s160, 8
          %s162 = smul.addr %s161, 4
          %s163 = scalar_lea.vmem %s0, %s162
        $region32: #{fc_cls_forward.1} parent=27 // pred_fallthru
          _
      $region28: #{fc_cls_forward.1} parent=5 // pred_fallthru
        _
      %p164 = scmp.le.s32.totalorder 1, %s13
      %p165 = scmp.lt.s32.totalorder %s13, 3
      %p166 = pnand %p164, %p165
      %p167 = pneg %p166
      // Predicated region
      $region33: #{fc_cls_forward.1} parent=5 // pred_check
        _
      $region34: #{fc_cls_forward.1} parent=5 // pred_check_branch
        %169 = sbr.rel (%p166) target = $region36
      $region35: #{fc_cls_forward.1} parent=5 // pred_region
        %s170 = ssub.s32 %s13, 1
        %p171 = scmp.lt.s32.totalorder %s18, 1
        %s172 = scalar_select %p171, %s18, 1
        %s173 = smul.addr %s172, 8
        %s174 = smul.addr %s173, 4
        %s175 = scalar_lea.vmem %s0, %s174
        %p176 = pneg %p39
        %p177 = pneg %p36
        %p178 = pneg %p60
        %p179 = pneg %p57
        %p180 = pneg %p81
        %p181 = pneg %p78
        %p182 = pneg %p102
        %p183 = pneg %p99
        %p184 = pneg %p128
        %p185 = pneg %p125
        %s186 = sand.u32 %s115, 1
        %s187 = scalar_lea.sflag [#allocation3], %s186
        %s188 = sand.u32 %s115, 1
        %s189 = smul.addr %s188, 8
        %s190 = scalar_lea.vmem [#allocation2], %s189
        %p191 = scmp.lt.s32.totalorder %s18, 1
        %s192 = scalar_select %p191, %s18, 1
        %s193 = smul.addr %s192, 8
        %s194 = smul.addr %s193, 4
        %s195 = scalar_lea.vmem %s0, %s194
        %v197 = vld [vmem:[%s195] sm:$0xff]
        %v198 = vld [vmem:[%s195 + $0x8] sm:$0xff]
        %v199 = vld [vmem:[%s195 + $0x10] sm:$0xff]
        %v200 = vld [vmem:[%s195 + $0x18] sm:$0xff]
        %v201 = vld [vmem:[%s1] sm:$0xff]
        %v202 = vld [vmem:[%s1 + $0x8] sm:$0xff]
        %v203 = vld [vmem:[%s1 + $0x10] sm:$0xff]
        %v204 = vld [vmem:[%s1 + $0x18] sm:$0xff]
        %v205 = vld [vmem:[%s1 + $0x20] sm:$0xff]
        %v206 = vld [vmem:[%s1 + $0x28] sm:$0xff]
        %v207 = vld [vmem:[%s1 + $0x30] sm:$0xff]
        %v208 = vld [vmem:[%s1 + $0x38] sm:$0xff]
        %v209 = vld [vmem:[%s1 + $0x40] sm:$0xff]
        %v210 = vld [vmem:[%s1 + $0x48] sm:$0xff]
        %v211 = vld [vmem:[%s1 + $0x50] sm:$0xff]
        %v212 = vld [vmem:[%s1 + $0x58] sm:$0xff]
        %v213 = vld [vmem:[%s1 + $0x60] sm:$0xff]
        %v214 = vld [vmem:[%s1 + $0x68] sm:$0xff]
        %v215 = vld [vmem:[%s1 + $0x70] sm:$0xff]
        %v216 = vld [vmem:[%s1 + $0x78] sm:$0xff]
        %v217 = vld [vmem:[%s1 + $0x80] sm:$0xff]
        %v218 = vld [vmem:[%s1 + $0x88] sm:$0xff]
        %v219 = vld [vmem:[%s1 + $0x90] sm:$0xff]
        %v220 = vld [vmem:[%s1 + $0x98] sm:$0xff]
        %v221 = vld [vmem:[%s1 + $0xa0] sm:$0xff]
        %v222 = vld [vmem:[%s1 + $0xa8] sm:$0xff]
        %v223 = vld [vmem:[%s1 + $0xb0] sm:$0xff]
        %v224 = vld [vmem:[%s1 + $0xb8] sm:$0xff]
        %v225 = vld [vmem:[%s1 + $0xc0] sm:$0xff]
        %v226 = vld [vmem:[%s1 + $0xc8] sm:$0xff]
        %v227 = vld [vmem:[%s1 + $0xd0] sm:$0xff]
        %v228 = vld [vmem:[%s1 + $0xd8] sm:$0xff]
        %v229 = vld [vmem:[%s1 + $0xe0] sm:$0xff]
        %v230 = vld [vmem:[%s1 + $0xe8] sm:$0xff]
        %v231 = vld [vmem:[%s1 + $0xf0] sm:$0xff]
        %v232 = vld [vmem:[%s1 + $0xf8] sm:$0xff]
        %v233 = vld [vmem:[%s1 + $0x100] sm:$0xff]
        %v234 = vld [vmem:[%s1 + $0x108] sm:$0xff]
        %v235 = vld [vmem:[%s1 + $0x110] sm:$0xff]
        %v236 = vld [vmem:[%s1 + $0x118] sm:$0xff]
        %v237 = vld [vmem:[%s1 + $0x120] sm:$0xff]
        %v238 = vld [vmem:[%s1 + $0x128] sm:$0xff]
        %v239 = vld [vmem:[%s1 + $0x130] sm:$0xff]
        %v240 = vld [vmem:[%s1 + $0x138] sm:$0xff]
        %v241 = vld [vmem:[%s1 + $0x140] sm:$0xff]
        %v242 = vld [vmem:[%s1 + $0x148] sm:$0xff]
        %v243 = vld [vmem:[%s1 + $0x150] sm:$0xff]
        %v244 = vld [vmem:[%s1 + $0x158] sm:$0xff]
        %v245 = vld [vmem:[%s1 + $0x160] sm:$0xff]
        %v246 = vld [vmem:[%s1 + $0x168] sm:$0xff]
        %v247 = vld [vmem:[%s1 + $0x170] sm:$0xff]
        %v248 = vld [vmem:[%s1 + $0x178] sm:$0xff]
        %v249 = vld [vmem:[%s1 + $0x180] sm:$0xff]
        %v250 = vld [vmem:[%s1 + $0x188] sm:$0xff]
        %v251 = vld [vmem:[%s1 + $0x190] sm:$0xff]
        %v252 = vld [vmem:[%s1 + $0x198] sm:$0xff]
        %v253 = vld [vmem:[%s1 + $0x1a0] sm:$0xff]
        %v254 = vld [vmem:[%s1 + $0x1a8] sm:$0xff]
        %v255 = vld [vmem:[%s1 + $0x1b0] sm:$0xff]
        %v256 = vld [vmem:[%s1 + $0x1b8] sm:$0xff]
        %v257 = vld [vmem:[%s1 + $0x1c0] sm:$0xff]
        %v258 = vld [vmem:[%s1 + $0x1c8] sm:$0xff]
        %v259 = vld [vmem:[%s1 + $0x1d0] sm:$0xff]
        %v260 = vld [vmem:[%s1 + $0x1d8] sm:$0xff]
        %v261 = vld [vmem:[%s1 + $0x1e0] sm:$0xff]
        %v262 = vld [vmem:[%s1 + $0x1e8] sm:$0xff]
        %v263 = vld [vmem:[%s1 + $0x1f0] sm:$0xff]
        %v264 = vld [vmem:[%s1 + $0x1f8] sm:$0xff]
        %v265 = vld [vmem:[%s1 + $0x200] sm:$0xff]
        %v266 = vld [vmem:[%s1 + $0x208] sm:$0xff]
        %v267 = vld [vmem:[%s1 + $0x210] sm:$0xff]
        %v268 = vld [vmem:[%s1 + $0x218] sm:$0xff]
        %v269 = vld [vmem:[%s1 + $0x220] sm:$0xff]
        %v270 = vld [vmem:[%s1 + $0x228] sm:$0xff]
        %v271 = vld [vmem:[%s1 + $0x230] sm:$0xff]
        %v272 = vld [vmem:[%s1 + $0x238] sm:$0xff]
        %v273 = vld [vmem:[%s1 + $0x240] sm:$0xff]
        %v274 = vld [vmem:[%s1 + $0x248] sm:$0xff]
        %v275 = vld [vmem:[%s1 + $0x250] sm:$0xff]
        %v276 = vld [vmem:[%s1 + $0x258] sm:$0xff]
        %v277 = vld [vmem:[%s1 + $0x260] sm:$0xff]
        %v278 = vld [vmem:[%s1 + $0x268] sm:$0xff]
        %v279 = vld [vmem:[%s1 + $0x270] sm:$0xff]
        %v280 = vld [vmem:[%s1 + $0x278] sm:$0xff]
        %v281 = vld [vmem:[%s1 + $0x280] sm:$0xff]
        %v282 = vld [vmem:[%s1 + $0x288] sm:$0xff]
        %v283 = vld [vmem:[%s1 + $0x290] sm:$0xff]
        %v284 = vld [vmem:[%s1 + $0x298] sm:$0xff]
        %v285 = vld [vmem:[%s1 + $0x2a0] sm:$0xff]
        %v286 = vld [vmem:[%s1 + $0x2a8] sm:$0xff]
        %v287 = vld [vmem:[%s1 + $0x2b0] sm:$0xff]
        %v288 = vld [vmem:[%s1 + $0x2b8] sm:$0xff]
        %v289 = vld [vmem:[%s1 + $0x2c0] sm:$0xff]
        %v290 = vld [vmem:[%s1 + $0x2c8] sm:$0xff]
        %v291 = vld [vmem:[%s1 + $0x2d0] sm:$0xff]
        %v292 = vld [vmem:[%s1 + $0x2d8] sm:$0xff]
        %v293 = vld [vmem:[%s1 + $0x2e0] sm:$0xff]
        %v294 = vld [vmem:[%s1 + $0x2e8] sm:$0xff]
        %v295 = vld [vmem:[%s1 + $0x2f0] sm:$0xff]
        %v296 = vld [vmem:[%s1 + $0x2f8] sm:$0xff]
        %v297 = vld [vmem:[%s1 + $0x300] sm:$0xff]
        %v298 = vld [vmem:[%s1 + $0x308] sm:$0xff]
        %v299 = vld [vmem:[%s1 + $0x310] sm:$0xff]
        %v300 = vld [vmem:[%s1 + $0x318] sm:$0xff]
        %v301 = vld [vmem:[%s1 + $0x320] sm:$0xff]
        %v302 = vld [vmem:[%s1 + $0x328] sm:$0xff]
        %v303 = vld [vmem:[%s1 + $0x330] sm:$0xff]
        %v304 = vld [vmem:[%s1 + $0x338] sm:$0xff]
        %v305 = vld [vmem:[%s1 + $0x340] sm:$0xff]
        %v306 = vld [vmem:[%s1 + $0x348] sm:$0xff]
        %v307 = vld [vmem:[%s1 + $0x350] sm:$0xff]
        %v308 = vld [vmem:[%s1 + $0x358] sm:$0xff]
        %v309 = vld [vmem:[%s1 + $0x360] sm:$0xff]
        %v310 = vld [vmem:[%s1 + $0x368] sm:$0xff]
        %v311 = vld [vmem:[%s1 + $0x370] sm:$0xff]
        %v312 = vld [vmem:[%s1 + $0x378] sm:$0xff]
        %v313 = vld [vmem:[%s1 + $0x380] sm:$0xff]
        %v314 = vld [vmem:[%s1 + $0x388] sm:$0xff]
        %v315 = vld [vmem:[%s1 + $0x390] sm:$0xff]
        %v316 = vld [vmem:[%s1 + $0x398] sm:$0xff]
        %v317 = vld [vmem:[%s1 + $0x3a0] sm:$0xff]
        %v318 = vld [vmem:[%s1 + $0x3a8] sm:$0xff]
        %v319 = vld [vmem:[%s1 + $0x3b0] sm:$0xff]
        %v320 = vld [vmem:[%s1 + $0x3b8] sm:$0xff]
        %v321 = vld [vmem:[%s1 + $0x3c0] sm:$0xff]
        %v322 = vld [vmem:[%s1 + $0x3c8] sm:$0xff]
        %v323 = vld [vmem:[%s1 + $0x3d0] sm:$0xff]
        %v324 = vld [vmem:[%s1 + $0x3d8] sm:$0xff]
        %v325 = vld [vmem:[%s1 + $0x3e0] sm:$0xff]
        %v326 = vld [vmem:[%s1 + $0x3e8] sm:$0xff]
        %v327 = vld [vmem:[%s1 + $0x3f0] sm:$0xff]
        %v328 = vld [vmem:[%s1 + $0x3f8] sm:$0xff]
        %v329 = vld [vmem:[%s1 + $0x400] sm:$0xff]
        %v330 = vld [vmem:[%s1 + $0x408] sm:$0xff]
        %v331 = vld [vmem:[%s1 + $0x410] sm:$0xff]
        %v332 = vld [vmem:[%s1 + $0x418] sm:$0xff]
        %v333 = vld [vmem:[%s1 + $0x420] sm:$0xff]
        %v334 = vld [vmem:[%s1 + $0x428] sm:$0xff]
        %v335 = vld [vmem:[%s1 + $0x430] sm:$0xff]
        %v336 = vld [vmem:[%s1 + $0x438] sm:$0xff]
        %v337 = vld [vmem:[%s1 + $0x440] sm:$0xff]
        %v338 = vld [vmem:[%s1 + $0x448] sm:$0xff]
        %v339 = vld [vmem:[%s1 + $0x450] sm:$0xff]
        %v340 = vld [vmem:[%s1 + $0x458] sm:$0xff]
        %v341 = vld [vmem:[%s1 + $0x460] sm:$0xff]
        %v342 = vld [vmem:[%s1 + $0x468] sm:$0xff]
        %v343 = vld [vmem:[%s1 + $0x470] sm:$0xff]
        %v344 = vld [vmem:[%s1 + $0x478] sm:$0xff]
        %v345 = vld [vmem:[%s1 + $0x480] sm:$0xff]
        %v346 = vld [vmem:[%s1 + $0x488] sm:$0xff]
        %v347 = vld [vmem:[%s1 + $0x490] sm:$0xff]
        %v348 = vld [vmem:[%s1 + $0x498] sm:$0xff]
        %v349 = vld [vmem:[%s1 + $0x4a0] sm:$0xff]
        %v350 = vld [vmem:[%s1 + $0x4a8] sm:$0xff]
        %v351 = vld [vmem:[%s1 + $0x4b0] sm:$0xff]
        %v352 = vld [vmem:[%s1 + $0x4b8] sm:$0xff]
        %v353 = vld [vmem:[%s1 + $0x4c0] sm:$0xff]
        %v354 = vld [vmem:[%s1 + $0x4c8] sm:$0xff]
        %v355 = vld [vmem:[%s1 + $0x4d0] sm:$0xff]
        %v356 = vld [vmem:[%s1 + $0x4d8] sm:$0xff]
        %v357 = vld [vmem:[%s1 + $0x4e0] sm:$0xff]
        %v358 = vld [vmem:[%s1 + $0x4e8] sm:$0xff]
        %v359 = vld [vmem:[%s1 + $0x4f0] sm:$0xff]
        %v360 = vld [vmem:[%s1 + $0x4f8] sm:$0xff]
        %v361 = vld [vmem:[%s1 + $0x500] sm:$0xff]
        %v362 = vld [vmem:[%s1 + $0x508] sm:$0xff]
        %v363 = vld [vmem:[%s1 + $0x510] sm:$0xff]
        %v364 = vld [vmem:[%s1 + $0x518] sm:$0xff]
        %v365 = vld [vmem:[%s1 + $0x520] sm:$0xff]
        %v366 = vld [vmem:[%s1 + $0x528] sm:$0xff]
        %v367 = vld [vmem:[%s1 + $0x530] sm:$0xff]
        %v368 = vld [vmem:[%s1 + $0x538] sm:$0xff]
        %v369 = vld [vmem:[%s1 + $0x540] sm:$0xff]
        %v370 = vld [vmem:[%s1 + $0x548] sm:$0xff]
        %v371 = vld [vmem:[%s1 + $0x550] sm:$0xff]
        %v372 = vld [vmem:[%s1 + $0x558] sm:$0xff]
        %v373 = vld [vmem:[%s1 + $0x560] sm:$0xff]
        %v374 = vld [vmem:[%s1 + $0x568] sm:$0xff]
        %v375 = vld [vmem:[%s1 + $0x570] sm:$0xff]
        %v376 = vld [vmem:[%s1 + $0x578] sm:$0xff]
        %v377 = vld [vmem:[%s1 + $0x580] sm:$0xff]
        %v378 = vld [vmem:[%s1 + $0x588] sm:$0xff]
        %v379 = vld [vmem:[%s1 + $0x590] sm:$0xff]
        %v380 = vld [vmem:[%s1 + $0x598] sm:$0xff]
        %v381 = vld [vmem:[%s1 + $0x5a0] sm:$0xff]
        %v382 = vld [vmem:[%s1 + $0x5a8] sm:$0xff]
        %v383 = vld [vmem:[%s1 + $0x5b0] sm:$0xff]
        %v384 = vld [vmem:[%s1 + $0x5b8] sm:$0xff]
        %v385 = vld [vmem:[%s1 + $0x5c0] sm:$0xff]
        %v386 = vld [vmem:[%s1 + $0x5c8] sm:$0xff]
        %v387 = vld [vmem:[%s1 + $0x5d0] sm:$0xff]
        %v388 = vld [vmem:[%s1 + $0x5d8] sm:$0xff]
        %v389 = vld [vmem:[%s1 + $0x5e0] sm:$0xff]
        %v390 = vld [vmem:[%s1 + $0x5e8] sm:$0xff]
        %v391 = vld [vmem:[%s1 + $0x5f0] sm:$0xff]
        %v392 = vld [vmem:[%s1 + $0x5f8] sm:$0xff]
        %v393 = vld [vmem:[%s1 + $0x600] sm:$0xff]
        %v394 = vld [vmem:[%s1 + $0x608] sm:$0xff]
        %v395 = vld [vmem:[%s1 + $0x610] sm:$0xff]
        %v396 = vld [vmem:[%s1 + $0x618] sm:$0xff]
        %v397 = vld [vmem:[%s1 + $0x620] sm:$0xff]
        %v398 = vld [vmem:[%s1 + $0x628] sm:$0xff]
        %v399 = vld [vmem:[%s1 + $0x630] sm:$0xff]
        %v400 = vld [vmem:[%s1 + $0x638] sm:$0xff]
        %v401 = vld [vmem:[%s1 + $0x640] sm:$0xff]
        %v402 = vld [vmem:[%s1 + $0x648] sm:$0xff]
        %v403 = vld [vmem:[%s1 + $0x650] sm:$0xff]
        %v404 = vld [vmem:[%s1 + $0x658] sm:$0xff]
        %v405 = vld [vmem:[%s1 + $0x660] sm:$0xff]
        %v406 = vld [vmem:[%s1 + $0x668] sm:$0xff]
        %v407 = vld [vmem:[%s1 + $0x670] sm:$0xff]
        %v408 = vld [vmem:[%s1 + $0x678] sm:$0xff]
        %v409 = vld [vmem:[%s1 + $0x680] sm:$0xff]
        %v410 = vld [vmem:[%s1 + $0x688] sm:$0xff]
        %v411 = vld [vmem:[%s1 + $0x690] sm:$0xff]
        %v412 = vld [vmem:[%s1 + $0x698] sm:$0xff]
        %v413 = vld [vmem:[%s1 + $0x6a0] sm:$0xff]
        %v414 = vld [vmem:[%s1 + $0x6a8] sm:$0xff]
        %v415 = vld [vmem:[%s1 + $0x6b0] sm:$0xff]
        %v416 = vld [vmem:[%s1 + $0x6b8] sm:$0xff]
        %v417 = vld [vmem:[%s1 + $0x6c0] sm:$0xff]
        %v418 = vld [vmem:[%s1 + $0x6c8] sm:$0xff]
        %v419 = vld [vmem:[%s1 + $0x6d0] sm:$0xff]
        %v420 = vld [vmem:[%s1 + $0x6d8] sm:$0xff]
        %v421 = vld [vmem:[%s1 + $0x6e0] sm:$0xff]
        %v422 = vld [vmem:[%s1 + $0x6e8] sm:$0xff]
        %v423 = vld [vmem:[%s1 + $0x6f0] sm:$0xff]
        %v424 = vld [vmem:[%s1 + $0x6f8] sm:$0xff]
        %v425 = vld [vmem:[%s1 + $0x700] sm:$0xff]
        %v426 = vld [vmem:[%s1 + $0x708] sm:$0xff]
        %v427 = vld [vmem:[%s1 + $0x710] sm:$0xff]
        %v428 = vld [vmem:[%s1 + $0x718] sm:$0xff]
        %v429 = vld [vmem:[%s1 + $0x720] sm:$0xff]
        %v430 = vld [vmem:[%s1 + $0x728] sm:$0xff]
        %v431 = vld [vmem:[%s1 + $0x730] sm:$0xff]
        %v432 = vld [vmem:[%s1 + $0x738] sm:$0xff]
        %v433 = vld [vmem:[%s1 + $0x740] sm:$0xff]
        %v434 = vld [vmem:[%s1 + $0x748] sm:$0xff]
        %v435 = vld [vmem:[%s1 + $0x750] sm:$0xff]
        %v436 = vld [vmem:[%s1 + $0x758] sm:$0xff]
        %v437 = vld [vmem:[%s1 + $0x760] sm:$0xff]
        %v438 = vld [vmem:[%s1 + $0x768] sm:$0xff]
        %v439 = vld [vmem:[%s1 + $0x770] sm:$0xff]
        %v440 = vld [vmem:[%s1 + $0x778] sm:$0xff]
        %v441 = vld [vmem:[%s1 + $0x780] sm:$0xff]
        %v442 = vld [vmem:[%s1 + $0x788] sm:$0xff]
        %v443 = vld [vmem:[%s1 + $0x790] sm:$0xff]
        %v444 = vld [vmem:[%s1 + $0x798] sm:$0xff]
        %v445 = vld [vmem:[%s1 + $0x7a0] sm:$0xff]
        %v446 = vld [vmem:[%s1 + $0x7a8] sm:$0xff]
        %v447 = vld [vmem:[%s1 + $0x7b0] sm:$0xff]
        %v448 = vld [vmem:[%s1 + $0x7b8] sm:$0xff]
        %v449 = vld [vmem:[%s1 + $0x7c0] sm:$0xff]
        %v450 = vld [vmem:[%s1 + $0x7c8] sm:$0xff]
        %v451 = vld [vmem:[%s1 + $0x7d0] sm:$0xff]
        %v452 = vld [vmem:[%s1 + $0x7d8] sm:$0xff]
        %v453 = vld [vmem:[%s1 + $0x7e0] sm:$0xff]
        %v454 = vld [vmem:[%s1 + $0x7e8] sm:$0xff]
        %v455 = vld [vmem:[%s1 + $0x7f0] sm:$0xff]
        %v456 = vld [vmem:[%s1 + $0x7f8] sm:$0xff]
        %v457 = vld [vmem:[%s1 + $0x800] sm:$0xff]
        %v458 = vld [vmem:[%s1 + $0x808] sm:$0xff]
        %v459 = vld [vmem:[%s1 + $0x810] sm:$0xff]
        %v460 = vld [vmem:[%s1 + $0x818] sm:$0xff]
        %v461 = vld [vmem:[%s1 + $0x820] sm:$0xff]
        %v462 = vld [vmem:[%s1 + $0x828] sm:$0xff]
        %v463 = vld [vmem:[%s1 + $0x830] sm:$0xff]
        %v464 = vld [vmem:[%s1 + $0x838] sm:$0xff]
        %v465 = vld [vmem:[%s1 + $0x840] sm:$0xff]
        %v466 = vld [vmem:[%s1 + $0x848] sm:$0xff]
        %v467 = vld [vmem:[%s1 + $0x850] sm:$0xff]
        %v468 = vld [vmem:[%s1 + $0x858] sm:$0xff]
        %v469 = vld [vmem:[%s1 + $0x860] sm:$0xff]
        %v470 = vld [vmem:[%s1 + $0x868] sm:$0xff]
        %v471 = vld [vmem:[%s1 + $0x870] sm:$0xff]
        %v472 = vld [vmem:[%s1 + $0x878] sm:$0xff]
        %v473 = vld [vmem:[%s1 + $0x880] sm:$0xff]
        %v474 = vld [vmem:[%s1 + $0x888] sm:$0xff]
        %v475 = vld [vmem:[%s1 + $0x890] sm:$0xff]
        %v476 = vld [vmem:[%s1 + $0x898] sm:$0xff]
        %v477 = vld [vmem:[%s1 + $0x8a0] sm:$0xff]
        %v478 = vld [vmem:[%s1 + $0x8a8] sm:$0xff]
        %v479 = vld [vmem:[%s1 + $0x8b0] sm:$0xff]
        %v480 = vld [vmem:[%s1 + $0x8b8] sm:$0xff]
        %v481 = vld [vmem:[%s1 + $0x8c0] sm:$0xff]
        %v482 = vld [vmem:[%s1 + $0x8c8] sm:$0xff]
        %v483 = vld [vmem:[%s1 + $0x8d0] sm:$0xff]
        %v484 = vld [vmem:[%s1 + $0x8d8] sm:$0xff]
        %v485 = vld [vmem:[%s1 + $0x8e0] sm:$0xff]
        %v486 = vld [vmem:[%s1 + $0x8e8] sm:$0xff]
        %v487 = vld [vmem:[%s1 + $0x8f0] sm:$0xff]
        %v488 = vld [vmem:[%s1 + $0x8f8] sm:$0xff]
        %v489 = vld [vmem:[%s1 + $0x900] sm:$0xff]
        %v490 = vld [vmem:[%s1 + $0x908] sm:$0xff]
        %v491 = vld [vmem:[%s1 + $0x910] sm:$0xff]
        %v492 = vld [vmem:[%s1 + $0x918] sm:$0xff]
        %v493 = vld [vmem:[%s1 + $0x920] sm:$0xff]
        %v494 = vld [vmem:[%s1 + $0x928] sm:$0xff]
        %v495 = vld [vmem:[%s1 + $0x930] sm:$0xff]
        %v496 = vld [vmem:[%s1 + $0x938] sm:$0xff]
        %v497 = vld [vmem:[%s1 + $0x940] sm:$0xff]
        %v498 = vld [vmem:[%s1 + $0x948] sm:$0xff]
        %v499 = vld [vmem:[%s1 + $0x950] sm:$0xff]
        %v500 = vld [vmem:[%s1 + $0x958] sm:$0xff]
        %v501 = vld [vmem:[%s1 + $0x960] sm:$0xff]
        %v502 = vld [vmem:[%s1 + $0x968] sm:$0xff]
        %v503 = vld [vmem:[%s1 + $0x970] sm:$0xff]
        %v504 = vld [vmem:[%s1 + $0x978] sm:$0xff]
        %v505 = vld [vmem:[%s1 + $0x980] sm:$0xff]
        %v506 = vld [vmem:[%s1 + $0x988] sm:$0xff]
        %v507 = vld [vmem:[%s1 + $0x990] sm:$0xff]
        %v508 = vld [vmem:[%s1 + $0x998] sm:$0xff]
        %v509 = vld [vmem:[%s1 + $0x9a0] sm:$0xff]
        %v510 = vld [vmem:[%s1 + $0x9a8] sm:$0xff]
        %v511 = vld [vmem:[%s1 + $0x9b0] sm:$0xff]
        %v512 = vld [vmem:[%s1 + $0x9b8] sm:$0xff]
        %v513 = vld [vmem:[%s1 + $0x9c0] sm:$0xff]
        %v514 = vld [vmem:[%s1 + $0x9c8] sm:$0xff]
        %v515 = vld [vmem:[%s1 + $0x9d0] sm:$0xff]
        %v516 = vld [vmem:[%s1 + $0x9d8] sm:$0xff]
        %v517 = vld [vmem:[%s1 + $0x9e0] sm:$0xff]
        %v518 = vld [vmem:[%s1 + $0x9e8] sm:$0xff]
        %v519 = vld [vmem:[%s1 + $0x9f0] sm:$0xff]
        %v520 = vld [vmem:[%s1 + $0x9f8] sm:$0xff]
        %v521 = vld [vmem:[%s1 + $0xa00] sm:$0xff]
        %v522 = vld [vmem:[%s1 + $0xa08] sm:$0xff]
        %v523 = vld [vmem:[%s1 + $0xa10] sm:$0xff]
        %v524 = vld [vmem:[%s1 + $0xa18] sm:$0xff]
        %v525 = vld [vmem:[%s1 + $0xa20] sm:$0xff]
        %v526 = vld [vmem:[%s1 + $0xa28] sm:$0xff]
        %v527 = vld [vmem:[%s1 + $0xa30] sm:$0xff]
        %v528 = vld [vmem:[%s1 + $0xa38] sm:$0xff]
        %v529 = vld [vmem:[%s1 + $0xa40] sm:$0xff]
        %v530 = vld [vmem:[%s1 + $0xa48] sm:$0xff]
        %v531 = vld [vmem:[%s1 + $0xa50] sm:$0xff]
        %v532 = vld [vmem:[%s1 + $0xa58] sm:$0xff]
        %v533 = vld [vmem:[%s1 + $0xa60] sm:$0xff]
        %v534 = vld [vmem:[%s1 + $0xa68] sm:$0xff]
        %v535 = vld [vmem:[%s1 + $0xa70] sm:$0xff]
        %v536 = vld [vmem:[%s1 + $0xa78] sm:$0xff]
        %v537 = vld [vmem:[%s1 + $0xa80] sm:$0xff]
        %v538 = vld [vmem:[%s1 + $0xa88] sm:$0xff]
        %v539 = vld [vmem:[%s1 + $0xa90] sm:$0xff]
        %v540 = vld [vmem:[%s1 + $0xa98] sm:$0xff]
        %v541 = vld [vmem:[%s1 + $0xaa0] sm:$0xff]
        %v542 = vld [vmem:[%s1 + $0xaa8] sm:$0xff]
        %v543 = vld [vmem:[%s1 + $0xab0] sm:$0xff]
        %v544 = vld [vmem:[%s1 + $0xab8] sm:$0xff]
        %v545 = vld [vmem:[%s1 + $0xac0] sm:$0xff]
        %v546 = vld [vmem:[%s1 + $0xac8] sm:$0xff]
        %v547 = vld [vmem:[%s1 + $0xad0] sm:$0xff]
        %v548 = vld [vmem:[%s1 + $0xad8] sm:$0xff]
        %v549 = vld [vmem:[%s1 + $0xae0] sm:$0xff]
        %v550 = vld [vmem:[%s1 + $0xae8] sm:$0xff]
        %v551 = vld [vmem:[%s1 + $0xaf0] sm:$0xff]
        %v552 = vld [vmem:[%s1 + $0xaf8] sm:$0xff]
        %v553 = vld [vmem:[%s1 + $0xb00] sm:$0xff]
        %v554 = vld [vmem:[%s1 + $0xb08] sm:$0xff]
        %v555 = vld [vmem:[%s1 + $0xb10] sm:$0xff]
        %v556 = vld [vmem:[%s1 + $0xb18] sm:$0xff]
        %v557 = vld [vmem:[%s1 + $0xb20] sm:$0xff]
        %v558 = vld [vmem:[%s1 + $0xb28] sm:$0xff]
        %v559 = vld [vmem:[%s1 + $0xb30] sm:$0xff]
        %v560 = vld [vmem:[%s1 + $0xb38] sm:$0xff]
        %v561 = vld [vmem:[%s1 + $0xb40] sm:$0xff]
        %v562 = vld [vmem:[%s1 + $0xb48] sm:$0xff]
        %v563 = vld [vmem:[%s1 + $0xb50] sm:$0xff]
        %v564 = vld [vmem:[%s1 + $0xb58] sm:$0xff]
        %v565 = vld [vmem:[%s1 + $0xb60] sm:$0xff]
        %v566 = vld [vmem:[%s1 + $0xb68] sm:$0xff]
        %v567 = vld [vmem:[%s1 + $0xb70] sm:$0xff]
        %v568 = vld [vmem:[%s1 + $0xb78] sm:$0xff]
        %v569 = vld [vmem:[%s1 + $0xb80] sm:$0xff]
        %v570 = vld [vmem:[%s1 + $0xb88] sm:$0xff]
        %v571 = vld [vmem:[%s1 + $0xb90] sm:$0xff]
        %v572 = vld [vmem:[%s1 + $0xb98] sm:$0xff]
        %v573 = vld [vmem:[%s1 + $0xba0] sm:$0xff]
        %v574 = vld [vmem:[%s1 + $0xba8] sm:$0xff]
        %v575 = vld [vmem:[%s1 + $0xbb0] sm:$0xff]
        %v576 = vld [vmem:[%s1 + $0xbb8] sm:$0xff]
        %v577 = vld [vmem:[%s1 + $0xbc0] sm:$0xff]
        %v578 = vld [vmem:[%s1 + $0xbc8] sm:$0xff]
        %v579 = vld [vmem:[%s1 + $0xbd0] sm:$0xff]
        %v580 = vld [vmem:[%s1 + $0xbd8] sm:$0xff]
        %v581 = vld [vmem:[%s1 + $0xbe0] sm:$0xff]
        %v582 = vld [vmem:[%s1 + $0xbe8] sm:$0xff]
        %v583 = vld [vmem:[%s1 + $0xbf0] sm:$0xff]
        %v584 = vld [vmem:[%s1 + $0xbf8] sm:$0xff]
        %v585 = vld [vmem:[%s1 + $0xc00] sm:$0xff]
        %v586 = vld [vmem:[%s1 + $0xc08] sm:$0xff]
        %v587 = vld [vmem:[%s1 + $0xc10] sm:$0xff]
        %v588 = vld [vmem:[%s1 + $0xc18] sm:$0xff]
        %v589 = vld [vmem:[%s1 + $0xc20] sm:$0xff]
        %v590 = vld [vmem:[%s1 + $0xc28] sm:$0xff]
        %v591 = vld [vmem:[%s1 + $0xc30] sm:$0xff]
        %v592 = vld [vmem:[%s1 + $0xc38] sm:$0xff]
        %v593 = vld [vmem:[%s1 + $0xc40] sm:$0xff]
        %v594 = vld [vmem:[%s1 + $0xc48] sm:$0xff]
        %v595 = vld [vmem:[%s1 + $0xc50] sm:$0xff]
        %v596 = vld [vmem:[%s1 + $0xc58] sm:$0xff]
        %v597 = vld [vmem:[%s1 + $0xc60] sm:$0xff]
        %v598 = vld [vmem:[%s1 + $0xc68] sm:$0xff]
        %v599 = vld [vmem:[%s1 + $0xc70] sm:$0xff]
        %v600 = vld [vmem:[%s1 + $0xc78] sm:$0xff]
        %v601 = vld [vmem:[%s1 + $0xc80] sm:$0xff]
        %v602 = vld [vmem:[%s1 + $0xc88] sm:$0xff]
        %v603 = vld [vmem:[%s1 + $0xc90] sm:$0xff]
        %v604 = vld [vmem:[%s1 + $0xc98] sm:$0xff]
        %v605 = vld [vmem:[%s1 + $0xca0] sm:$0xff]
        %v606 = vld [vmem:[%s1 + $0xca8] sm:$0xff]
        %v607 = vld [vmem:[%s1 + $0xcb0] sm:$0xff]
        %v608 = vld [vmem:[%s1 + $0xcb8] sm:$0xff]
        %v609 = vld [vmem:[%s1 + $0xcc0] sm:$0xff]
        %v610 = vld [vmem:[%s1 + $0xcc8] sm:$0xff]
        %v611 = vld [vmem:[%s1 + $0xcd0] sm:$0xff]
        %v612 = vld [vmem:[%s1 + $0xcd8] sm:$0xff]
        %v613 = vld [vmem:[%s1 + $0xce0] sm:$0xff]
        %v614 = vld [vmem:[%s1 + $0xce8] sm:$0xff]
        %v615 = vld [vmem:[%s1 + $0xcf0] sm:$0xff]
        %v616 = vld [vmem:[%s1 + $0xcf8] sm:$0xff]
        %v617 = vld [vmem:[%s1 + $0xd00] sm:$0xff]
        %v618 = vld [vmem:[%s1 + $0xd08] sm:$0xff]
        %v619 = vld [vmem:[%s1 + $0xd10] sm:$0xff]
        %v620 = vld [vmem:[%s1 + $0xd18] sm:$0xff]
        %v621 = vld [vmem:[%s1 + $0xd20] sm:$0xff]
        %v622 = vld [vmem:[%s1 + $0xd28] sm:$0xff]
        %v623 = vld [vmem:[%s1 + $0xd30] sm:$0xff]
        %v624 = vld [vmem:[%s1 + $0xd38] sm:$0xff]
        %v625 = vld [vmem:[%s1 + $0xd40] sm:$0xff]
        %v626 = vld [vmem:[%s1 + $0xd48] sm:$0xff]
        %v627 = vld [vmem:[%s1 + $0xd50] sm:$0xff]
        %v628 = vld [vmem:[%s1 + $0xd58] sm:$0xff]
        %v629 = vld [vmem:[%s1 + $0xd60] sm:$0xff]
        %v630 = vld [vmem:[%s1 + $0xd68] sm:$0xff]
        %v631 = vld [vmem:[%s1 + $0xd70] sm:$0xff]
        %v632 = vld [vmem:[%s1 + $0xd78] sm:$0xff]
        %v633 = vld [vmem:[%s1 + $0xd80] sm:$0xff]
        %v634 = vld [vmem:[%s1 + $0xd88] sm:$0xff]
        %v635 = vld [vmem:[%s1 + $0xd90] sm:$0xff]
        %v636 = vld [vmem:[%s1 + $0xd98] sm:$0xff]
        %v637 = vld [vmem:[%s1 + $0xda0] sm:$0xff]
        %v638 = vld [vmem:[%s1 + $0xda8] sm:$0xff]
        %v639 = vld [vmem:[%s1 + $0xdb0] sm:$0xff]
        %v640 = vld [vmem:[%s1 + $0xdb8] sm:$0xff]
        %v641 = vld [vmem:[%s1 + $0xdc0] sm:$0xff]
        %v642 = vld [vmem:[%s1 + $0xdc8] sm:$0xff]
        %v643 = vld [vmem:[%s1 + $0xdd0] sm:$0xff]
        %v644 = vld [vmem:[%s1 + $0xdd8] sm:$0xff]
        %v645 = vld [vmem:[%s1 + $0xde0] sm:$0xff]
        %v646 = vld [vmem:[%s1 + $0xde8] sm:$0xff]
        %v647 = vld [vmem:[%s1 + $0xdf0] sm:$0xff]
        %v648 = vld [vmem:[%s1 + $0xdf8] sm:$0xff]
        %v649 = vld [vmem:[%s1 + $0xe00] sm:$0xff]
        %v650 = vld [vmem:[%s1 + $0xe08] sm:$0xff]
        %v651 = vld [vmem:[%s1 + $0xe10] sm:$0xff]
        %v652 = vld [vmem:[%s1 + $0xe18] sm:$0xff]
        %v653 = vld [vmem:[%s1 + $0xe20] sm:$0xff]
        %v654 = vld [vmem:[%s1 + $0xe28] sm:$0xff]
        %v655 = vld [vmem:[%s1 + $0xe30] sm:$0xff]
        %v656 = vld [vmem:[%s1 + $0xe38] sm:$0xff]
        %v657 = vld [vmem:[%s1 + $0xe40] sm:$0xff]
        %v658 = vld [vmem:[%s1 + $0xe48] sm:$0xff]
        %v659 = vld [vmem:[%s1 + $0xe50] sm:$0xff]
        %v660 = vld [vmem:[%s1 + $0xe58] sm:$0xff]
        %v661 = vld [vmem:[%s1 + $0xe60] sm:$0xff]
        %v662 = vld [vmem:[%s1 + $0xe68] sm:$0xff]
        %v663 = vld [vmem:[%s1 + $0xe70] sm:$0xff]
        %v664 = vld [vmem:[%s1 + $0xe78] sm:$0xff]
        %v665 = vld [vmem:[%s1 + $0xe80] sm:$0xff]
        %v666 = vld [vmem:[%s1 + $0xe88] sm:$0xff]
        %v667 = vld [vmem:[%s1 + $0xe90] sm:$0xff]
        %v668 = vld [vmem:[%s1 + $0xe98] sm:$0xff]
        %v669 = vld [vmem:[%s1 + $0xea0] sm:$0xff]
        %v670 = vld [vmem:[%s1 + $0xea8] sm:$0xff]
        %v671 = vld [vmem:[%s1 + $0xeb0] sm:$0xff]
        %v672 = vld [vmem:[%s1 + $0xeb8] sm:$0xff]
        %v673 = vld [vmem:[%s1 + $0xec0] sm:$0xff]
        %v674 = vld [vmem:[%s1 + $0xec8] sm:$0xff]
        %v675 = vld [vmem:[%s1 + $0xed0] sm:$0xff]
        %v676 = vld [vmem:[%s1 + $0xed8] sm:$0xff]
        %v677 = vld [vmem:[%s1 + $0xee0] sm:$0xff]
        %v678 = vld [vmem:[%s1 + $0xee8] sm:$0xff]
        %v679 = vld [vmem:[%s1 + $0xef0] sm:$0xff]
        %v680 = vld [vmem:[%s1 + $0xef8] sm:$0xff]
        %v681 = vld [vmem:[%s1 + $0xf00] sm:$0xff]
        %v682 = vld [vmem:[%s1 + $0xf08] sm:$0xff]
        %v683 = vld [vmem:[%s1 + $0xf10] sm:$0xff]
        %v684 = vld [vmem:[%s1 + $0xf18] sm:$0xff]
        %v685 = vld [vmem:[%s1 + $0xf20] sm:$0xff]
        %v686 = vld [vmem:[%s1 + $0xf28] sm:$0xff]
        %v687 = vld [vmem:[%s1 + $0xf30] sm:$0xff]
        %v688 = vld [vmem:[%s1 + $0xf38] sm:$0xff]
        %v689 = vld [vmem:[%s1 + $0xf40] sm:$0xff]
        %v690 = vld [vmem:[%s1 + $0xf48] sm:$0xff]
        %v691 = vld [vmem:[%s1 + $0xf50] sm:$0xff]
        %v692 = vld [vmem:[%s1 + $0xf58] sm:$0xff]
        %v693 = vld [vmem:[%s1 + $0xf60] sm:$0xff]
        %v694 = vld [vmem:[%s1 + $0xf68] sm:$0xff]
        %v695 = vld [vmem:[%s1 + $0xf70] sm:$0xff]
        %v696 = vld [vmem:[%s1 + $0xf78] sm:$0xff]
        %v697 = vld [vmem:[%s1 + $0xf80] sm:$0xff]
        %v698 = vld [vmem:[%s1 + $0xf88] sm:$0xff]
        %v699 = vld [vmem:[%s1 + $0xf90] sm:$0xff]
        %v700 = vld [vmem:[%s1 + $0xf98] sm:$0xff]
        %v701 = vld [vmem:[%s1 + $0xfa0] sm:$0xff]
        %v702 = vld [vmem:[%s1 + $0xfa8] sm:$0xff]
        %v703 = vld [vmem:[%s1 + $0xfb0] sm:$0xff]
        %v704 = vld [vmem:[%s1 + $0xfb8] sm:$0xff]
        %v705 = vld [vmem:[%s1 + $0xfc0] sm:$0xff]
        %v706 = vld [vmem:[%s1 + $0xfc8] sm:$0xff]
        %v707 = vld [vmem:[%s1 + $0xfd0] sm:$0xff]
        %v708 = vld [vmem:[%s1 + $0xfd8] sm:$0xff]
        %v709 = vld [vmem:[%s1 + $0xfe0] sm:$0xff]
        %v710 = vld [vmem:[%s1 + $0xfe8] sm:$0xff]
        %v711 = vld [vmem:[%s1 + $0xff0] sm:$0xff]
        %v712 = vld [vmem:[%s1 + $0xff8] sm:$0xff]
        %v717 = vunpack.c.l.b16 %v197
        %v718 = vunpack.c.h.b16 %v197
        %v719 = vunpack.c.l.b16 %v198
        %v720 = vunpack.c.h.b16 %v198
        %v721 = vunpack.c.l.b16 %v199
        %v722 = vunpack.c.h.b16 %v199
        %v723 = vunpack.c.l.b16 %v200
        %v724 = vunpack.c.h.b16 %v200
        %v725 = vpack.c.b16 %v717, %v717
        %v726 = vpack.c.b16 %v718, %v718
        %v727 = vpack.c.b16 %v719, %v719
        %v728 = vpack.c.b16 %v720, %v720
        %v729 = vpack.c.b16 %v721, %v721
        %v730 = vpack.c.b16 %v722, %v722
        %v731 = vpack.c.b16 %v723, %v723
        %v732 = vpack.c.b16 %v724, %v724
        %v1253 = vunpack.c.l.b16 %v201
        %v1254 = vunpack.c.h.b16 %v201
        %v1255 = vunpack.c.l.b16 %v202
        %v1256 = vunpack.c.h.b16 %v202
        %v1257 = vunpack.c.l.b16 %v203
        %v1258 = vunpack.c.h.b16 %v203
        %v1259 = vunpack.c.l.b16 %v204
        %v1260 = vunpack.c.h.b16 %v204
        %v1261 = vunpack.c.l.b16 %v205
        %v1262 = vunpack.c.h.b16 %v205
        %v1263 = vunpack.c.l.b16 %v206
        %v1264 = vunpack.c.h.b16 %v206
        %v1265 = vunpack.c.l.b16 %v207
        %v1266 = vunpack.c.h.b16 %v207
        %v1267 = vunpack.c.l.b16 %v208
        %v1268 = vunpack.c.h.b16 %v208
        %v1269 = vunpack.c.l.b16 %v209
        %v1270 = vunpack.c.h.b16 %v209
        %v1271 = vunpack.c.l.b16 %v210
        %v1272 = vunpack.c.h.b16 %v210
        %v1273 = vunpack.c.l.b16 %v211
        %v1274 = vunpack.c.h.b16 %v211
        %v1275 = vunpack.c.l.b16 %v212
        %v1276 = vunpack.c.h.b16 %v212
        %v1277 = vunpack.c.l.b16 %v213
        %v1278 = vunpack.c.h.b16 %v213
        %v1279 = vunpack.c.l.b16 %v214
        %v1280 = vunpack.c.h.b16 %v214
        %v1281 = vunpack.c.l.b16 %v215
        %v1282 = vunpack.c.h.b16 %v215
        %v1283 = vunpack.c.l.b16 %v216
        %v1284 = vunpack.c.h.b16 %v216
        %v1285 = vunpack.c.l.b16 %v217
        %v1286 = vunpack.c.h.b16 %v217
        %v1287 = vunpack.c.l.b16 %v218
        %v1288 = vunpack.c.h.b16 %v218
        %v1289 = vunpack.c.l.b16 %v219
        %v1290 = vunpack.c.h.b16 %v219
        %v1291 = vunpack.c.l.b16 %v220
        %v1292 = vunpack.c.h.b16 %v220
        %v1293 = vunpack.c.l.b16 %v221
        %v1294 = vunpack.c.h.b16 %v221
        %v1295 = vunpack.c.l.b16 %v222
        %v1296 = vunpack.c.h.b16 %v222
        %v1297 = vunpack.c.l.b16 %v223
        %v1298 = vunpack.c.h.b16 %v223
        %v1299 = vunpack.c.l.b16 %v224
        %v1300 = vunpack.c.h.b16 %v224
        %v1301 = vunpack.c.l.b16 %v225
        %v1302 = vunpack.c.h.b16 %v225
        %v1303 = vunpack.c.l.b16 %v226
        %v1304 = vunpack.c.h.b16 %v226
        %v1305 = vunpack.c.l.b16 %v227
        %v1306 = vunpack.c.h.b16 %v227
        %v1307 = vunpack.c.l.b16 %v228
        %v1308 = vunpack.c.h.b16 %v228
        %v1309 = vunpack.c.l.b16 %v229
        %v1310 = vunpack.c.h.b16 %v229
        %v1311 = vunpack.c.l.b16 %v230
        %v1312 = vunpack.c.h.b16 %v230
        %v1313 = vunpack.c.l.b16 %v231
        %v1314 = vunpack.c.h.b16 %v231
        %v1315 = vunpack.c.l.b16 %v232
        %v1316 = vunpack.c.h.b16 %v232
        %v1317 = vunpack.c.l.b16 %v233
        %v1318 = vunpack.c.h.b16 %v233
        %v1319 = vunpack.c.l.b16 %v234
        %v1320 = vunpack.c.h.b16 %v234
        %v1321 = vunpack.c.l.b16 %v235
        %v1322 = vunpack.c.h.b16 %v235
        %v1323 = vunpack.c.l.b16 %v236
        %v1324 = vunpack.c.h.b16 %v236
        %v1325 = vunpack.c.l.b16 %v237
        %v1326 = vunpack.c.h.b16 %v237
        %v1327 = vunpack.c.l.b16 %v238
        %v1328 = vunpack.c.h.b16 %v238
        %v1329 = vunpack.c.l.b16 %v239
        %v1330 = vunpack.c.h.b16 %v239
        %v1331 = vunpack.c.l.b16 %v240
        %v1332 = vunpack.c.h.b16 %v240
        %v1333 = vunpack.c.l.b16 %v241
        %v1334 = vunpack.c.h.b16 %v241
        %v1335 = vunpack.c.l.b16 %v242
        %v1336 = vunpack.c.h.b16 %v242
        %v1337 = vunpack.c.l.b16 %v243
        %v1338 = vunpack.c.h.b16 %v243
        %v1339 = vunpack.c.l.b16 %v244
        %v1340 = vunpack.c.h.b16 %v244
        %v1341 = vunpack.c.l.b16 %v245
        %v1342 = vunpack.c.h.b16 %v245
        %v1343 = vunpack.c.l.b16 %v246
        %v1344 = vunpack.c.h.b16 %v246
        %v1345 = vunpack.c.l.b16 %v247
        %v1346 = vunpack.c.h.b16 %v247
        %v1347 = vunpack.c.l.b16 %v248
        %v1348 = vunpack.c.h.b16 %v248
        %v1349 = vunpack.c.l.b16 %v249
        %v1350 = vunpack.c.h.b16 %v249
        %v1351 = vunpack.c.l.b16 %v250
        %v1352 = vunpack.c.h.b16 %v250
        %v1353 = vunpack.c.l.b16 %v251
        %v1354 = vunpack.c.h.b16 %v251
        %v1355 = vunpack.c.l.b16 %v252
        %v1356 = vunpack.c.h.b16 %v252
        %v1357 = vunpack.c.l.b16 %v253
        %v1358 = vunpack.c.h.b16 %v253
        %v1359 = vunpack.c.l.b16 %v254
        %v1360 = vunpack.c.h.b16 %v254
        %v1361 = vunpack.c.l.b16 %v255
        %v1362 = vunpack.c.h.b16 %v255
        %v1363 = vunpack.c.l.b16 %v256
        %v1364 = vunpack.c.h.b16 %v256
        %v1365 = vunpack.c.l.b16 %v257
        %v1366 = vunpack.c.h.b16 %v257
        %v1367 = vunpack.c.l.b16 %v258
        %v1368 = vunpack.c.h.b16 %v258
        %v1369 = vunpack.c.l.b16 %v259
        %v1370 = vunpack.c.h.b16 %v259
        %v1371 = vunpack.c.l.b16 %v260
        %v1372 = vunpack.c.h.b16 %v260
        %v1373 = vunpack.c.l.b16 %v261
        %v1374 = vunpack.c.h.b16 %v261
        %v1375 = vunpack.c.l.b16 %v262
        %v1376 = vunpack.c.h.b16 %v262
        %v1377 = vunpack.c.l.b16 %v263
        %v1378 = vunpack.c.h.b16 %v263
        %v1379 = vunpack.c.l.b16 %v264
        %v1380 = vunpack.c.h.b16 %v264
        %v1381 = vunpack.c.l.b16 %v265
        %v1382 = vunpack.c.h.b16 %v265
        %v1383 = vunpack.c.l.b16 %v266
        %v1384 = vunpack.c.h.b16 %v266
        %v1385 = vunpack.c.l.b16 %v267
        %v1386 = vunpack.c.h.b16 %v267
        %v1387 = vunpack.c.l.b16 %v268
        %v1388 = vunpack.c.h.b16 %v268
        %v1389 = vunpack.c.l.b16 %v269
        %v1390 = vunpack.c.h.b16 %v269
        %v1391 = vunpack.c.l.b16 %v270
        %v1392 = vunpack.c.h.b16 %v270
        %v1393 = vunpack.c.l.b16 %v271
        %v1394 = vunpack.c.h.b16 %v271
        %v1395 = vunpack.c.l.b16 %v272
        %v1396 = vunpack.c.h.b16 %v272
        %v1397 = vunpack.c.l.b16 %v273
        %v1398 = vunpack.c.h.b16 %v273
        %v1399 = vunpack.c.l.b16 %v274
        %v1400 = vunpack.c.h.b16 %v274
        %v1401 = vunpack.c.l.b16 %v275
        %v1402 = vunpack.c.h.b16 %v275
        %v1403 = vunpack.c.l.b16 %v276
        %v1404 = vunpack.c.h.b16 %v276
        %v1405 = vunpack.c.l.b16 %v277
        %v1406 = vunpack.c.h.b16 %v277
        %v1407 = vunpack.c.l.b16 %v278
        %v1408 = vunpack.c.h.b16 %v278
        %v1409 = vunpack.c.l.b16 %v279
        %v1410 = vunpack.c.h.b16 %v279
        %v1411 = vunpack.c.l.b16 %v280
        %v1412 = vunpack.c.h.b16 %v280
        %v1413 = vunpack.c.l.b16 %v281
        %v1414 = vunpack.c.h.b16 %v281
        %v1415 = vunpack.c.l.b16 %v282
        %v1416 = vunpack.c.h.b16 %v282
        %v1417 = vunpack.c.l.b16 %v283
        %v1418 = vunpack.c.h.b16 %v283
        %v1419 = vunpack.c.l.b16 %v284
        %v1420 = vunpack.c.h.b16 %v284
        %v1421 = vunpack.c.l.b16 %v285
        %v1422 = vunpack.c.h.b16 %v285
        %v1423 = vunpack.c.l.b16 %v286
        %v1424 = vunpack.c.h.b16 %v286
        %v1425 = vunpack.c.l.b16 %v287
        %v1426 = vunpack.c.h.b16 %v287
        %v1427 = vunpack.c.l.b16 %v288
        %v1428 = vunpack.c.h.b16 %v288
        %v1429 = vunpack.c.l.b16 %v289
        %v1430 = vunpack.c.h.b16 %v289
        %v1431 = vunpack.c.l.b16 %v290
        %v1432 = vunpack.c.h.b16 %v290
        %v1433 = vunpack.c.l.b16 %v291
        %v1434 = vunpack.c.h.b16 %v291
        %v1435 = vunpack.c.l.b16 %v292
        %v1436 = vunpack.c.h.b16 %v292
        %v1437 = vunpack.c.l.b16 %v293
        %v1438 = vunpack.c.h.b16 %v293
        %v1439 = vunpack.c.l.b16 %v294
        %v1440 = vunpack.c.h.b16 %v294
        %v1441 = vunpack.c.l.b16 %v295
        %v1442 = vunpack.c.h.b16 %v295
        %v1443 = vunpack.c.l.b16 %v296
        %v1444 = vunpack.c.h.b16 %v296
        %v1445 = vunpack.c.l.b16 %v297
        %v1446 = vunpack.c.h.b16 %v297
        %v1447 = vunpack.c.l.b16 %v298
        %v1448 = vunpack.c.h.b16 %v298
        %v1449 = vunpack.c.l.b16 %v299
        %v1450 = vunpack.c.h.b16 %v299
        %v1451 = vunpack.c.l.b16 %v300
        %v1452 = vunpack.c.h.b16 %v300
        %v1453 = vunpack.c.l.b16 %v301
        %v1454 = vunpack.c.h.b16 %v301
        %v1455 = vunpack.c.l.b16 %v302
        %v1456 = vunpack.c.h.b16 %v302
        %v1457 = vunpack.c.l.b16 %v303
        %v1458 = vunpack.c.h.b16 %v303
        %v1459 = vunpack.c.l.b16 %v304
        %v1460 = vunpack.c.h.b16 %v304
        %v1461 = vunpack.c.l.b16 %v305
        %v1462 = vunpack.c.h.b16 %v305
        %v1463 = vunpack.c.l.b16 %v306
        %v1464 = vunpack.c.h.b16 %v306
        %v1465 = vunpack.c.l.b16 %v307
        %v1466 = vunpack.c.h.b16 %v307
        %v1467 = vunpack.c.l.b16 %v308
        %v1468 = vunpack.c.h.b16 %v308
        %v1469 = vunpack.c.l.b16 %v309
        %v1470 = vunpack.c.h.b16 %v309
        %v1471 = vunpack.c.l.b16 %v310
        %v1472 = vunpack.c.h.b16 %v310
        %v1473 = vunpack.c.l.b16 %v311
        %v1474 = vunpack.c.h.b16 %v311
        %v1475 = vunpack.c.l.b16 %v312
        %v1476 = vunpack.c.h.b16 %v312
        %v1477 = vunpack.c.l.b16 %v313
        %v1478 = vunpack.c.h.b16 %v313
        %v1479 = vunpack.c.l.b16 %v314
        %v1480 = vunpack.c.h.b16 %v314
        %v1481 = vunpack.c.l.b16 %v315
        %v1482 = vunpack.c.h.b16 %v315
        %v1483 = vunpack.c.l.b16 %v316
        %v1484 = vunpack.c.h.b16 %v316
        %v1485 = vunpack.c.l.b16 %v317
        %v1486 = vunpack.c.h.b16 %v317
        %v1487 = vunpack.c.l.b16 %v318
        %v1488 = vunpack.c.h.b16 %v318
        %v1489 = vunpack.c.l.b16 %v319
        %v1490 = vunpack.c.h.b16 %v319
        %v1491 = vunpack.c.l.b16 %v320
        %v1492 = vunpack.c.h.b16 %v320
        %v1493 = vunpack.c.l.b16 %v321
        %v1494 = vunpack.c.h.b16 %v321
        %v1495 = vunpack.c.l.b16 %v322
        %v1496 = vunpack.c.h.b16 %v322
        %v1497 = vunpack.c.l.b16 %v323
        %v1498 = vunpack.c.h.b16 %v323
        %v1499 = vunpack.c.l.b16 %v324
        %v1500 = vunpack.c.h.b16 %v324
        %v1501 = vunpack.c.l.b16 %v325
        %v1502 = vunpack.c.h.b16 %v325
        %v1503 = vunpack.c.l.b16 %v326
        %v1504 = vunpack.c.h.b16 %v326
        %v1505 = vunpack.c.l.b16 %v327
        %v1506 = vunpack.c.h.b16 %v327
        %v1507 = vunpack.c.l.b16 %v328
        %v1508 = vunpack.c.h.b16 %v328
        %v1509 = vunpack.c.l.b16 %v329
        %v1510 = vunpack.c.h.b16 %v329
        %v1511 = vunpack.c.l.b16 %v330
        %v1512 = vunpack.c.h.b16 %v330
        %v1513 = vunpack.c.l.b16 %v331
        %v1514 = vunpack.c.h.b16 %v331
        %v1515 = vunpack.c.l.b16 %v332
        %v1516 = vunpack.c.h.b16 %v332
        %v1517 = vunpack.c.l.b16 %v333
        %v1518 = vunpack.c.h.b16 %v333
        %v1519 = vunpack.c.l.b16 %v334
        %v1520 = vunpack.c.h.b16 %v334
        %v1521 = vunpack.c.l.b16 %v335
        %v1522 = vunpack.c.h.b16 %v335
        %v1523 = vunpack.c.l.b16 %v336
        %v1524 = vunpack.c.h.b16 %v336
        %v1525 = vunpack.c.l.b16 %v337
        %v1526 = vunpack.c.h.b16 %v337
        %v1527 = vunpack.c.l.b16 %v338
        %v1528 = vunpack.c.h.b16 %v338
        %v1529 = vunpack.c.l.b16 %v339
        %v1530 = vunpack.c.h.b16 %v339
        %v1531 = vunpack.c.l.b16 %v340
        %v1532 = vunpack.c.h.b16 %v340
        %v1533 = vunpack.c.l.b16 %v341
        %v1534 = vunpack.c.h.b16 %v341
        %v1535 = vunpack.c.l.b16 %v342
        %v1536 = vunpack.c.h.b16 %v342
        %v1537 = vunpack.c.l.b16 %v343
        %v1538 = vunpack.c.h.b16 %v343
        %v1539 = vunpack.c.l.b16 %v344
        %v1540 = vunpack.c.h.b16 %v344
        %v1541 = vunpack.c.l.b16 %v345
        %v1542 = vunpack.c.h.b16 %v345
        %v1543 = vunpack.c.l.b16 %v346
        %v1544 = vunpack.c.h.b16 %v346
        %v1545 = vunpack.c.l.b16 %v347
        %v1546 = vunpack.c.h.b16 %v347
        %v1547 = vunpack.c.l.b16 %v348
        %v1548 = vunpack.c.h.b16 %v348
        %v1549 = vunpack.c.l.b16 %v349
        %v1550 = vunpack.c.h.b16 %v349
        %v1551 = vunpack.c.l.b16 %v350
        %v1552 = vunpack.c.h.b16 %v350
        %v1553 = vunpack.c.l.b16 %v351
        %v1554 = vunpack.c.h.b16 %v351
        %v1555 = vunpack.c.l.b16 %v352
        %v1556 = vunpack.c.h.b16 %v352
        %v1557 = vunpack.c.l.b16 %v353
        %v1558 = vunpack.c.h.b16 %v353
        %v1559 = vunpack.c.l.b16 %v354
        %v1560 = vunpack.c.h.b16 %v354
        %v1561 = vunpack.c.l.b16 %v355
        %v1562 = vunpack.c.h.b16 %v355
        %v1563 = vunpack.c.l.b16 %v356
        %v1564 = vunpack.c.h.b16 %v356
        %v1565 = vunpack.c.l.b16 %v357
        %v1566 = vunpack.c.h.b16 %v357
        %v1567 = vunpack.c.l.b16 %v358
        %v1568 = vunpack.c.h.b16 %v358
        %v1569 = vunpack.c.l.b16 %v359
        %v1570 = vunpack.c.h.b16 %v359
        %v1571 = vunpack.c.l.b16 %v360
        %v1572 = vunpack.c.h.b16 %v360
        %v1573 = vunpack.c.l.b16 %v361
        %v1574 = vunpack.c.h.b16 %v361
        %v1575 = vunpack.c.l.b16 %v362
        %v1576 = vunpack.c.h.b16 %v362
        %v1577 = vunpack.c.l.b16 %v363
        %v1578 = vunpack.c.h.b16 %v363
        %v1579 = vunpack.c.l.b16 %v364
        %v1580 = vunpack.c.h.b16 %v364
        %v1581 = vunpack.c.l.b16 %v365
        %v1582 = vunpack.c.h.b16 %v365
        %v1583 = vunpack.c.l.b16 %v366
        %v1584 = vunpack.c.h.b16 %v366
        %v1585 = vunpack.c.l.b16 %v367
        %v1586 = vunpack.c.h.b16 %v367
        %v1587 = vunpack.c.l.b16 %v368
        %v1588 = vunpack.c.h.b16 %v368
        %v1589 = vunpack.c.l.b16 %v369
        %v1590 = vunpack.c.h.b16 %v369
        %v1591 = vunpack.c.l.b16 %v370
        %v1592 = vunpack.c.h.b16 %v370
        %v1593 = vunpack.c.l.b16 %v371
        %v1594 = vunpack.c.h.b16 %v371
        %v1595 = vunpack.c.l.b16 %v372
        %v1596 = vunpack.c.h.b16 %v372
        %v1597 = vunpack.c.l.b16 %v373
        %v1598 = vunpack.c.h.b16 %v373
        %v1599 = vunpack.c.l.b16 %v374
        %v1600 = vunpack.c.h.b16 %v374
        %v1601 = vunpack.c.l.b16 %v375
        %v1602 = vunpack.c.h.b16 %v375
        %v1603 = vunpack.c.l.b16 %v376
        %v1604 = vunpack.c.h.b16 %v376
        %v1605 = vunpack.c.l.b16 %v377
        %v1606 = vunpack.c.h.b16 %v377
        %v1607 = vunpack.c.l.b16 %v378
        %v1608 = vunpack.c.h.b16 %v378
        %v1609 = vunpack.c.l.b16 %v379
        %v1610 = vunpack.c.h.b16 %v379
        %v1611 = vunpack.c.l.b16 %v380
        %v1612 = vunpack.c.h.b16 %v380
        %v1613 = vunpack.c.l.b16 %v381
        %v1614 = vunpack.c.h.b16 %v381
        %v1615 = vunpack.c.l.b16 %v382
        %v1616 = vunpack.c.h.b16 %v382
        %v1617 = vunpack.c.l.b16 %v383
        %v1618 = vunpack.c.h.b16 %v383
        %v1619 = vunpack.c.l.b16 %v384
        %v1620 = vunpack.c.h.b16 %v384
        %v1621 = vunpack.c.l.b16 %v385
        %v1622 = vunpack.c.h.b16 %v385
        %v1623 = vunpack.c.l.b16 %v386
        %v1624 = vunpack.c.h.b16 %v386
        %v1625 = vunpack.c.l.b16 %v387
        %v1626 = vunpack.c.h.b16 %v387
        %v1627 = vunpack.c.l.b16 %v388
        %v1628 = vunpack.c.h.b16 %v388
        %v1629 = vunpack.c.l.b16 %v389
        %v1630 = vunpack.c.h.b16 %v389
        %v1631 = vunpack.c.l.b16 %v390
        %v1632 = vunpack.c.h.b16 %v390
        %v1633 = vunpack.c.l.b16 %v391
        %v1634 = vunpack.c.h.b16 %v391
        %v1635 = vunpack.c.l.b16 %v392
        %v1636 = vunpack.c.h.b16 %v392
        %v1637 = vunpack.c.l.b16 %v393
        %v1638 = vunpack.c.h.b16 %v393
        %v1639 = vunpack.c.l.b16 %v394
        %v1640 = vunpack.c.h.b16 %v394
        %v1641 = vunpack.c.l.b16 %v395
        %v1642 = vunpack.c.h.b16 %v395
        %v1643 = vunpack.c.l.b16 %v396
        %v1644 = vunpack.c.h.b16 %v396
        %v1645 = vunpack.c.l.b16 %v397
        %v1646 = vunpack.c.h.b16 %v397
        %v1647 = vunpack.c.l.b16 %v398
        %v1648 = vunpack.c.h.b16 %v398
        %v1649 = vunpack.c.l.b16 %v399
        %v1650 = vunpack.c.h.b16 %v399
        %v1651 = vunpack.c.l.b16 %v400
        %v1652 = vunpack.c.h.b16 %v400
        %v1653 = vunpack.c.l.b16 %v401
        %v1654 = vunpack.c.h.b16 %v401
        %v1655 = vunpack.c.l.b16 %v402
        %v1656 = vunpack.c.h.b16 %v402
        %v1657 = vunpack.c.l.b16 %v403
        %v1658 = vunpack.c.h.b16 %v403
        %v1659 = vunpack.c.l.b16 %v404
        %v1660 = vunpack.c.h.b16 %v404
        %v1661 = vunpack.c.l.b16 %v405
        %v1662 = vunpack.c.h.b16 %v405
        %v1663 = vunpack.c.l.b16 %v406
        %v1664 = vunpack.c.h.b16 %v406
        %v1665 = vunpack.c.l.b16 %v407
        %v1666 = vunpack.c.h.b16 %v407
        %v1667 = vunpack.c.l.b16 %v408
        %v1668 = vunpack.c.h.b16 %v408
        %v1669 = vunpack.c.l.b16 %v409
        %v1670 = vunpack.c.h.b16 %v409
        %v1671 = vunpack.c.l.b16 %v410
        %v1672 = vunpack.c.h.b16 %v410
        %v1673 = vunpack.c.l.b16 %v411
        %v1674 = vunpack.c.h.b16 %v411
        %v1675 = vunpack.c.l.b16 %v412
        %v1676 = vunpack.c.h.b16 %v412
        %v1677 = vunpack.c.l.b16 %v413
        %v1678 = vunpack.c.h.b16 %v413
        %v1679 = vunpack.c.l.b16 %v414
        %v1680 = vunpack.c.h.b16 %v414
        %v1681 = vunpack.c.l.b16 %v415
        %v1682 = vunpack.c.h.b16 %v415
        %v1683 = vunpack.c.l.b16 %v416
        %v1684 = vunpack.c.h.b16 %v416
        %v1685 = vunpack.c.l.b16 %v417
        %v1686 = vunpack.c.h.b16 %v417
        %v1687 = vunpack.c.l.b16 %v418
        %v1688 = vunpack.c.h.b16 %v418
        %v1689 = vunpack.c.l.b16 %v419
        %v1690 = vunpack.c.h.b16 %v419
        %v1691 = vunpack.c.l.b16 %v420
        %v1692 = vunpack.c.h.b16 %v420
        %v1693 = vunpack.c.l.b16 %v421
        %v1694 = vunpack.c.h.b16 %v421
        %v1695 = vunpack.c.l.b16 %v422
        %v1696 = vunpack.c.h.b16 %v422
        %v1697 = vunpack.c.l.b16 %v423
        %v1698 = vunpack.c.h.b16 %v423
        %v1699 = vunpack.c.l.b16 %v424
        %v1700 = vunpack.c.h.b16 %v424
        %v1701 = vunpack.c.l.b16 %v425
        %v1702 = vunpack.c.h.b16 %v425
        %v1703 = vunpack.c.l.b16 %v426
        %v1704 = vunpack.c.h.b16 %v426
        %v1705 = vunpack.c.l.b16 %v427
        %v1706 = vunpack.c.h.b16 %v427
        %v1707 = vunpack.c.l.b16 %v428
        %v1708 = vunpack.c.h.b16 %v428
        %v1709 = vunpack.c.l.b16 %v429
        %v1710 = vunpack.c.h.b16 %v429
        %v1711 = vunpack.c.l.b16 %v430
        %v1712 = vunpack.c.h.b16 %v430
        %v1713 = vunpack.c.l.b16 %v431
        %v1714 = vunpack.c.h.b16 %v431
        %v1715 = vunpack.c.l.b16 %v432
        %v1716 = vunpack.c.h.b16 %v432
        %v1717 = vunpack.c.l.b16 %v433
        %v1718 = vunpack.c.h.b16 %v433
        %v1719 = vunpack.c.l.b16 %v434
        %v1720 = vunpack.c.h.b16 %v434
        %v1721 = vunpack.c.l.b16 %v435
        %v1722 = vunpack.c.h.b16 %v435
        %v1723 = vunpack.c.l.b16 %v436
        %v1724 = vunpack.c.h.b16 %v436
        %v1725 = vunpack.c.l.b16 %v437
        %v1726 = vunpack.c.h.b16 %v437
        %v1727 = vunpack.c.l.b16 %v438
        %v1728 = vunpack.c.h.b16 %v438
        %v1729 = vunpack.c.l.b16 %v439
        %v1730 = vunpack.c.h.b16 %v439
        %v1731 = vunpack.c.l.b16 %v440
        %v1732 = vunpack.c.h.b16 %v440
        %v1733 = vunpack.c.l.b16 %v441
        %v1734 = vunpack.c.h.b16 %v441
        %v1735 = vunpack.c.l.b16 %v442
        %v1736 = vunpack.c.h.b16 %v442
        %v1737 = vunpack.c.l.b16 %v443
        %v1738 = vunpack.c.h.b16 %v443
        %v1739 = vunpack.c.l.b16 %v444
        %v1740 = vunpack.c.h.b16 %v444
        %v1741 = vunpack.c.l.b16 %v445
        %v1742 = vunpack.c.h.b16 %v445
        %v1743 = vunpack.c.l.b16 %v446
        %v1744 = vunpack.c.h.b16 %v446
        %v1745 = vunpack.c.l.b16 %v447
        %v1746 = vunpack.c.h.b16 %v447
        %v1747 = vunpack.c.l.b16 %v448
        %v1748 = vunpack.c.h.b16 %v448
        %v1749 = vunpack.c.l.b16 %v449
        %v1750 = vunpack.c.h.b16 %v449
        %v1751 = vunpack.c.l.b16 %v450
        %v1752 = vunpack.c.h.b16 %v450
        %v1753 = vunpack.c.l.b16 %v451
        %v1754 = vunpack.c.h.b16 %v451
        %v1755 = vunpack.c.l.b16 %v452
        %v1756 = vunpack.c.h.b16 %v452
        %v1757 = vunpack.c.l.b16 %v453
        %v1758 = vunpack.c.h.b16 %v453
        %v1759 = vunpack.c.l.b16 %v454
        %v1760 = vunpack.c.h.b16 %v454
        %v1761 = vunpack.c.l.b16 %v455
        %v1762 = vunpack.c.h.b16 %v455
        %v1763 = vunpack.c.l.b16 %v456
        %v1764 = vunpack.c.h.b16 %v456
        %v1765 = vunpack.c.l.b16 %v457
        %v1766 = vunpack.c.h.b16 %v457
        %v1767 = vunpack.c.l.b16 %v458
        %v1768 = vunpack.c.h.b16 %v458
        %v1769 = vunpack.c.l.b16 %v459
        %v1770 = vunpack.c.h.b16 %v459
        %v1771 = vunpack.c.l.b16 %v460
        %v1772 = vunpack.c.h.b16 %v460
        %v1773 = vunpack.c.l.b16 %v461
        %v1774 = vunpack.c.h.b16 %v461
        %v1775 = vunpack.c.l.b16 %v462
        %v1776 = vunpack.c.h.b16 %v462
        %v1777 = vunpack.c.l.b16 %v463
        %v1778 = vunpack.c.h.b16 %v463
        %v1779 = vunpack.c.l.b16 %v464
        %v1780 = vunpack.c.h.b16 %v464
        %v1781 = vunpack.c.l.b16 %v465
        %v1782 = vunpack.c.h.b16 %v465
        %v1783 = vunpack.c.l.b16 %v466
        %v1784 = vunpack.c.h.b16 %v466
        %v1785 = vunpack.c.l.b16 %v467
        %v1786 = vunpack.c.h.b16 %v467
        %v1787 = vunpack.c.l.b16 %v468
        %v1788 = vunpack.c.h.b16 %v468
        %v1789 = vunpack.c.l.b16 %v469
        %v1790 = vunpack.c.h.b16 %v469
        %v1791 = vunpack.c.l.b16 %v470
        %v1792 = vunpack.c.h.b16 %v470
        %v1793 = vunpack.c.l.b16 %v471
        %v1794 = vunpack.c.h.b16 %v471
        %v1795 = vunpack.c.l.b16 %v472
        %v1796 = vunpack.c.h.b16 %v472
        %v1797 = vunpack.c.l.b16 %v473
        %v1798 = vunpack.c.h.b16 %v473
        %v1799 = vunpack.c.l.b16 %v474
        %v1800 = vunpack.c.h.b16 %v474
        %v1801 = vunpack.c.l.b16 %v475
        %v1802 = vunpack.c.h.b16 %v475
        %v1803 = vunpack.c.l.b16 %v476
        %v1804 = vunpack.c.h.b16 %v476
        %v1805 = vunpack.c.l.b16 %v477
        %v1806 = vunpack.c.h.b16 %v477
        %v1807 = vunpack.c.l.b16 %v478
        %v1808 = vunpack.c.h.b16 %v478
        %v1809 = vunpack.c.l.b16 %v479
        %v1810 = vunpack.c.h.b16 %v479
        %v1811 = vunpack.c.l.b16 %v480
        %v1812 = vunpack.c.h.b16 %v480
        %v1813 = vunpack.c.l.b16 %v481
        %v1814 = vunpack.c.h.b16 %v481
        %v1815 = vunpack.c.l.b16 %v482
        %v1816 = vunpack.c.h.b16 %v482
        %v1817 = vunpack.c.l.b16 %v483
        %v1818 = vunpack.c.h.b16 %v483
        %v1819 = vunpack.c.l.b16 %v484
        %v1820 = vunpack.c.h.b16 %v484
        %v1821 = vunpack.c.l.b16 %v485
        %v1822 = vunpack.c.h.b16 %v485
        %v1823 = vunpack.c.l.b16 %v486
        %v1824 = vunpack.c.h.b16 %v486
        %v1825 = vunpack.c.l.b16 %v487
        %v1826 = vunpack.c.h.b16 %v487
        %v1827 = vunpack.c.l.b16 %v488
        %v1828 = vunpack.c.h.b16 %v488
        %v1829 = vunpack.c.l.b16 %v489
        %v1830 = vunpack.c.h.b16 %v489
        %v1831 = vunpack.c.l.b16 %v490
        %v1832 = vunpack.c.h.b16 %v490
        %v1833 = vunpack.c.l.b16 %v491
        %v1834 = vunpack.c.h.b16 %v491
        %v1835 = vunpack.c.l.b16 %v492
        %v1836 = vunpack.c.h.b16 %v492
        %v1837 = vunpack.c.l.b16 %v493
        %v1838 = vunpack.c.h.b16 %v493
        %v1839 = vunpack.c.l.b16 %v494
        %v1840 = vunpack.c.h.b16 %v494
        %v1841 = vunpack.c.l.b16 %v495
        %v1842 = vunpack.c.h.b16 %v495
        %v1843 = vunpack.c.l.b16 %v496
        %v1844 = vunpack.c.h.b16 %v496
        %v1845 = vunpack.c.l.b16 %v497
        %v1846 = vunpack.c.h.b16 %v497
        %v1847 = vunpack.c.l.b16 %v498
        %v1848 = vunpack.c.h.b16 %v498
        %v1849 = vunpack.c.l.b16 %v499
        %v1850 = vunpack.c.h.b16 %v499
        %v1851 = vunpack.c.l.b16 %v500
        %v1852 = vunpack.c.h.b16 %v500
        %v1853 = vunpack.c.l.b16 %v501
        %v1854 = vunpack.c.h.b16 %v501
        %v1855 = vunpack.c.l.b16 %v502
        %v1856 = vunpack.c.h.b16 %v502
        %v1857 = vunpack.c.l.b16 %v503
        %v1858 = vunpack.c.h.b16 %v503
        %v1859 = vunpack.c.l.b16 %v504
        %v1860 = vunpack.c.h.b16 %v504
        %v1861 = vunpack.c.l.b16 %v505
        %v1862 = vunpack.c.h.b16 %v505
        %v1863 = vunpack.c.l.b16 %v506
        %v1864 = vunpack.c.h.b16 %v506
        %v1865 = vunpack.c.l.b16 %v507
        %v1866 = vunpack.c.h.b16 %v507
        %v1867 = vunpack.c.l.b16 %v508
        %v1868 = vunpack.c.h.b16 %v508
        %v1869 = vunpack.c.l.b16 %v509
        %v1870 = vunpack.c.h.b16 %v509
        %v1871 = vunpack.c.l.b16 %v510
        %v1872 = vunpack.c.h.b16 %v510
        %v1873 = vunpack.c.l.b16 %v511
        %v1874 = vunpack.c.h.b16 %v511
        %v1875 = vunpack.c.l.b16 %v512
        %v1876 = vunpack.c.h.b16 %v512
        %v1877 = vunpack.c.l.b16 %v513
        %v1878 = vunpack.c.h.b16 %v513
        %v1879 = vunpack.c.l.b16 %v514
        %v1880 = vunpack.c.h.b16 %v514
        %v1881 = vunpack.c.l.b16 %v515
        %v1882 = vunpack.c.h.b16 %v515
        %v1883 = vunpack.c.l.b16 %v516
        %v1884 = vunpack.c.h.b16 %v516
        %v1885 = vunpack.c.l.b16 %v517
        %v1886 = vunpack.c.h.b16 %v517
        %v1887 = vunpack.c.l.b16 %v518
        %v1888 = vunpack.c.h.b16 %v518
        %v1889 = vunpack.c.l.b16 %v519
        %v1890 = vunpack.c.h.b16 %v519
        %v1891 = vunpack.c.l.b16 %v520
        %v1892 = vunpack.c.h.b16 %v520
        %v1893 = vunpack.c.l.b16 %v521
        %v1894 = vunpack.c.h.b16 %v521
        %v1895 = vunpack.c.l.b16 %v522
        %v1896 = vunpack.c.h.b16 %v522
        %v1897 = vunpack.c.l.b16 %v523
        %v1898 = vunpack.c.h.b16 %v523
        %v1899 = vunpack.c.l.b16 %v524
        %v1900 = vunpack.c.h.b16 %v524
        %v1901 = vunpack.c.l.b16 %v525
        %v1902 = vunpack.c.h.b16 %v525
        %v1903 = vunpack.c.l.b16 %v526
        %v1904 = vunpack.c.h.b16 %v526
        %v1905 = vunpack.c.l.b16 %v527
        %v1906 = vunpack.c.h.b16 %v527
        %v1907 = vunpack.c.l.b16 %v528
        %v1908 = vunpack.c.h.b16 %v528
        %v1909 = vunpack.c.l.b16 %v529
        %v1910 = vunpack.c.h.b16 %v529
        %v1911 = vunpack.c.l.b16 %v530
        %v1912 = vunpack.c.h.b16 %v530
        %v1913 = vunpack.c.l.b16 %v531
        %v1914 = vunpack.c.h.b16 %v531
        %v1915 = vunpack.c.l.b16 %v532
        %v1916 = vunpack.c.h.b16 %v532
        %v1917 = vunpack.c.l.b16 %v533
        %v1918 = vunpack.c.h.b16 %v533
        %v1919 = vunpack.c.l.b16 %v534
        %v1920 = vunpack.c.h.b16 %v534
        %v1921 = vunpack.c.l.b16 %v535
        %v1922 = vunpack.c.h.b16 %v535
        %v1923 = vunpack.c.l.b16 %v536
        %v1924 = vunpack.c.h.b16 %v536
        %v1925 = vunpack.c.l.b16 %v537
        %v1926 = vunpack.c.h.b16 %v537
        %v1927 = vunpack.c.l.b16 %v538
        %v1928 = vunpack.c.h.b16 %v538
        %v1929 = vunpack.c.l.b16 %v539
        %v1930 = vunpack.c.h.b16 %v539
        %v1931 = vunpack.c.l.b16 %v540
        %v1932 = vunpack.c.h.b16 %v540
        %v1933 = vunpack.c.l.b16 %v541
        %v1934 = vunpack.c.h.b16 %v541
        %v1935 = vunpack.c.l.b16 %v542
        %v1936 = vunpack.c.h.b16 %v542
        %v1937 = vunpack.c.l.b16 %v543
        %v1938 = vunpack.c.h.b16 %v543
        %v1939 = vunpack.c.l.b16 %v544
        %v1940 = vunpack.c.h.b16 %v544
        %v1941 = vunpack.c.l.b16 %v545
        %v1942 = vunpack.c.h.b16 %v545
        %v1943 = vunpack.c.l.b16 %v546
        %v1944 = vunpack.c.h.b16 %v546
        %v1945 = vunpack.c.l.b16 %v547
        %v1946 = vunpack.c.h.b16 %v547
        %v1947 = vunpack.c.l.b16 %v548
        %v1948 = vunpack.c.h.b16 %v548
        %v1949 = vunpack.c.l.b16 %v549
        %v1950 = vunpack.c.h.b16 %v549
        %v1951 = vunpack.c.l.b16 %v550
        %v1952 = vunpack.c.h.b16 %v550
        %v1953 = vunpack.c.l.b16 %v551
        %v1954 = vunpack.c.h.b16 %v551
        %v1955 = vunpack.c.l.b16 %v552
        %v1956 = vunpack.c.h.b16 %v552
        %v1957 = vunpack.c.l.b16 %v553
        %v1958 = vunpack.c.h.b16 %v553
        %v1959 = vunpack.c.l.b16 %v554
        %v1960 = vunpack.c.h.b16 %v554
        %v1961 = vunpack.c.l.b16 %v555
        %v1962 = vunpack.c.h.b16 %v555
        %v1963 = vunpack.c.l.b16 %v556
        %v1964 = vunpack.c.h.b16 %v556
        %v1965 = vunpack.c.l.b16 %v557
        %v1966 = vunpack.c.h.b16 %v557
        %v1967 = vunpack.c.l.b16 %v558
        %v1968 = vunpack.c.h.b16 %v558
        %v1969 = vunpack.c.l.b16 %v559
        %v1970 = vunpack.c.h.b16 %v559
        %v1971 = vunpack.c.l.b16 %v560
        %v1972 = vunpack.c.h.b16 %v560
        %v1973 = vunpack.c.l.b16 %v561
        %v1974 = vunpack.c.h.b16 %v561
        %v1975 = vunpack.c.l.b16 %v562
        %v1976 = vunpack.c.h.b16 %v562
        %v1977 = vunpack.c.l.b16 %v563
        %v1978 = vunpack.c.h.b16 %v563
        %v1979 = vunpack.c.l.b16 %v564
        %v1980 = vunpack.c.h.b16 %v564
        %v1981 = vunpack.c.l.b16 %v565
        %v1982 = vunpack.c.h.b16 %v565
        %v1983 = vunpack.c.l.b16 %v566
        %v1984 = vunpack.c.h.b16 %v566
        %v1985 = vunpack.c.l.b16 %v567
        %v1986 = vunpack.c.h.b16 %v567
        %v1987 = vunpack.c.l.b16 %v568
        %v1988 = vunpack.c.h.b16 %v568
        %v1989 = vunpack.c.l.b16 %v569
        %v1990 = vunpack.c.h.b16 %v569
        %v1991 = vunpack.c.l.b16 %v570
        %v1992 = vunpack.c.h.b16 %v570
        %v1993 = vunpack.c.l.b16 %v571
        %v1994 = vunpack.c.h.b16 %v571
        %v1995 = vunpack.c.l.b16 %v572
        %v1996 = vunpack.c.h.b16 %v572
        %v1997 = vunpack.c.l.b16 %v573
        %v1998 = vunpack.c.h.b16 %v573
        %v1999 = vunpack.c.l.b16 %v574
        %v2000 = vunpack.c.h.b16 %v574
        %v2001 = vunpack.c.l.b16 %v575
        %v2002 = vunpack.c.h.b16 %v575
        %v2003 = vunpack.c.l.b16 %v576
        %v2004 = vunpack.c.h.b16 %v576
        %v2005 = vunpack.c.l.b16 %v577
        %v2006 = vunpack.c.h.b16 %v577
        %v2007 = vunpack.c.l.b16 %v578
        %v2008 = vunpack.c.h.b16 %v578
        %v2009 = vunpack.c.l.b16 %v579
        %v2010 = vunpack.c.h.b16 %v579
        %v2011 = vunpack.c.l.b16 %v580
        %v2012 = vunpack.c.h.b16 %v580
        %v2013 = vunpack.c.l.b16 %v581
        %v2014 = vunpack.c.h.b16 %v581
        %v2015 = vunpack.c.l.b16 %v582
        %v2016 = vunpack.c.h.b16 %v582
        %v2017 = vunpack.c.l.b16 %v583
        %v2018 = vunpack.c.h.b16 %v583
        %v2019 = vunpack.c.l.b16 %v584
        %v2020 = vunpack.c.h.b16 %v584
        %v2021 = vunpack.c.l.b16 %v585
        %v2022 = vunpack.c.h.b16 %v585
        %v2023 = vunpack.c.l.b16 %v586
        %v2024 = vunpack.c.h.b16 %v586
        %v2025 = vunpack.c.l.b16 %v587
        %v2026 = vunpack.c.h.b16 %v587
        %v2027 = vunpack.c.l.b16 %v588
        %v2028 = vunpack.c.h.b16 %v588
        %v2029 = vunpack.c.l.b16 %v589
        %v2030 = vunpack.c.h.b16 %v589
        %v2031 = vunpack.c.l.b16 %v590
        %v2032 = vunpack.c.h.b16 %v590
        %v2033 = vunpack.c.l.b16 %v591
        %v2034 = vunpack.c.h.b16 %v591
        %v2035 = vunpack.c.l.b16 %v592
        %v2036 = vunpack.c.h.b16 %v592
        %v2037 = vunpack.c.l.b16 %v593
        %v2038 = vunpack.c.h.b16 %v593
        %v2039 = vunpack.c.l.b16 %v594
        %v2040 = vunpack.c.h.b16 %v594
        %v2041 = vunpack.c.l.b16 %v595
        %v2042 = vunpack.c.h.b16 %v595
        %v2043 = vunpack.c.l.b16 %v596
        %v2044 = vunpack.c.h.b16 %v596
        %v2045 = vunpack.c.l.b16 %v597
        %v2046 = vunpack.c.h.b16 %v597
        %v2047 = vunpack.c.l.b16 %v598
        %v2048 = vunpack.c.h.b16 %v598
        %v2049 = vunpack.c.l.b16 %v599
        %v2050 = vunpack.c.h.b16 %v599
        %v2051 = vunpack.c.l.b16 %v600
        %v2052 = vunpack.c.h.b16 %v600
        %v2053 = vunpack.c.l.b16 %v601
        %v2054 = vunpack.c.h.b16 %v601
        %v2055 = vunpack.c.l.b16 %v602
        %v2056 = vunpack.c.h.b16 %v602
        %v2057 = vunpack.c.l.b16 %v603
        %v2058 = vunpack.c.h.b16 %v603
        %v2059 = vunpack.c.l.b16 %v604
        %v2060 = vunpack.c.h.b16 %v604
        %v2061 = vunpack.c.l.b16 %v605
        %v2062 = vunpack.c.h.b16 %v605
        %v2063 = vunpack.c.l.b16 %v606
        %v2064 = vunpack.c.h.b16 %v606
        %v2065 = vunpack.c.l.b16 %v607
        %v2066 = vunpack.c.h.b16 %v607
        %v2067 = vunpack.c.l.b16 %v608
        %v2068 = vunpack.c.h.b16 %v608
        %v2069 = vunpack.c.l.b16 %v609
        %v2070 = vunpack.c.h.b16 %v609
        %v2071 = vunpack.c.l.b16 %v610
        %v2072 = vunpack.c.h.b16 %v610
        %v2073 = vunpack.c.l.b16 %v611
        %v2074 = vunpack.c.h.b16 %v611
        %v2075 = vunpack.c.l.b16 %v612
        %v2076 = vunpack.c.h.b16 %v612
        %v2077 = vunpack.c.l.b16 %v613
        %v2078 = vunpack.c.h.b16 %v613
        %v2079 = vunpack.c.l.b16 %v614
        %v2080 = vunpack.c.h.b16 %v614
        %v2081 = vunpack.c.l.b16 %v615
        %v2082 = vunpack.c.h.b16 %v615
        %v2083 = vunpack.c.l.b16 %v616
        %v2084 = vunpack.c.h.b16 %v616
        %v2085 = vunpack.c.l.b16 %v617
        %v2086 = vunpack.c.h.b16 %v617
        %v2087 = vunpack.c.l.b16 %v618
        %v2088 = vunpack.c.h.b16 %v618
        %v2089 = vunpack.c.l.b16 %v619
        %v2090 = vunpack.c.h.b16 %v619
        %v2091 = vunpack.c.l.b16 %v620
        %v2092 = vunpack.c.h.b16 %v620
        %v2093 = vunpack.c.l.b16 %v621
        %v2094 = vunpack.c.h.b16 %v621
        %v2095 = vunpack.c.l.b16 %v622
        %v2096 = vunpack.c.h.b16 %v622
        %v2097 = vunpack.c.l.b16 %v623
        %v2098 = vunpack.c.h.b16 %v623
        %v2099 = vunpack.c.l.b16 %v624
        %v2100 = vunpack.c.h.b16 %v624
        %v2101 = vunpack.c.l.b16 %v625
        %v2102 = vunpack.c.h.b16 %v625
        %v2103 = vunpack.c.l.b16 %v626
        %v2104 = vunpack.c.h.b16 %v626
        %v2105 = vunpack.c.l.b16 %v627
        %v2106 = vunpack.c.h.b16 %v627
        %v2107 = vunpack.c.l.b16 %v628
        %v2108 = vunpack.c.h.b16 %v628
        %v2109 = vunpack.c.l.b16 %v629
        %v2110 = vunpack.c.h.b16 %v629
        %v2111 = vunpack.c.l.b16 %v630
        %v2112 = vunpack.c.h.b16 %v630
        %v2113 = vunpack.c.l.b16 %v631
        %v2114 = vunpack.c.h.b16 %v631
        %v2115 = vunpack.c.l.b16 %v632
        %v2116 = vunpack.c.h.b16 %v632
        %v2117 = vunpack.c.l.b16 %v633
        %v2118 = vunpack.c.h.b16 %v633
        %v2119 = vunpack.c.l.b16 %v634
        %v2120 = vunpack.c.h.b16 %v634
        %v2121 = vunpack.c.l.b16 %v635
        %v2122 = vunpack.c.h.b16 %v635
        %v2123 = vunpack.c.l.b16 %v636
        %v2124 = vunpack.c.h.b16 %v636
        %v2125 = vunpack.c.l.b16 %v637
        %v2126 = vunpack.c.h.b16 %v637
        %v2127 = vunpack.c.l.b16 %v638
        %v2128 = vunpack.c.h.b16 %v638
        %v2129 = vunpack.c.l.b16 %v639
        %v2130 = vunpack.c.h.b16 %v639
        %v2131 = vunpack.c.l.b16 %v640
        %v2132 = vunpack.c.h.b16 %v640
        %v2133 = vunpack.c.l.b16 %v641
        %v2134 = vunpack.c.h.b16 %v641
        %v2135 = vunpack.c.l.b16 %v642
        %v2136 = vunpack.c.h.b16 %v642
        %v2137 = vunpack.c.l.b16 %v643
        %v2138 = vunpack.c.h.b16 %v643
        %v2139 = vunpack.c.l.b16 %v644
        %v2140 = vunpack.c.h.b16 %v644
        %v2141 = vunpack.c.l.b16 %v645
        %v2142 = vunpack.c.h.b16 %v645
        %v2143 = vunpack.c.l.b16 %v646
        %v2144 = vunpack.c.h.b16 %v646
        %v2145 = vunpack.c.l.b16 %v647
        %v2146 = vunpack.c.h.b16 %v647
        %v2147 = vunpack.c.l.b16 %v648
        %v2148 = vunpack.c.h.b16 %v648
        %v2149 = vunpack.c.l.b16 %v649
        %v2150 = vunpack.c.h.b16 %v649
        %v2151 = vunpack.c.l.b16 %v650
        %v2152 = vunpack.c.h.b16 %v650
        %v2153 = vunpack.c.l.b16 %v651
        %v2154 = vunpack.c.h.b16 %v651
        %v2155 = vunpack.c.l.b16 %v652
        %v2156 = vunpack.c.h.b16 %v652
        %v2157 = vunpack.c.l.b16 %v653
        %v2158 = vunpack.c.h.b16 %v653
        %v2159 = vunpack.c.l.b16 %v654
        %v2160 = vunpack.c.h.b16 %v654
        %v2161 = vunpack.c.l.b16 %v655
        %v2162 = vunpack.c.h.b16 %v655
        %v2163 = vunpack.c.l.b16 %v656
        %v2164 = vunpack.c.h.b16 %v656
        %v2165 = vunpack.c.l.b16 %v657
        %v2166 = vunpack.c.h.b16 %v657
        %v2167 = vunpack.c.l.b16 %v658
        %v2168 = vunpack.c.h.b16 %v658
        %v2169 = vunpack.c.l.b16 %v659
        %v2170 = vunpack.c.h.b16 %v659
        %v2171 = vunpack.c.l.b16 %v660
        %v2172 = vunpack.c.h.b16 %v660
        %v2173 = vunpack.c.l.b16 %v661
        %v2174 = vunpack.c.h.b16 %v661
        %v2175 = vunpack.c.l.b16 %v662
        %v2176 = vunpack.c.h.b16 %v662
        %v2177 = vunpack.c.l.b16 %v663
        %v2178 = vunpack.c.h.b16 %v663
        %v2179 = vunpack.c.l.b16 %v664
        %v2180 = vunpack.c.h.b16 %v664
        %v2181 = vunpack.c.l.b16 %v665
        %v2182 = vunpack.c.h.b16 %v665
        %v2183 = vunpack.c.l.b16 %v666
        %v2184 = vunpack.c.h.b16 %v666
        %v2185 = vunpack.c.l.b16 %v667
        %v2186 = vunpack.c.h.b16 %v667
        %v2187 = vunpack.c.l.b16 %v668
        %v2188 = vunpack.c.h.b16 %v668
        %v2189 = vunpack.c.l.b16 %v669
        %v2190 = vunpack.c.h.b16 %v669
        %v2191 = vunpack.c.l.b16 %v670
        %v2192 = vunpack.c.h.b16 %v670
        %v2193 = vunpack.c.l.b16 %v671
        %v2194 = vunpack.c.h.b16 %v671
        %v2195 = vunpack.c.l.b16 %v672
        %v2196 = vunpack.c.h.b16 %v672
        %v2197 = vunpack.c.l.b16 %v673
        %v2198 = vunpack.c.h.b16 %v673
        %v2199 = vunpack.c.l.b16 %v674
        %v2200 = vunpack.c.h.b16 %v674
        %v2201 = vunpack.c.l.b16 %v675
        %v2202 = vunpack.c.h.b16 %v675
        %v2203 = vunpack.c.l.b16 %v676
        %v2204 = vunpack.c.h.b16 %v676
        %v2205 = vunpack.c.l.b16 %v677
        %v2206 = vunpack.c.h.b16 %v677
        %v2207 = vunpack.c.l.b16 %v678
        %v2208 = vunpack.c.h.b16 %v678
        %v2209 = vunpack.c.l.b16 %v679
        %v2210 = vunpack.c.h.b16 %v679
        %v2211 = vunpack.c.l.b16 %v680
        %v2212 = vunpack.c.h.b16 %v680
        %v2213 = vunpack.c.l.b16 %v681
        %v2214 = vunpack.c.h.b16 %v681
        %v2215 = vunpack.c.l.b16 %v682
        %v2216 = vunpack.c.h.b16 %v682
        %v2217 = vunpack.c.l.b16 %v683
        %v2218 = vunpack.c.h.b16 %v683
        %v2219 = vunpack.c.l.b16 %v684
        %v2220 = vunpack.c.h.b16 %v684
        %v2221 = vunpack.c.l.b16 %v685
        %v2222 = vunpack.c.h.b16 %v685
        %v2223 = vunpack.c.l.b16 %v686
        %v2224 = vunpack.c.h.b16 %v686
        %v2225 = vunpack.c.l.b16 %v687
        %v2226 = vunpack.c.h.b16 %v687
        %v2227 = vunpack.c.l.b16 %v688
        %v2228 = vunpack.c.h.b16 %v688
        %v2229 = vunpack.c.l.b16 %v689
        %v2230 = vunpack.c.h.b16 %v689
        %v2231 = vunpack.c.l.b16 %v690
        %v2232 = vunpack.c.h.b16 %v690
        %v2233 = vunpack.c.l.b16 %v691
        %v2234 = vunpack.c.h.b16 %v691
        %v2235 = vunpack.c.l.b16 %v692
        %v2236 = vunpack.c.h.b16 %v692
        %v2237 = vunpack.c.l.b16 %v693
        %v2238 = vunpack.c.h.b16 %v693
        %v2239 = vunpack.c.l.b16 %v694
        %v2240 = vunpack.c.h.b16 %v694
        %v2241 = vunpack.c.l.b16 %v695
        %v2242 = vunpack.c.h.b16 %v695
        %v2243 = vunpack.c.l.b16 %v696
        %v2244 = vunpack.c.h.b16 %v696
        %v2245 = vunpack.c.l.b16 %v697
        %v2246 = vunpack.c.h.b16 %v697
        %v2247 = vunpack.c.l.b16 %v698
        %v2248 = vunpack.c.h.b16 %v698
        %v2249 = vunpack.c.l.b16 %v699
        %v2250 = vunpack.c.h.b16 %v699
        %v2251 = vunpack.c.l.b16 %v700
        %v2252 = vunpack.c.h.b16 %v700
        %v2253 = vunpack.c.l.b16 %v701
        %v2254 = vunpack.c.h.b16 %v701
        %v2255 = vunpack.c.l.b16 %v702
        %v2256 = vunpack.c.h.b16 %v702
        %v2257 = vunpack.c.l.b16 %v703
        %v2258 = vunpack.c.h.b16 %v703
        %v2259 = vunpack.c.l.b16 %v704
        %v2260 = vunpack.c.h.b16 %v704
        %v2261 = vunpack.c.l.b16 %v705
        %v2262 = vunpack.c.h.b16 %v705
        %v2263 = vunpack.c.l.b16 %v706
        %v2264 = vunpack.c.h.b16 %v706
        %v2265 = vunpack.c.l.b16 %v707
        %v2266 = vunpack.c.h.b16 %v707
        %v2267 = vunpack.c.l.b16 %v708
        %v2268 = vunpack.c.h.b16 %v708
        %v2269 = vunpack.c.l.b16 %v709
        %v2270 = vunpack.c.h.b16 %v709
        %v2271 = vunpack.c.l.b16 %v710
        %v2272 = vunpack.c.h.b16 %v710
        %v2273 = vunpack.c.l.b16 %v711
        %v2274 = vunpack.c.h.b16 %v711
        %v2275 = vunpack.c.l.b16 %v712
        %v2276 = vunpack.c.h.b16 %v712
        %v2277 = vpack.c.b16 %v1261, %v1253
        %v2278 = vpack.c.b16 %v1262, %v1254
        %v2279 = vpack.c.b16 %v1263, %v1255
        %v2280 = vpack.c.b16 %v1264, %v1256
        %v2281 = vpack.c.b16 %v1265, %v1257
        %v2282 = vpack.c.b16 %v1266, %v1258
        %v2283 = vpack.c.b16 %v1267, %v1259
        %v2284 = vpack.c.b16 %v1268, %v1260
        %v2285 = vpack.c.b16 %v1277, %v1269
        %v2286 = vpack.c.b16 %v1278, %v1270
        %v2287 = vpack.c.b16 %v1279, %v1271
        %v2288 = vpack.c.b16 %v1280, %v1272
        %v2289 = vpack.c.b16 %v1281, %v1273
        %v2290 = vpack.c.b16 %v1282, %v1274
        %v2291 = vpack.c.b16 %v1283, %v1275
        %v2292 = vpack.c.b16 %v1284, %v1276
        %v2293 = vpack.c.b16 %v1293, %v1285
        %v2294 = vpack.c.b16 %v1294, %v1286
        %v2295 = vpack.c.b16 %v1295, %v1287
        %v2296 = vpack.c.b16 %v1296, %v1288
        %v2297 = vpack.c.b16 %v1297, %v1289
        %v2298 = vpack.c.b16 %v1298, %v1290
        %v2299 = vpack.c.b16 %v1299, %v1291
        %v2300 = vpack.c.b16 %v1300, %v1292
        %v2301 = vpack.c.b16 %v1309, %v1301
        %v2302 = vpack.c.b16 %v1310, %v1302
        %v2303 = vpack.c.b16 %v1311, %v1303
        %v2304 = vpack.c.b16 %v1312, %v1304
        %v2305 = vpack.c.b16 %v1313, %v1305
        %v2306 = vpack.c.b16 %v1314, %v1306
        %v2307 = vpack.c.b16 %v1315, %v1307
        %v2308 = vpack.c.b16 %v1316, %v1308
        %v2309 = vpack.c.b16 %v1325, %v1317
        %v2310 = vpack.c.b16 %v1326, %v1318
        %v2311 = vpack.c.b16 %v1327, %v1319
        %v2312 = vpack.c.b16 %v1328, %v1320
        %v2313 = vpack.c.b16 %v1329, %v1321
        %v2314 = vpack.c.b16 %v1330, %v1322
        %v2315 = vpack.c.b16 %v1331, %v1323
        %v2316 = vpack.c.b16 %v1332, %v1324
        %v2317 = vpack.c.b16 %v1341, %v1333
        %v2318 = vpack.c.b16 %v1342, %v1334
        %v2319 = vpack.c.b16 %v1343, %v1335
        %v2320 = vpack.c.b16 %v1344, %v1336
        %v2321 = vpack.c.b16 %v1345, %v1337
        %v2322 = vpack.c.b16 %v1346, %v1338
        %v2323 = vpack.c.b16 %v1347, %v1339
        %v2324 = vpack.c.b16 %v1348, %v1340
        %v2325 = vpack.c.b16 %v1357, %v1349
        %v2326 = vpack.c.b16 %v1358, %v1350
        %v2327 = vpack.c.b16 %v1359, %v1351
        %v2328 = vpack.c.b16 %v1360, %v1352
        %v2329 = vpack.c.b16 %v1361, %v1353
        %v2330 = vpack.c.b16 %v1362, %v1354
        %v2331 = vpack.c.b16 %v1363, %v1355
        %v2332 = vpack.c.b16 %v1364, %v1356
        %v2333 = vpack.c.b16 %v1373, %v1365
        %v2334 = vpack.c.b16 %v1374, %v1366
        %v2335 = vpack.c.b16 %v1375, %v1367
        %v2336 = vpack.c.b16 %v1376, %v1368
        %v2337 = vpack.c.b16 %v1377, %v1369
        %v2338 = vpack.c.b16 %v1378, %v1370
        %v2339 = vpack.c.b16 %v1379, %v1371
        %v2340 = vpack.c.b16 %v1380, %v1372
        %v2341 = vpack.c.b16 %v1389, %v1381
        %v2342 = vpack.c.b16 %v1390, %v1382
        %v2343 = vpack.c.b16 %v1391, %v1383
        %v2344 = vpack.c.b16 %v1392, %v1384
        %v2345 = vpack.c.b16 %v1393, %v1385
        %v2346 = vpack.c.b16 %v1394, %v1386
        %v2347 = vpack.c.b16 %v1395, %v1387
        %v2348 = vpack.c.b16 %v1396, %v1388
        %v2349 = vpack.c.b16 %v1405, %v1397
        %v2350 = vpack.c.b16 %v1406, %v1398
        %v2351 = vpack.c.b16 %v1407, %v1399
        %v2352 = vpack.c.b16 %v1408, %v1400
        %v2353 = vpack.c.b16 %v1409, %v1401
        %v2354 = vpack.c.b16 %v1410, %v1402
        %v2355 = vpack.c.b16 %v1411, %v1403
        %v2356 = vpack.c.b16 %v1412, %v1404
        %v2357 = vpack.c.b16 %v1421, %v1413
        %v2358 = vpack.c.b16 %v1422, %v1414
        %v2359 = vpack.c.b16 %v1423, %v1415
        %v2360 = vpack.c.b16 %v1424, %v1416
        %v2361 = vpack.c.b16 %v1425, %v1417
        %v2362 = vpack.c.b16 %v1426, %v1418
        %v2363 = vpack.c.b16 %v1427, %v1419
        %v2364 = vpack.c.b16 %v1428, %v1420
        %v2365 = vpack.c.b16 %v1437, %v1429
        %v2366 = vpack.c.b16 %v1438, %v1430
        %v2367 = vpack.c.b16 %v1439, %v1431
        %v2368 = vpack.c.b16 %v1440, %v1432
        %v2369 = vpack.c.b16 %v1441, %v1433
        %v2370 = vpack.c.b16 %v1442, %v1434
        %v2371 = vpack.c.b16 %v1443, %v1435
        %v2372 = vpack.c.b16 %v1444, %v1436
        %v2373 = vpack.c.b16 %v1453, %v1445
        %v2374 = vpack.c.b16 %v1454, %v1446
        %v2375 = vpack.c.b16 %v1455, %v1447
        %v2376 = vpack.c.b16 %v1456, %v1448
        %v2377 = vpack.c.b16 %v1457, %v1449
        %v2378 = vpack.c.b16 %v1458, %v1450
        %v2379 = vpack.c.b16 %v1459, %v1451
        %v2380 = vpack.c.b16 %v1460, %v1452
        %v2381 = vpack.c.b16 %v1469, %v1461
        %v2382 = vpack.c.b16 %v1470, %v1462
        %v2383 = vpack.c.b16 %v1471, %v1463
        %v2384 = vpack.c.b16 %v1472, %v1464
        %v2385 = vpack.c.b16 %v1473, %v1465
        %v2386 = vpack.c.b16 %v1474, %v1466
        %v2387 = vpack.c.b16 %v1475, %v1467
        %v2388 = vpack.c.b16 %v1476, %v1468
        %v2389 = vpack.c.b16 %v1485, %v1477
        %v2390 = vpack.c.b16 %v1486, %v1478
        %v2391 = vpack.c.b16 %v1487, %v1479
        %v2392 = vpack.c.b16 %v1488, %v1480
        %v2393 = vpack.c.b16 %v1489, %v1481
        %v2394 = vpack.c.b16 %v1490, %v1482
        %v2395 = vpack.c.b16 %v1491, %v1483
        %v2396 = vpack.c.b16 %v1492, %v1484
        %v2397 = vpack.c.b16 %v1501, %v1493
        %v2398 = vpack.c.b16 %v1502, %v1494
        %v2399 = vpack.c.b16 %v1503, %v1495
        %v2400 = vpack.c.b16 %v1504, %v1496
        %v2401 = vpack.c.b16 %v1505, %v1497
        %v2402 = vpack.c.b16 %v1506, %v1498
        %v2403 = vpack.c.b16 %v1507, %v1499
        %v2404 = vpack.c.b16 %v1508, %v1500
        %v2405 = vpack.c.b16 %v1517, %v1509
        %v2406 = vpack.c.b16 %v1518, %v1510
        %v2407 = vpack.c.b16 %v1519, %v1511
        %v2408 = vpack.c.b16 %v1520, %v1512
        %v2409 = vpack.c.b16 %v1521, %v1513
        %v2410 = vpack.c.b16 %v1522, %v1514
        %v2411 = vpack.c.b16 %v1523, %v1515
        %v2412 = vpack.c.b16 %v1524, %v1516
        %v2413 = vpack.c.b16 %v1533, %v1525
        %v2414 = vpack.c.b16 %v1534, %v1526
        %v2415 = vpack.c.b16 %v1535, %v1527
        %v2416 = vpack.c.b16 %v1536, %v1528
        %v2417 = vpack.c.b16 %v1537, %v1529
        %v2418 = vpack.c.b16 %v1538, %v1530
        %v2419 = vpack.c.b16 %v1539, %v1531
        %v2420 = vpack.c.b16 %v1540, %v1532
        %v2421 = vpack.c.b16 %v1549, %v1541
        %v2422 = vpack.c.b16 %v1550, %v1542
        %v2423 = vpack.c.b16 %v1551, %v1543
        %v2424 = vpack.c.b16 %v1552, %v1544
        %v2425 = vpack.c.b16 %v1553, %v1545
        %v2426 = vpack.c.b16 %v1554, %v1546
        %v2427 = vpack.c.b16 %v1555, %v1547
        %v2428 = vpack.c.b16 %v1556, %v1548
        %v2429 = vpack.c.b16 %v1565, %v1557
        %v2430 = vpack.c.b16 %v1566, %v1558
        %v2431 = vpack.c.b16 %v1567, %v1559
        %v2432 = vpack.c.b16 %v1568, %v1560
        %v2433 = vpack.c.b16 %v1569, %v1561
        %v2434 = vpack.c.b16 %v1570, %v1562
        %v2435 = vpack.c.b16 %v1571, %v1563
        %v2436 = vpack.c.b16 %v1572, %v1564
        %v2437 = vpack.c.b16 %v1581, %v1573
        %v2438 = vpack.c.b16 %v1582, %v1574
        %v2439 = vpack.c.b16 %v1583, %v1575
        %v2440 = vpack.c.b16 %v1584, %v1576
        %v2441 = vpack.c.b16 %v1585, %v1577
        %v2442 = vpack.c.b16 %v1586, %v1578
        %v2443 = vpack.c.b16 %v1587, %v1579
        %v2444 = vpack.c.b16 %v1588, %v1580
        %v2445 = vpack.c.b16 %v1597, %v1589
        %v2446 = vpack.c.b16 %v1598, %v1590
        %v2447 = vpack.c.b16 %v1599, %v1591
        %v2448 = vpack.c.b16 %v1600, %v1592
        %v2449 = vpack.c.b16 %v1601, %v1593
        %v2450 = vpack.c.b16 %v1602, %v1594
        %v2451 = vpack.c.b16 %v1603, %v1595
        %v2452 = vpack.c.b16 %v1604, %v1596
        %v2453 = vpack.c.b16 %v1613, %v1605
        %v2454 = vpack.c.b16 %v1614, %v1606
        %v2455 = vpack.c.b16 %v1615, %v1607
        %v2456 = vpack.c.b16 %v1616, %v1608
        %v2457 = vpack.c.b16 %v1617, %v1609
        %v2458 = vpack.c.b16 %v1618, %v1610
        %v2459 = vpack.c.b16 %v1619, %v1611
        %v2460 = vpack.c.b16 %v1620, %v1612
        %v2461 = vpack.c.b16 %v1629, %v1621
        %v2462 = vpack.c.b16 %v1630, %v1622
        %v2463 = vpack.c.b16 %v1631, %v1623
        %v2464 = vpack.c.b16 %v1632, %v1624
        %v2465 = vpack.c.b16 %v1633, %v1625
        %v2466 = vpack.c.b16 %v1634, %v1626
        %v2467 = vpack.c.b16 %v1635, %v1627
        %v2468 = vpack.c.b16 %v1636, %v1628
        %v2469 = vpack.c.b16 %v1645, %v1637
        %v2470 = vpack.c.b16 %v1646, %v1638
        %v2471 = vpack.c.b16 %v1647, %v1639
        %v2472 = vpack.c.b16 %v1648, %v1640
        %v2473 = vpack.c.b16 %v1649, %v1641
        %v2474 = vpack.c.b16 %v1650, %v1642
        %v2475 = vpack.c.b16 %v1651, %v1643
        %v2476 = vpack.c.b16 %v1652, %v1644
        %v2477 = vpack.c.b16 %v1661, %v1653
        %v2478 = vpack.c.b16 %v1662, %v1654
        %v2479 = vpack.c.b16 %v1663, %v1655
        %v2480 = vpack.c.b16 %v1664, %v1656
        %v2481 = vpack.c.b16 %v1665, %v1657
        %v2482 = vpack.c.b16 %v1666, %v1658
        %v2483 = vpack.c.b16 %v1667, %v1659
        %v2484 = vpack.c.b16 %v1668, %v1660
        %v2485 = vpack.c.b16 %v1677, %v1669
        %v2486 = vpack.c.b16 %v1678, %v1670
        %v2487 = vpack.c.b16 %v1679, %v1671
        %v2488 = vpack.c.b16 %v1680, %v1672
        %v2489 = vpack.c.b16 %v1681, %v1673
        %v2490 = vpack.c.b16 %v1682, %v1674
        %v2491 = vpack.c.b16 %v1683, %v1675
        %v2492 = vpack.c.b16 %v1684, %v1676
        %v2493 = vpack.c.b16 %v1693, %v1685
        %v2494 = vpack.c.b16 %v1694, %v1686
        %v2495 = vpack.c.b16 %v1695, %v1687
        %v2496 = vpack.c.b16 %v1696, %v1688
        %v2497 = vpack.c.b16 %v1697, %v1689
        %v2498 = vpack.c.b16 %v1698, %v1690
        %v2499 = vpack.c.b16 %v1699, %v1691
        %v2500 = vpack.c.b16 %v1700, %v1692
        %v2501 = vpack.c.b16 %v1709, %v1701
        %v2502 = vpack.c.b16 %v1710, %v1702
        %v2503 = vpack.c.b16 %v1711, %v1703
        %v2504 = vpack.c.b16 %v1712, %v1704
        %v2505 = vpack.c.b16 %v1713, %v1705
        %v2506 = vpack.c.b16 %v1714, %v1706
        %v2507 = vpack.c.b16 %v1715, %v1707
        %v2508 = vpack.c.b16 %v1716, %v1708
        %v2509 = vpack.c.b16 %v1725, %v1717
        %v2510 = vpack.c.b16 %v1726, %v1718
        %v2511 = vpack.c.b16 %v1727, %v1719
        %v2512 = vpack.c.b16 %v1728, %v1720
        %v2513 = vpack.c.b16 %v1729, %v1721
        %v2514 = vpack.c.b16 %v1730, %v1722
        %v2515 = vpack.c.b16 %v1731, %v1723
        %v2516 = vpack.c.b16 %v1732, %v1724
        %v2517 = vpack.c.b16 %v1741, %v1733
        %v2518 = vpack.c.b16 %v1742, %v1734
        %v2519 = vpack.c.b16 %v1743, %v1735
        %v2520 = vpack.c.b16 %v1744, %v1736
        %v2521 = vpack.c.b16 %v1745, %v1737
        %v2522 = vpack.c.b16 %v1746, %v1738
        %v2523 = vpack.c.b16 %v1747, %v1739
        %v2524 = vpack.c.b16 %v1748, %v1740
        %v2525 = vpack.c.b16 %v1757, %v1749
        %v2526 = vpack.c.b16 %v1758, %v1750
        %v2527 = vpack.c.b16 %v1759, %v1751
        %v2528 = vpack.c.b16 %v1760, %v1752
        %v2529 = vpack.c.b16 %v1761, %v1753
        %v2530 = vpack.c.b16 %v1762, %v1754
        %v2531 = vpack.c.b16 %v1763, %v1755
        %v2532 = vpack.c.b16 %v1764, %v1756
        %v2533 = vpack.c.b16 %v1773, %v1765
        %v2534 = vpack.c.b16 %v1774, %v1766
        %v2535 = vpack.c.b16 %v1775, %v1767
        %v2536 = vpack.c.b16 %v1776, %v1768
        %v2537 = vpack.c.b16 %v1777, %v1769
        %v2538 = vpack.c.b16 %v1778, %v1770
        %v2539 = vpack.c.b16 %v1779, %v1771
        %v2540 = vpack.c.b16 %v1780, %v1772
        %v2541 = vpack.c.b16 %v1789, %v1781
        %v2542 = vpack.c.b16 %v1790, %v1782
        %v2543 = vpack.c.b16 %v1791, %v1783
        %v2544 = vpack.c.b16 %v1792, %v1784
        %v2545 = vpack.c.b16 %v1793, %v1785
        %v2546 = vpack.c.b16 %v1794, %v1786
        %v2547 = vpack.c.b16 %v1795, %v1787
        %v2548 = vpack.c.b16 %v1796, %v1788
        %v2549 = vpack.c.b16 %v1805, %v1797
        %v2550 = vpack.c.b16 %v1806, %v1798
        %v2551 = vpack.c.b16 %v1807, %v1799
        %v2552 = vpack.c.b16 %v1808, %v1800
        %v2553 = vpack.c.b16 %v1809, %v1801
        %v2554 = vpack.c.b16 %v1810, %v1802
        %v2555 = vpack.c.b16 %v1811, %v1803
        %v2556 = vpack.c.b16 %v1812, %v1804
        %v2557 = vpack.c.b16 %v1821, %v1813
        %v2558 = vpack.c.b16 %v1822, %v1814
        %v2559 = vpack.c.b16 %v1823, %v1815
        %v2560 = vpack.c.b16 %v1824, %v1816
        %v2561 = vpack.c.b16 %v1825, %v1817
        %v2562 = vpack.c.b16 %v1826, %v1818
        %v2563 = vpack.c.b16 %v1827, %v1819
        %v2564 = vpack.c.b16 %v1828, %v1820
        %v2565 = vpack.c.b16 %v1837, %v1829
        %v2566 = vpack.c.b16 %v1838, %v1830
        %v2567 = vpack.c.b16 %v1839, %v1831
        %v2568 = vpack.c.b16 %v1840, %v1832
        %v2569 = vpack.c.b16 %v1841, %v1833
        %v2570 = vpack.c.b16 %v1842, %v1834
        %v2571 = vpack.c.b16 %v1843, %v1835
        %v2572 = vpack.c.b16 %v1844, %v1836
        %v2573 = vpack.c.b16 %v1853, %v1845
        %v2574 = vpack.c.b16 %v1854, %v1846
        %v2575 = vpack.c.b16 %v1855, %v1847
        %v2576 = vpack.c.b16 %v1856, %v1848
        %v2577 = vpack.c.b16 %v1857, %v1849
        %v2578 = vpack.c.b16 %v1858, %v1850
        %v2579 = vpack.c.b16 %v1859, %v1851
        %v2580 = vpack.c.b16 %v1860, %v1852
        %v2581 = vpack.c.b16 %v1869, %v1861
        %v2582 = vpack.c.b16 %v1870, %v1862
        %v2583 = vpack.c.b16 %v1871, %v1863
        %v2584 = vpack.c.b16 %v1872, %v1864
        %v2585 = vpack.c.b16 %v1873, %v1865
        %v2586 = vpack.c.b16 %v1874, %v1866
        %v2587 = vpack.c.b16 %v1875, %v1867
        %v2588 = vpack.c.b16 %v1876, %v1868
        %v2589 = vpack.c.b16 %v1885, %v1877
        %v2590 = vpack.c.b16 %v1886, %v1878
        %v2591 = vpack.c.b16 %v1887, %v1879
        %v2592 = vpack.c.b16 %v1888, %v1880
        %v2593 = vpack.c.b16 %v1889, %v1881
        %v2594 = vpack.c.b16 %v1890, %v1882
        %v2595 = vpack.c.b16 %v1891, %v1883
        %v2596 = vpack.c.b16 %v1892, %v1884
        %v2597 = vpack.c.b16 %v1901, %v1893
        %v2598 = vpack.c.b16 %v1902, %v1894
        %v2599 = vpack.c.b16 %v1903, %v1895
        %v2600 = vpack.c.b16 %v1904, %v1896
        %v2601 = vpack.c.b16 %v1905, %v1897
        %v2602 = vpack.c.b16 %v1906, %v1898
        %v2603 = vpack.c.b16 %v1907, %v1899
        %v2604 = vpack.c.b16 %v1908, %v1900
        %v2605 = vpack.c.b16 %v1917, %v1909
        %v2606 = vpack.c.b16 %v1918, %v1910
        %v2607 = vpack.c.b16 %v1919, %v1911
        %v2608 = vpack.c.b16 %v1920, %v1912
        %v2609 = vpack.c.b16 %v1921, %v1913
        %v2610 = vpack.c.b16 %v1922, %v1914
        %v2611 = vpack.c.b16 %v1923, %v1915
        %v2612 = vpack.c.b16 %v1924, %v1916
        %v2613 = vpack.c.b16 %v1933, %v1925
        %v2614 = vpack.c.b16 %v1934, %v1926
        %v2615 = vpack.c.b16 %v1935, %v1927
        %v2616 = vpack.c.b16 %v1936, %v1928
        %v2617 = vpack.c.b16 %v1937, %v1929
        %v2618 = vpack.c.b16 %v1938, %v1930
        %v2619 = vpack.c.b16 %v1939, %v1931
        %v2620 = vpack.c.b16 %v1940, %v1932
        %v2621 = vpack.c.b16 %v1949, %v1941
        %v2622 = vpack.c.b16 %v1950, %v1942
        %v2623 = vpack.c.b16 %v1951, %v1943
        %v2624 = vpack.c.b16 %v1952, %v1944
        %v2625 = vpack.c.b16 %v1953, %v1945
        %v2626 = vpack.c.b16 %v1954, %v1946
        %v2627 = vpack.c.b16 %v1955, %v1947
        %v2628 = vpack.c.b16 %v1956, %v1948
        %v2629 = vpack.c.b16 %v1965, %v1957
        %v2630 = vpack.c.b16 %v1966, %v1958
        %v2631 = vpack.c.b16 %v1967, %v1959
        %v2632 = vpack.c.b16 %v1968, %v1960
        %v2633 = vpack.c.b16 %v1969, %v1961
        %v2634 = vpack.c.b16 %v1970, %v1962
        %v2635 = vpack.c.b16 %v1971, %v1963
        %v2636 = vpack.c.b16 %v1972, %v1964
        %v2637 = vpack.c.b16 %v1981, %v1973
        %v2638 = vpack.c.b16 %v1982, %v1974
        %v2639 = vpack.c.b16 %v1983, %v1975
        %v2640 = vpack.c.b16 %v1984, %v1976
        %v2641 = vpack.c.b16 %v1985, %v1977
        %v2642 = vpack.c.b16 %v1986, %v1978
        %v2643 = vpack.c.b16 %v1987, %v1979
        %v2644 = vpack.c.b16 %v1988, %v1980
        %v2645 = vpack.c.b16 %v1997, %v1989
        %v2646 = vpack.c.b16 %v1998, %v1990
        %v2647 = vpack.c.b16 %v1999, %v1991
        %v2648 = vpack.c.b16 %v2000, %v1992
        %v2649 = vpack.c.b16 %v2001, %v1993
        %v2650 = vpack.c.b16 %v2002, %v1994
        %v2651 = vpack.c.b16 %v2003, %v1995
        %v2652 = vpack.c.b16 %v2004, %v1996
        %v2653 = vpack.c.b16 %v2013, %v2005
        %v2654 = vpack.c.b16 %v2014, %v2006
        %v2655 = vpack.c.b16 %v2015, %v2007
        %v2656 = vpack.c.b16 %v2016, %v2008
        %v2657 = vpack.c.b16 %v2017, %v2009
        %v2658 = vpack.c.b16 %v2018, %v2010
        %v2659 = vpack.c.b16 %v2019, %v2011
        %v2660 = vpack.c.b16 %v2020, %v2012
        %v2661 = vpack.c.b16 %v2029, %v2021
        %v2662 = vpack.c.b16 %v2030, %v2022
        %v2663 = vpack.c.b16 %v2031, %v2023
        %v2664 = vpack.c.b16 %v2032, %v2024
        %v2665 = vpack.c.b16 %v2033, %v2025
        %v2666 = vpack.c.b16 %v2034, %v2026
        %v2667 = vpack.c.b16 %v2035, %v2027
        %v2668 = vpack.c.b16 %v2036, %v2028
        %v2669 = vpack.c.b16 %v2045, %v2037
        %v2670 = vpack.c.b16 %v2046, %v2038
        %v2671 = vpack.c.b16 %v2047, %v2039
        %v2672 = vpack.c.b16 %v2048, %v2040
        %v2673 = vpack.c.b16 %v2049, %v2041
        %v2674 = vpack.c.b16 %v2050, %v2042
        %v2675 = vpack.c.b16 %v2051, %v2043
        %v2676 = vpack.c.b16 %v2052, %v2044
        %v2677 = vpack.c.b16 %v2061, %v2053
        %v2678 = vpack.c.b16 %v2062, %v2054
        %v2679 = vpack.c.b16 %v2063, %v2055
        %v2680 = vpack.c.b16 %v2064, %v2056
        %v2681 = vpack.c.b16 %v2065, %v2057
        %v2682 = vpack.c.b16 %v2066, %v2058
        %v2683 = vpack.c.b16 %v2067, %v2059
        %v2684 = vpack.c.b16 %v2068, %v2060
        %v2685 = vpack.c.b16 %v2077, %v2069
        %v2686 = vpack.c.b16 %v2078, %v2070
        %v2687 = vpack.c.b16 %v2079, %v2071
        %v2688 = vpack.c.b16 %v2080, %v2072
        %v2689 = vpack.c.b16 %v2081, %v2073
        %v2690 = vpack.c.b16 %v2082, %v2074
        %v2691 = vpack.c.b16 %v2083, %v2075
        %v2692 = vpack.c.b16 %v2084, %v2076
        %v2693 = vpack.c.b16 %v2093, %v2085
        %v2694 = vpack.c.b16 %v2094, %v2086
        %v2695 = vpack.c.b16 %v2095, %v2087
        %v2696 = vpack.c.b16 %v2096, %v2088
        %v2697 = vpack.c.b16 %v2097, %v2089
        %v2698 = vpack.c.b16 %v2098, %v2090
        %v2699 = vpack.c.b16 %v2099, %v2091
        %v2700 = vpack.c.b16 %v2100, %v2092
        %v2701 = vpack.c.b16 %v2109, %v2101
        %v2702 = vpack.c.b16 %v2110, %v2102
        %v2703 = vpack.c.b16 %v2111, %v2103
        %v2704 = vpack.c.b16 %v2112, %v2104
        %v2705 = vpack.c.b16 %v2113, %v2105
        %v2706 = vpack.c.b16 %v2114, %v2106
        %v2707 = vpack.c.b16 %v2115, %v2107
        %v2708 = vpack.c.b16 %v2116, %v2108
        %v2709 = vpack.c.b16 %v2125, %v2117
        %v2710 = vpack.c.b16 %v2126, %v2118
        %v2711 = vpack.c.b16 %v2127, %v2119
        %v2712 = vpack.c.b16 %v2128, %v2120
        %v2713 = vpack.c.b16 %v2129, %v2121
        %v2714 = vpack.c.b16 %v2130, %v2122
        %v2715 = vpack.c.b16 %v2131, %v2123
        %v2716 = vpack.c.b16 %v2132, %v2124
        %v2717 = vpack.c.b16 %v2141, %v2133
        %v2718 = vpack.c.b16 %v2142, %v2134
        %v2719 = vpack.c.b16 %v2143, %v2135
        %v2720 = vpack.c.b16 %v2144, %v2136
        %v2721 = vpack.c.b16 %v2145, %v2137
        %v2722 = vpack.c.b16 %v2146, %v2138
        %v2723 = vpack.c.b16 %v2147, %v2139
        %v2724 = vpack.c.b16 %v2148, %v2140
        %v2725 = vpack.c.b16 %v2157, %v2149
        %v2726 = vpack.c.b16 %v2158, %v2150
        %v2727 = vpack.c.b16 %v2159, %v2151
        %v2728 = vpack.c.b16 %v2160, %v2152
        %v2729 = vpack.c.b16 %v2161, %v2153
        %v2730 = vpack.c.b16 %v2162, %v2154
        %v2731 = vpack.c.b16 %v2163, %v2155
        %v2732 = vpack.c.b16 %v2164, %v2156
        %v2733 = vpack.c.b16 %v2173, %v2165
        %v2734 = vpack.c.b16 %v2174, %v2166
        %v2735 = vpack.c.b16 %v2175, %v2167
        %v2736 = vpack.c.b16 %v2176, %v2168
        %v2737 = vpack.c.b16 %v2177, %v2169
        %v2738 = vpack.c.b16 %v2178, %v2170
        %v2739 = vpack.c.b16 %v2179, %v2171
        %v2740 = vpack.c.b16 %v2180, %v2172
        %v2741 = vpack.c.b16 %v2189, %v2181
        %v2742 = vpack.c.b16 %v2190, %v2182
        %v2743 = vpack.c.b16 %v2191, %v2183
        %v2744 = vpack.c.b16 %v2192, %v2184
        %v2745 = vpack.c.b16 %v2193, %v2185
        %v2746 = vpack.c.b16 %v2194, %v2186
        %v2747 = vpack.c.b16 %v2195, %v2187
        %v2748 = vpack.c.b16 %v2196, %v2188
        %v2749 = vpack.c.b16 %v2205, %v2197
        %v2750 = vpack.c.b16 %v2206, %v2198
        %v2751 = vpack.c.b16 %v2207, %v2199
        %v2752 = vpack.c.b16 %v2208, %v2200
        %v2753 = vpack.c.b16 %v2209, %v2201
        %v2754 = vpack.c.b16 %v2210, %v2202
        %v2755 = vpack.c.b16 %v2211, %v2203
        %v2756 = vpack.c.b16 %v2212, %v2204
        %v2757 = vpack.c.b16 %v2221, %v2213
        %v2758 = vpack.c.b16 %v2222, %v2214
        %v2759 = vpack.c.b16 %v2223, %v2215
        %v2760 = vpack.c.b16 %v2224, %v2216
        %v2761 = vpack.c.b16 %v2225, %v2217
        %v2762 = vpack.c.b16 %v2226, %v2218
        %v2763 = vpack.c.b16 %v2227, %v2219
        %v2764 = vpack.c.b16 %v2228, %v2220
        %v2765 = vpack.c.b16 %v2237, %v2229
        %v2766 = vpack.c.b16 %v2238, %v2230
        %v2767 = vpack.c.b16 %v2239, %v2231
        %v2768 = vpack.c.b16 %v2240, %v2232
        %v2769 = vpack.c.b16 %v2241, %v2233
        %v2770 = vpack.c.b16 %v2242, %v2234
        %v2771 = vpack.c.b16 %v2243, %v2235
        %v2772 = vpack.c.b16 %v2244, %v2236
        %v2773 = vpack.c.b16 %v2253, %v2245
        %v2774 = vpack.c.b16 %v2254, %v2246
        %v2775 = vpack.c.b16 %v2255, %v2247
        %v2776 = vpack.c.b16 %v2256, %v2248
        %v2777 = vpack.c.b16 %v2257, %v2249
        %v2778 = vpack.c.b16 %v2258, %v2250
        %v2779 = vpack.c.b16 %v2259, %v2251
        %v2780 = vpack.c.b16 %v2260, %v2252
        %v2781 = vpack.c.b16 %v2269, %v2261
        %v2782 = vpack.c.b16 %v2270, %v2262
        %v2783 = vpack.c.b16 %v2271, %v2263
        %v2784 = vpack.c.b16 %v2272, %v2264
        %v2785 = vpack.c.b16 %v2273, %v2265
        %v2786 = vpack.c.b16 %v2274, %v2266
        %v2787 = vpack.c.b16 %v2275, %v2267
        %v2788 = vpack.c.b16 %v2276, %v2268
        %3301 = vmatprep.subr.bf16.mxu0 %v2278
        %3302 = vmatpush1.bf16.msra.mxu0 %v2277
        %3303 = vmatprep.subr.bf16.mxu0 %v2286
        %3304 = vmatpush1.bf16.msra.mxu0 %v2285
        %3305 = vmatprep.subr.bf16.mxu0 %v2294
        %3306 = vmatpush1.bf16.msra.mxu0 %v2293
        %3307 = vmatprep.subr.bf16.mxu0 %v2302
        %3308 = vmatpush1.bf16.msra.mxu0 %v2301
        %3309 = vmatprep.subr.bf16.mxu0 %v2310
        %3310 = vmatpush1.bf16.msra.mxu0 %v2309
        %3311 = vmatprep.subr.bf16.mxu0 %v2318
        %3312 = vmatpush1.bf16.msra.mxu0 %v2317
        %3313 = vmatprep.subr.bf16.mxu0 %v2326
        %3314 = vmatpush1.bf16.msra.mxu0 %v2325
        %3315 = vmatprep.subr.bf16.mxu0 %v2334
        %3316 = vmatpush1.bf16.msra.mxu0 %v2333
        %3317 = vmatprep.subr.bf16.mxu0 %v2342
        %3318 = vmatpush1.bf16.msra.mxu0 %v2341
        %3319 = vmatprep.subr.bf16.mxu0 %v2350
        %3320 = vmatpush1.bf16.msra.mxu0 %v2349
        %3321 = vmatprep.subr.bf16.mxu0 %v2358
        %3322 = vmatpush1.bf16.msra.mxu0 %v2357
        %3323 = vmatprep.subr.bf16.mxu0 %v2366
        %3324 = vmatpush1.bf16.msra.mxu0 %v2365
        %3325 = vmatprep.subr.bf16.mxu0 %v2374
        %3326 = vmatpush1.bf16.msra.mxu0 %v2373
        %3327 = vmatprep.subr.bf16.mxu0 %v2382
        %3328 = vmatpush1.bf16.msra.mxu0 %v2381
        %3329 = vmatprep.subr.bf16.mxu0 %v2390
        %3330 = vmatpush1.bf16.msra.mxu0 %v2389
        %3331 = vmatprep.subr.bf16.mxu0 %v2398
        %3332 = vmatpush1.bf16.msra.mxu0 %v2397
        %3333 = vmatprep.mubr.bf16.mxu0 %v726
        %3334 = vmatmul.mubr.bf16.gmra.mrb[0].mxu0 %v725
        %v3335 = vpop.f32.mrb[0].mxu0
        %v3336 = vadd.f32 0.0, %v3335
        %v3337 = vpop.f32.mrb[0].mxu0
        %v3338 = vadd.f32 0.0, %v3337
        %v3339 = vpop.f32.mrb[0].mxu0
        %v3340 = vpop.f32.mrb[0].mxu0
        %3341 = vdwg.mxu0
        %3342 = vmatprep.subr.bf16.mxu0 %v2406
        %3343 = vmatpush1.bf16.msra.mxu0 %v2405
        %3344 = vmatprep.subr.bf16.mxu0 %v2414
        %3345 = vmatpush1.bf16.msra.mxu0 %v2413
        %3346 = vmatprep.subr.bf16.mxu0 %v2422
        %3347 = vmatpush1.bf16.msra.mxu0 %v2421
        %3348 = vmatprep.subr.bf16.mxu0 %v2430
        %3349 = vmatpush1.bf16.msra.mxu0 %v2429
        %3350 = vmatprep.subr.bf16.mxu0 %v2438
        %3351 = vmatpush1.bf16.msra.mxu0 %v2437
        %3352 = vmatprep.subr.bf16.mxu0 %v2446
        %3353 = vmatpush1.bf16.msra.mxu0 %v2445
        %3354 = vmatprep.subr.bf16.mxu0 %v2454
        %3355 = vmatpush1.bf16.msra.mxu0 %v2453
        %3356 = vmatprep.subr.bf16.mxu0 %v2462
        %3357 = vmatpush1.bf16.msra.mxu0 %v2461
        %3358 = vmatprep.subr.bf16.mxu0 %v2470
        %3359 = vmatpush1.bf16.msra.mxu0 %v2469
        %3360 = vmatprep.subr.bf16.mxu0 %v2478
        %3361 = vmatpush1.bf16.msra.mxu0 %v2477
        %3362 = vmatprep.subr.bf16.mxu0 %v2486
        %3363 = vmatpush1.bf16.msra.mxu0 %v2485
        %3364 = vmatprep.subr.bf16.mxu0 %v2494
        %3365 = vmatpush1.bf16.msra.mxu0 %v2493
        %3366 = vmatprep.subr.bf16.mxu0 %v2502
        %3367 = vmatpush1.bf16.msra.mxu0 %v2501
        %3368 = vmatprep.subr.bf16.mxu0 %v2510
        %3369 = vmatpush1.bf16.msra.mxu0 %v2509
        %3370 = vmatprep.subr.bf16.mxu0 %v2518
        %3371 = vmatpush1.bf16.msra.mxu0 %v2517
        %3372 = vmatprep.subr.bf16.mxu0 %v2526
        %3373 = vmatpush1.bf16.msra.mxu0 %v2525
        %3374 = vmatprep.mubr.bf16.mxu0 %v728
        %3375 = vmatmul.mubr.bf16.gmra.mrb[0].mxu0 %v727
        %v3376 = vpop.f32.mrb[0].mxu0
        %v3377 = vadd.f32 %v3336, %v3376
        %v3378 = vpop.f32.mrb[0].mxu0
        %v3379 = vadd.f32 %v3338, %v3378
        %v3380 = vpop.f32.mrb[0].mxu0
        %v3381 = vpop.f32.mrb[0].mxu0
        %3382 = vdwg.mxu0
        %3383 = vmatprep.subr.bf16.mxu0 %v2534
        %3384 = vmatpush1.bf16.msra.mxu0 %v2533
        %3385 = vmatprep.subr.bf16.mxu0 %v2542
        %3386 = vmatpush1.bf16.msra.mxu0 %v2541
        %3387 = vmatprep.subr.bf16.mxu0 %v2550
        %3388 = vmatpush1.bf16.msra.mxu0 %v2549
        %3389 = vmatprep.subr.bf16.mxu0 %v2558
        %3390 = vmatpush1.bf16.msra.mxu0 %v2557
        %3391 = vmatprep.subr.bf16.mxu0 %v2566
        %3392 = vmatpush1.bf16.msra.mxu0 %v2565
        %3393 = vmatprep.subr.bf16.mxu0 %v2574
        %3394 = vmatpush1.bf16.msra.mxu0 %v2573
        %3395 = vmatprep.subr.bf16.mxu0 %v2582
        %3396 = vmatpush1.bf16.msra.mxu0 %v2581
        %3397 = vmatprep.subr.bf16.mxu0 %v2590
        %3398 = vmatpush1.bf16.msra.mxu0 %v2589
        %3399 = vmatprep.subr.bf16.mxu0 %v2598
        %3400 = vmatpush1.bf16.msra.mxu0 %v2597
        %3401 = vmatprep.subr.bf16.mxu0 %v2606
        %3402 = vmatpush1.bf16.msra.mxu0 %v2605
        %3403 = vmatprep.subr.bf16.mxu0 %v2614
        %3404 = vmatpush1.bf16.msra.mxu0 %v2613
        %3405 = vmatprep.subr.bf16.mxu0 %v2622
        %3406 = vmatpush1.bf16.msra.mxu0 %v2621
        %3407 = vmatprep.subr.bf16.mxu0 %v2630
        %3408 = vmatpush1.bf16.msra.mxu0 %v2629
        %3409 = vmatprep.subr.bf16.mxu0 %v2638
        %3410 = vmatpush1.bf16.msra.mxu0 %v2637
        %3411 = vmatprep.subr.bf16.mxu0 %v2646
        %3412 = vmatpush1.bf16.msra.mxu0 %v2645
        %3413 = vmatprep.subr.bf16.mxu0 %v2654
        %3414 = vmatpush1.bf16.msra.mxu0 %v2653
        %3415 = vmatprep.mubr.bf16.mxu0 %v730
        %3416 = vmatmul.mubr.bf16.gmra.mrb[0].mxu0 %v729
        %v3417 = vpop.f32.mrb[0].mxu0
        %v3418 = vadd.f32 %v3377, %v3417
        %v3419 = vpop.f32.mrb[0].mxu0
        %v3420 = vadd.f32 %v3379, %v3419
        %v3421 = vpop.f32.mrb[0].mxu0
        %v3422 = vpop.f32.mrb[0].mxu0
        %3423 = vdwg.mxu0
        %3424 = vmatprep.subr.bf16.mxu0 %v2662
        %3425 = vmatpush1.bf16.msra.mxu0 %v2661
        %3426 = vmatprep.subr.bf16.mxu0 %v2670
        %3427 = vmatpush1.bf16.msra.mxu0 %v2669
        %3428 = vmatprep.subr.bf16.mxu0 %v2678
        %3429 = vmatpush1.bf16.msra.mxu0 %v2677
        %3430 = vmatprep.subr.bf16.mxu0 %v2686
        %3431 = vmatpush1.bf16.msra.mxu0 %v2685
        %3432 = vmatprep.subr.bf16.mxu0 %v2694
        %3433 = vmatpush1.bf16.msra.mxu0 %v2693
        %3434 = vmatprep.subr.bf16.mxu0 %v2702
        %3435 = vmatpush1.bf16.msra.mxu0 %v2701
        %3436 = vmatprep.subr.bf16.mxu0 %v2710
        %3437 = vmatpush1.bf16.msra.mxu0 %v2709
        %3438 = vmatprep.subr.bf16.mxu0 %v2718
        %3439 = vmatpush1.bf16.msra.mxu0 %v2717
        %3440 = vmatprep.subr.bf16.mxu0 %v2726
        %3441 = vmatpush1.bf16.msra.mxu0 %v2725
        %3442 = vmatprep.subr.bf16.mxu0 %v2734
        %3443 = vmatpush1.bf16.msra.mxu0 %v2733
        %3444 = vmatprep.subr.bf16.mxu0 %v2742
        %3445 = vmatpush1.bf16.msra.mxu0 %v2741
        %3446 = vmatprep.subr.bf16.mxu0 %v2750
        %3447 = vmatpush1.bf16.msra.mxu0 %v2749
        %3448 = vmatprep.subr.bf16.mxu0 %v2758
        %3449 = vmatpush1.bf16.msra.mxu0 %v2757
        %3450 = vmatprep.subr.bf16.mxu0 %v2766
        %3451 = vmatpush1.bf16.msra.mxu0 %v2765
        %3452 = vmatprep.subr.bf16.mxu0 %v2774
        %3453 = vmatpush1.bf16.msra.mxu0 %v2773
        %3454 = vmatprep.subr.bf16.mxu0 %v2782
        %3455 = vmatpush1.bf16.msra.mxu0 %v2781
        %3456 = vmatprep.mubr.bf16.mxu0 %v732
        %3457 = vmatmul.mubr.bf16.gmra.mrb[0].mxu0 %v731
        %v3458 = vpop.f32.mrb[0].mxu0
        %v3459 = vadd.f32 %v3418, %v3458
        %v3460 = vpop.f32.mrb[0].mxu0
        %v3461 = vadd.f32 %v3420, %v3460
        %v3462 = vpop.f32.mrb[0].mxu0
        %v3463 = vpop.f32.mrb[0].mxu0
        %3464 = vdwg.mxu0
        %3465 = vmatprep.subr.bf16.mxu0 %v2280
        %3466 = vmatpush1.bf16.msra.mxu0 %v2279
        %3467 = vmatprep.subr.bf16.mxu0 %v2288
        %3468 = vmatpush1.bf16.msra.mxu0 %v2287
        %3469 = vmatprep.subr.bf16.mxu0 %v2296
        %3470 = vmatpush1.bf16.msra.mxu0 %v2295
        %3471 = vmatprep.subr.bf16.mxu0 %v2304
        %3472 = vmatpush1.bf16.msra.mxu0 %v2303
        %3473 = vmatprep.subr.bf16.mxu0 %v2312
        %3474 = vmatpush1.bf16.msra.mxu0 %v2311
        %3475 = vmatprep.subr.bf16.mxu0 %v2320
        %3476 = vmatpush1.bf16.msra.mxu0 %v2319
        %3477 = vmatprep.subr.bf16.mxu0 %v2328
        %3478 = vmatpush1.bf16.msra.mxu0 %v2327
        %3479 = vmatprep.subr.bf16.mxu0 %v2336
        %3480 = vmatpush1.bf16.msra.mxu0 %v2335
        %3481 = vmatprep.subr.bf16.mxu0 %v2344
        %3482 = vmatpush1.bf16.msra.mxu0 %v2343
        %3483 = vmatprep.subr.bf16.mxu0 %v2352
        %3484 = vmatpush1.bf16.msra.mxu0 %v2351
        %3485 = vmatprep.subr.bf16.mxu0 %v2360
        %3486 = vmatpush1.bf16.msra.mxu0 %v2359
        %3487 = vmatprep.subr.bf16.mxu0 %v2368
        %3488 = vmatpush1.bf16.msra.mxu0 %v2367
        %3489 = vmatprep.subr.bf16.mxu0 %v2376
        %3490 = vmatpush1.bf16.msra.mxu0 %v2375
        %3491 = vmatprep.subr.bf16.mxu0 %v2384
        %3492 = vmatpush1.bf16.msra.mxu0 %v2383
        %3493 = vmatprep.subr.bf16.mxu0 %v2392
        %3494 = vmatpush1.bf16.msra.mxu0 %v2391
        %3495 = vmatprep.subr.bf16.mxu0 %v2400
        %3496 = vmatpush1.bf16.msra.mxu0 %v2399
        %3497 = vmatprep.mubr.bf16.mxu0 %v726
        %3498 = vmatmul.mubr.bf16.gmra.mrb[0].mxu0 %v725
        %v3499 = vpop.f32.mrb[0].mxu0
        %v3500 = vadd.f32 0.0, %v3499
        %v3501 = vpop.f32.mrb[0].mxu0
        %v3502 = vadd.f32 0.0, %v3501
        %v3503 = vpop.f32.mrb[0].mxu0
        %v3504 = vpop.f32.mrb[0].mxu0
        %3505 = vdwg.mxu0
        %3506 = vmatprep.subr.bf16.mxu0 %v2408
        %3507 = vmatpush1.bf16.msra.mxu0 %v2407
        %3508 = vmatprep.subr.bf16.mxu0 %v2416
        %3509 = vmatpush1.bf16.msra.mxu0 %v2415
        %3510 = vmatprep.subr.bf16.mxu0 %v2424
        %3511 = vmatpush1.bf16.msra.mxu0 %v2423
        %3512 = vmatprep.subr.bf16.mxu0 %v2432
        %3513 = vmatpush1.bf16.msra.mxu0 %v2431
        %3514 = vmatprep.subr.bf16.mxu0 %v2440
        %3515 = vmatpush1.bf16.msra.mxu0 %v2439
        %3516 = vmatprep.subr.bf16.mxu0 %v2448
        %3517 = vmatpush1.bf16.msra.mxu0 %v2447
        %3518 = vmatprep.subr.bf16.mxu0 %v2456
        %3519 = vmatpush1.bf16.msra.mxu0 %v2455
        %3520 = vmatprep.subr.bf16.mxu0 %v2464
        %3521 = vmatpush1.bf16.msra.mxu0 %v2463
        %3522 = vmatprep.subr.bf16.mxu0 %v2472
        %3523 = vmatpush1.bf16.msra.mxu0 %v2471
        %3524 = vmatprep.subr.bf16.mxu0 %v2480
        %3525 = vmatpush1.bf16.msra.mxu0 %v2479
        %3526 = vmatprep.subr.bf16.mxu0 %v2488
        %3527 = vmatpush1.bf16.msra.mxu0 %v2487
        %3528 = vmatprep.subr.bf16.mxu0 %v2496
        %3529 = vmatpush1.bf16.msra.mxu0 %v2495
        %3530 = vmatprep.subr.bf16.mxu0 %v2504
        %3531 = vmatpush1.bf16.msra.mxu0 %v2503
        %3532 = vmatprep.subr.bf16.mxu0 %v2512
        %3533 = vmatpush1.bf16.msra.mxu0 %v2511
        %3534 = vmatprep.subr.bf16.mxu0 %v2520
        %3535 = vmatpush1.bf16.msra.mxu0 %v2519
        %3536 = vmatprep.subr.bf16.mxu0 %v2528
        %3537 = vmatpush1.bf16.msra.mxu0 %v2527
        %3538 = vmatprep.mubr.bf16.mxu0 %v728
        %3539 = vmatmul.mubr.bf16.gmra.mrb[0].mxu0 %v727
        %v3540 = vpop.f32.mrb[0].mxu0
        %v3541 = vadd.f32 %v3500, %v3540
        %v3542 = vpop.f32.mrb[0].mxu0
        %v3543 = vadd.f32 %v3502, %v3542
        %v3544 = vpop.f32.mrb[0].mxu0
        %v3545 = vpop.f32.mrb[0].mxu0
        %3546 = vdwg.mxu0
        %3547 = vmatprep.subr.bf16.mxu0 %v2536
        %3548 = vmatpush1.bf16.msra.mxu0 %v2535
        %3549 = vmatprep.subr.bf16.mxu0 %v2544
        %3550 = vmatpush1.bf16.msra.mxu0 %v2543
        %3551 = vmatprep.subr.bf16.mxu0 %v2552
        %3552 = vmatpush1.bf16.msra.mxu0 %v2551
        %3553 = vmatprep.subr.bf16.mxu0 %v2560
        %3554 = vmatpush1.bf16.msra.mxu0 %v2559
        %3555 = vmatprep.subr.bf16.mxu0 %v2568
        %3556 = vmatpush1.bf16.msra.mxu0 %v2567
        %3557 = vmatprep.subr.bf16.mxu0 %v2576
        %3558 = vmatpush1.bf16.msra.mxu0 %v2575
        %3559 = vmatprep.subr.bf16.mxu0 %v2584
        %3560 = vmatpush1.bf16.msra.mxu0 %v2583
        %3561 = vmatprep.subr.bf16.mxu0 %v2592
        %3562 = vmatpush1.bf16.msra.mxu0 %v2591
        %3563 = vmatprep.subr.bf16.mxu0 %v2600
        %3564 = vmatpush1.bf16.msra.mxu0 %v2599
        %3565 = vmatprep.subr.bf16.mxu0 %v2608
        %3566 = vmatpush1.bf16.msra.mxu0 %v2607
        %3567 = vmatprep.subr.bf16.mxu0 %v2616
        %3568 = vmatpush1.bf16.msra.mxu0 %v2615
        %3569 = vmatprep.subr.bf16.mxu0 %v2624
        %3570 = vmatpush1.bf16.msra.mxu0 %v2623
        %3571 = vmatprep.subr.bf16.mxu0 %v2632
        %3572 = vmatpush1.bf16.msra.mxu0 %v2631
        %3573 = vmatprep.subr.bf16.mxu0 %v2640
        %3574 = vmatpush1.bf16.msra.mxu0 %v2639
        %3575 = vmatprep.subr.bf16.mxu0 %v2648
        %3576 = vmatpush1.bf16.msra.mxu0 %v2647
        %3577 = vmatprep.subr.bf16.mxu0 %v2656
        %3578 = vmatpush1.bf16.msra.mxu0 %v2655
        %3579 = vmatprep.mubr.bf16.mxu0 %v730
        %3580 = vmatmul.mubr.bf16.gmra.mrb[0].mxu0 %v729
        %v3581 = vpop.f32.mrb[0].mxu0
        %v3582 = vadd.f32 %v3541, %v3581
        %v3583 = vpop.f32.mrb[0].mxu0
        %v3584 = vadd.f32 %v3543, %v3583
        %v3585 = vpop.f32.mrb[0].mxu0
        %v3586 = vpop.f32.mrb[0].mxu0
        %3587 = vdwg.mxu0
        %3588 = vmatprep.subr.bf16.mxu0 %v2664
        %3589 = vmatpush1.bf16.msra.mxu0 %v2663
        %3590 = vmatprep.subr.bf16.mxu0 %v2672
        %3591 = vmatpush1.bf16.msra.mxu0 %v2671
        %3592 = vmatprep.subr.bf16.mxu0 %v2680
        %3593 = vmatpush1.bf16.msra.mxu0 %v2679
        %3594 = vmatprep.subr.bf16.mxu0 %v2688
        %3595 = vmatpush1.bf16.msra.mxu0 %v2687
        %3596 = vmatprep.subr.bf16.mxu0 %v2696
        %3597 = vmatpush1.bf16.msra.mxu0 %v2695
        %3598 = vmatprep.subr.bf16.mxu0 %v2704
        %3599 = vmatpush1.bf16.msra.mxu0 %v2703
        %3600 = vmatprep.subr.bf16.mxu0 %v2712
        %3601 = vmatpush1.bf16.msra.mxu0 %v2711
        %3602 = vmatprep.subr.bf16.mxu0 %v2720
        %3603 = vmatpush1.bf16.msra.mxu0 %v2719
        %3604 = vmatprep.subr.bf16.mxu0 %v2728
        %3605 = vmatpush1.bf16.msra.mxu0 %v2727
        %3606 = vmatprep.subr.bf16.mxu0 %v2736
        %3607 = vmatpush1.bf16.msra.mxu0 %v2735
        %3608 = vmatprep.subr.bf16.mxu0 %v2744
        %3609 = vmatpush1.bf16.msra.mxu0 %v2743
        %3610 = vmatprep.subr.bf16.mxu0 %v2752
        %3611 = vmatpush1.bf16.msra.mxu0 %v2751
        %3612 = vmatprep.subr.bf16.mxu0 %v2760
        %3613 = vmatpush1.bf16.msra.mxu0 %v2759
        %3614 = vmatprep.subr.bf16.mxu0 %v2768
        %3615 = vmatpush1.bf16.msra.mxu0 %v2767
        %3616 = vmatprep.subr.bf16.mxu0 %v2776
        %3617 = vmatpush1.bf16.msra.mxu0 %v2775
        %3618 = vmatprep.subr.bf16.mxu0 %v2784
        %3619 = vmatpush1.bf16.msra.mxu0 %v2783
        %3620 = vmatprep.mubr.bf16.mxu0 %v732
        %3621 = vmatmul.mubr.bf16.gmra.mrb[0].mxu0 %v731
        %v3622 = vpop.f32.mrb[0].mxu0
        %v3623 = vadd.f32 %v3582, %v3622
        %v3624 = vpop.f32.mrb[0].mxu0
        %v3625 = vadd.f32 %v3584, %v3624
        %v3626 = vpop.f32.mrb[0].mxu0
        %v3627 = vpop.f32.mrb[0].mxu0
        %3628 = vdwg.mxu0
        %3629 = vmatprep.subr.bf16.mxu0 %v2282
        %3630 = vmatpush1.bf16.msra.mxu0 %v2281
        %3631 = vmatprep.subr.bf16.mxu0 %v2290
        %3632 = vmatpush1.bf16.msra.mxu0 %v2289
        %3633 = vmatprep.subr.bf16.mxu0 %v2298
        %3634 = vmatpush1.bf16.msra.mxu0 %v2297
        %3635 = vmatprep.subr.bf16.mxu0 %v2306
        %3636 = vmatpush1.bf16.msra.mxu0 %v2305
        %3637 = vmatprep.subr.bf16.mxu0 %v2314
        %3638 = vmatpush1.bf16.msra.mxu0 %v2313
        %3639 = vmatprep.subr.bf16.mxu0 %v2322
        %3640 = vmatpush1.bf16.msra.mxu0 %v2321
        %3641 = vmatprep.subr.bf16.mxu0 %v2330
        %3642 = vmatpush1.bf16.msra.mxu0 %v2329
        %3643 = vmatprep.subr.bf16.mxu0 %v2338
        %3644 = vmatpush1.bf16.msra.mxu0 %v2337
        %3645 = vmatprep.subr.bf16.mxu0 %v2346
        %3646 = vmatpush1.bf16.msra.mxu0 %v2345
        %3647 = vmatprep.subr.bf16.mxu0 %v2354
        %3648 = vmatpush1.bf16.msra.mxu0 %v2353
        %3649 = vmatprep.subr.bf16.mxu0 %v2362
        %3650 = vmatpush1.bf16.msra.mxu0 %v2361
        %3651 = vmatprep.subr.bf16.mxu0 %v2370
        %3652 = vmatpush1.bf16.msra.mxu0 %v2369
        %3653 = vmatprep.subr.bf16.mxu0 %v2378
        %3654 = vmatpush1.bf16.msra.mxu0 %v2377
        %3655 = vmatprep.subr.bf16.mxu0 %v2386
        %3656 = vmatpush1.bf16.msra.mxu0 %v2385
        %3657 = vmatprep.subr.bf16.mxu0 %v2394
        %3658 = vmatpush1.bf16.msra.mxu0 %v2393
        %3659 = vmatprep.subr.bf16.mxu0 %v2402
        %3660 = vmatpush1.bf16.msra.mxu0 %v2401
        %3661 = vmatprep.mubr.bf16.mxu0 %v726
        %3662 = vmatmul.mubr.bf16.gmra.mrb[0].mxu0 %v725
        %v3663 = vpop.f32.mrb[0].mxu0
        %v3664 = vadd.f32 0.0, %v3663
        %v3665 = vpop.f32.mrb[0].mxu0
        %v3666 = vadd.f32 0.0, %v3665
        %v3667 = vpop.f32.mrb[0].mxu0
        %v3668 = vpop.f32.mrb[0].mxu0
        %3669 = vdwg.mxu0
        %3670 = vmatprep.subr.bf16.mxu0 %v2410
        %3671 = vmatpush1.bf16.msra.mxu0 %v2409
        %3672 = vmatprep.subr.bf16.mxu0 %v2418
        %3673 = vmatpush1.bf16.msra.mxu0 %v2417
        %3674 = vmatprep.subr.bf16.mxu0 %v2426
        %3675 = vmatpush1.bf16.msra.mxu0 %v2425
        %3676 = vmatprep.subr.bf16.mxu0 %v2434
        %3677 = vmatpush1.bf16.msra.mxu0 %v2433
        %3678 = vmatprep.subr.bf16.mxu0 %v2442
        %3679 = vmatpush1.bf16.msra.mxu0 %v2441
        %3680 = vmatprep.subr.bf16.mxu0 %v2450
        %3681 = vmatpush1.bf16.msra.mxu0 %v2449
        %3682 = vmatprep.subr.bf16.mxu0 %v2458
        %3683 = vmatpush1.bf16.msra.mxu0 %v2457
        %3684 = vmatprep.subr.bf16.mxu0 %v2466
        %3685 = vmatpush1.bf16.msra.mxu0 %v2465
        %3686 = vmatprep.subr.bf16.mxu0 %v2474
        %3687 = vmatpush1.bf16.msra.mxu0 %v2473
        %3688 = vmatprep.subr.bf16.mxu0 %v2482
        %3689 = vmatpush1.bf16.msra.mxu0 %v2481
        %3690 = vmatprep.subr.bf16.mxu0 %v2490
        %3691 = vmatpush1.bf16.msra.mxu0 %v2489
        %3692 = vmatprep.subr.bf16.mxu0 %v2498
        %3693 = vmatpush1.bf16.msra.mxu0 %v2497
        %3694 = vmatprep.subr.bf16.mxu0 %v2506
        %3695 = vmatpush1.bf16.msra.mxu0 %v2505
        %3696 = vmatprep.subr.bf16.mxu0 %v2514
        %3697 = vmatpush1.bf16.msra.mxu0 %v2513
        %3698 = vmatprep.subr.bf16.mxu0 %v2522
        %3699 = vmatpush1.bf16.msra.mxu0 %v2521
        %3700 = vmatprep.subr.bf16.mxu0 %v2530
        %3701 = vmatpush1.bf16.msra.mxu0 %v2529
        %3702 = vmatprep.mubr.bf16.mxu0 %v728
        %3703 = vmatmul.mubr.bf16.gmra.mrb[0].mxu0 %v727
        %v3704 = vpop.f32.mrb[0].mxu0
        %v3705 = vadd.f32 %v3664, %v3704
        %v3706 = vpop.f32.mrb[0].mxu0
        %v3707 = vadd.f32 %v3666, %v3706
        %v3708 = vpop.f32.mrb[0].mxu0
        %v3709 = vpop.f32.mrb[0].mxu0
        %3710 = vdwg.mxu0
        %3711 = vmatprep.subr.bf16.mxu0 %v2538
        %3712 = vmatpush1.bf16.msra.mxu0 %v2537
        %3713 = vmatprep.subr.bf16.mxu0 %v2546
        %3714 = vmatpush1.bf16.msra.mxu0 %v2545
        %3715 = vmatprep.subr.bf16.mxu0 %v2554
        %3716 = vmatpush1.bf16.msra.mxu0 %v2553
        %3717 = vmatprep.subr.bf16.mxu0 %v2562
        %3718 = vmatpush1.bf16.msra.mxu0 %v2561
        %3719 = vmatprep.subr.bf16.mxu0 %v2570
        %3720 = vmatpush1.bf16.msra.mxu0 %v2569
        %3721 = vmatprep.subr.bf16.mxu0 %v2578
        %3722 = vmatpush1.bf16.msra.mxu0 %v2577
        %3723 = vmatprep.subr.bf16.mxu0 %v2586
        %3724 = vmatpush1.bf16.msra.mxu0 %v2585
        %3725 = vmatprep.subr.bf16.mxu0 %v2594
        %3726 = vmatpush1.bf16.msra.mxu0 %v2593
        %3727 = vmatprep.subr.bf16.mxu0 %v2602
        %3728 = vmatpush1.bf16.msra.mxu0 %v2601
        %3729 = vmatprep.subr.bf16.mxu0 %v2610
        %3730 = vmatpush1.bf16.msra.mxu0 %v2609
        %3731 = vmatprep.subr.bf16.mxu0 %v2618
        %3732 = vmatpush1.bf16.msra.mxu0 %v2617
        %3733 = vmatprep.subr.bf16.mxu0 %v2626
        %3734 = vmatpush1.bf16.msra.mxu0 %v2625
        %3735 = vmatprep.subr.bf16.mxu0 %v2634
        %3736 = vmatpush1.bf16.msra.mxu0 %v2633
        %3737 = vmatprep.subr.bf16.mxu0 %v2642
        %3738 = vmatpush1.bf16.msra.mxu0 %v2641
        %3739 = vmatprep.subr.bf16.mxu0 %v2650
        %3740 = vmatpush1.bf16.msra.mxu0 %v2649
        %3741 = vmatprep.subr.bf16.mxu0 %v2658
        %3742 = vmatpush1.bf16.msra.mxu0 %v2657
        %3743 = vmatprep.mubr.bf16.mxu0 %v730
        %3744 = vmatmul.mubr.bf16.gmra.mrb[0].mxu0 %v729
        %v3745 = vpop.f32.mrb[0].mxu0
        %v3746 = vadd.f32 %v3705, %v3745
        %v3747 = vpop.f32.mrb[0].mxu0
        %v3748 = vadd.f32 %v3707, %v3747
        %v3749 = vpop.f32.mrb[0].mxu0
        %v3750 = vpop.f32.mrb[0].mxu0
        %3751 = vdwg.mxu0
        %3752 = vmatprep.subr.bf16.mxu0 %v2666
        %3753 = vmatpush1.bf16.msra.mxu0 %v2665
        %3754 = vmatprep.subr.bf16.mxu0 %v2674
        %3755 = vmatpush1.bf16.msra.mxu0 %v2673
        %3756 = vmatprep.subr.bf16.mxu0 %v2682
        %3757 = vmatpush1.bf16.msra.mxu0 %v2681
        %3758 = vmatprep.subr.bf16.mxu0 %v2690
        %3759 = vmatpush1.bf16.msra.mxu0 %v2689
        %3760 = vmatprep.subr.bf16.mxu0 %v2698
        %3761 = vmatpush1.bf16.msra.mxu0 %v2697
        %3762 = vmatprep.subr.bf16.mxu0 %v2706
        %3763 = vmatpush1.bf16.msra.mxu0 %v2705
        %3764 = vmatprep.subr.bf16.mxu0 %v2714
        %3765 = vmatpush1.bf16.msra.mxu0 %v2713
        %3766 = vmatprep.subr.bf16.mxu0 %v2722
        %3767 = vmatpush1.bf16.msra.mxu0 %v2721
        %3768 = vmatprep.subr.bf16.mxu0 %v2730
        %3769 = vmatpush1.bf16.msra.mxu0 %v2729
        %3770 = vmatprep.subr.bf16.mxu0 %v2738
        %3771 = vmatpush1.bf16.msra.mxu0 %v2737
        %3772 = vmatprep.subr.bf16.mxu0 %v2746
        %3773 = vmatpush1.bf16.msra.mxu0 %v2745
        %3774 = vmatprep.subr.bf16.mxu0 %v2754
        %3775 = vmatpush1.bf16.msra.mxu0 %v2753
        %3776 = vmatprep.subr.bf16.mxu0 %v2762
        %3777 = vmatpush1.bf16.msra.mxu0 %v2761
        %3778 = vmatprep.subr.bf16.mxu0 %v2770
        %3779 = vmatpush1.bf16.msra.mxu0 %v2769
        %3780 = vmatprep.subr.bf16.mxu0 %v2778
        %3781 = vmatpush1.bf16.msra.mxu0 %v2777
        %3782 = vmatprep.subr.bf16.mxu0 %v2786
        %3783 = vmatpush1.bf16.msra.mxu0 %v2785
        %3784 = vmatprep.mubr.bf16.mxu0 %v732
        %3785 = vmatmul.mubr.bf16.gmra.mrb[0].mxu0 %v731
        %v3786 = vpop.f32.mrb[0].mxu0
        %v3787 = vadd.f32 %v3746, %v3786
        %v3788 = vpop.f32.mrb[0].mxu0
        %v3789 = vadd.f32 %v3748, %v3788
        %v3790 = vpop.f32.mrb[0].mxu0
        %v3791 = vpop.f32.mrb[0].mxu0
        %3792 = vdwg.mxu0
        %3793 = vmatprep.subr.bf16.mxu0 %v2284
        %3794 = vmatpush1.bf16.msra.mxu0 %v2283
        %3795 = vmatprep.subr.bf16.mxu0 %v2292
        %3796 = vmatpush1.bf16.msra.mxu0 %v2291
        %3797 = vmatprep.subr.bf16.mxu0 %v2300
        %3798 = vmatpush1.bf16.msra.mxu0 %v2299
        %3799 = vmatprep.subr.bf16.mxu0 %v2308
        %3800 = vmatpush1.bf16.msra.mxu0 %v2307
        %3801 = vmatprep.subr.bf16.mxu0 %v2316
        %3802 = vmatpush1.bf16.msra.mxu0 %v2315
        %3803 = vmatprep.subr.bf16.mxu0 %v2324
        %3804 = vmatpush1.bf16.msra.mxu0 %v2323
        %3805 = vmatprep.subr.bf16.mxu0 %v2332
        %3806 = vmatpush1.bf16.msra.mxu0 %v2331
        %3807 = vmatprep.subr.bf16.mxu0 %v2340
        %3808 = vmatpush1.bf16.msra.mxu0 %v2339
        %3809 = vmatprep.subr.bf16.mxu0 %v2348
        %3810 = vmatpush1.bf16.msra.mxu0 %v2347
        %3811 = vmatprep.subr.bf16.mxu0 %v2356
        %3812 = vmatpush1.bf16.msra.mxu0 %v2355
        %3813 = vmatprep.subr.bf16.mxu0 %v2364
        %3814 = vmatpush1.bf16.msra.mxu0 %v2363
        %3815 = vmatprep.subr.bf16.mxu0 %v2372
        %3816 = vmatpush1.bf16.msra.mxu0 %v2371
        %3817 = vmatprep.subr.bf16.mxu0 %v2380
        %3818 = vmatpush1.bf16.msra.mxu0 %v2379
        %3819 = vmatprep.subr.bf16.mxu0 %v2388
        %3820 = vmatpush1.bf16.msra.mxu0 %v2387
        %3821 = vmatprep.subr.bf16.mxu0 %v2396
        %3822 = vmatpush1.bf16.msra.mxu0 %v2395
        %3823 = vmatprep.subr.bf16.mxu0 %v2404
        %3824 = vmatpush1.bf16.msra.mxu0 %v2403
        %3825 = vmatprep.mubr.bf16.mxu0 %v726
        %3826 = vmatmul.mubr.bf16.gmra.mrb[0].mxu0 %v725
        %v3827 = vpop.f32.mrb[0].mxu0
        %v3828 = vadd.f32 0.0, %v3827
        %v3829 = vpop.f32.mrb[0].mxu0
        %v3830 = vadd.f32 0.0, %v3829
        %v3831 = vpop.f32.mrb[0].mxu0
        %v3832 = vpop.f32.mrb[0].mxu0
        %3833 = vdwg.mxu0
        %3834 = vmatprep.subr.bf16.mxu0 %v2412
        %3835 = vmatpush1.bf16.msra.mxu0 %v2411
        %3836 = vmatprep.subr.bf16.mxu0 %v2420
        %3837 = vmatpush1.bf16.msra.mxu0 %v2419
        %3838 = vmatprep.subr.bf16.mxu0 %v2428
        %3839 = vmatpush1.bf16.msra.mxu0 %v2427
        %3840 = vmatprep.subr.bf16.mxu0 %v2436
        %3841 = vmatpush1.bf16.msra.mxu0 %v2435
        %3842 = vmatprep.subr.bf16.mxu0 %v2444
        %3843 = vmatpush1.bf16.msra.mxu0 %v2443
        %3844 = vmatprep.subr.bf16.mxu0 %v2452
        %3845 = vmatpush1.bf16.msra.mxu0 %v2451
        %3846 = vmatprep.subr.bf16.mxu0 %v2460
        %3847 = vmatpush1.bf16.msra.mxu0 %v2459
        %3848 = vmatprep.subr.bf16.mxu0 %v2468
        %3849 = vmatpush1.bf16.msra.mxu0 %v2467
        %3850 = vmatprep.subr.bf16.mxu0 %v2476
        %3851 = vmatpush1.bf16.msra.mxu0 %v2475
        %3852 = vmatprep.subr.bf16.mxu0 %v2484
        %3853 = vmatpush1.bf16.msra.mxu0 %v2483
        %3854 = vmatprep.subr.bf16.mxu0 %v2492
        %3855 = vmatpush1.bf16.msra.mxu0 %v2491
        %3856 = vmatprep.subr.bf16.mxu0 %v2500
        %3857 = vmatpush1.bf16.msra.mxu0 %v2499
        %3858 = vmatprep.subr.bf16.mxu0 %v2508
        %3859 = vmatpush1.bf16.msra.mxu0 %v2507
        %3860 = vmatprep.subr.bf16.mxu0 %v2516
        %3861 = vmatpush1.bf16.msra.mxu0 %v2515
        %3862 = vmatprep.subr.bf16.mxu0 %v2524
        %3863 = vmatpush1.bf16.msra.mxu0 %v2523
        %3864 = vmatprep.subr.bf16.mxu0 %v2532
        %3865 = vmatpush1.bf16.msra.mxu0 %v2531
        %3866 = vmatprep.mubr.bf16.mxu0 %v728
        %3867 = vmatmul.mubr.bf16.gmra.mrb[0].mxu0 %v727
        %v3868 = vpop.f32.mrb[0].mxu0
        %v3869 = vadd.f32 %v3828, %v3868
        %v3870 = vpop.f32.mrb[0].mxu0
        %v3871 = vadd.f32 %v3830, %v3870
        %v3872 = vpop.f32.mrb[0].mxu0
        %v3873 = vpop.f32.mrb[0].mxu0
        %3874 = vdwg.mxu0
        %3875 = vmatprep.subr.bf16.mxu0 %v2540
        %3876 = vmatpush1.bf16.msra.mxu0 %v2539
        %3877 = vmatprep.subr.bf16.mxu0 %v2548
        %3878 = vmatpush1.bf16.msra.mxu0 %v2547
        %3879 = vmatprep.subr.bf16.mxu0 %v2556
        %3880 = vmatpush1.bf16.msra.mxu0 %v2555
        %3881 = vmatprep.subr.bf16.mxu0 %v2564
        %3882 = vmatpush1.bf16.msra.mxu0 %v2563
        %3883 = vmatprep.subr.bf16.mxu0 %v2572
        %3884 = vmatpush1.bf16.msra.mxu0 %v2571
        %3885 = vmatprep.subr.bf16.mxu0 %v2580
        %3886 = vmatpush1.bf16.msra.mxu0 %v2579
        %3887 = vmatprep.subr.bf16.mxu0 %v2588
        %3888 = vmatpush1.bf16.msra.mxu0 %v2587
        %3889 = vmatprep.subr.bf16.mxu0 %v2596
        %3890 = vmatpush1.bf16.msra.mxu0 %v2595
        %3891 = vmatprep.subr.bf16.mxu0 %v2604
        %3892 = vmatpush1.bf16.msra.mxu0 %v2603
        %3893 = vmatprep.subr.bf16.mxu0 %v2612
        %3894 = vmatpush1.bf16.msra.mxu0 %v2611
        %3895 = vmatprep.subr.bf16.mxu0 %v2620
        %3896 = vmatpush1.bf16.msra.mxu0 %v2619
        %3897 = vmatprep.subr.bf16.mxu0 %v2628
        %3898 = vmatpush1.bf16.msra.mxu0 %v2627
        %3899 = vmatprep.subr.bf16.mxu0 %v2636
        %3900 = vmatpush1.bf16.msra.mxu0 %v2635
        %3901 = vmatprep.subr.bf16.mxu0 %v2644
        %3902 = vmatpush1.bf16.msra.mxu0 %v2643
        %3903 = vmatprep.subr.bf16.mxu0 %v2652
        %3904 = vmatpush1.bf16.msra.mxu0 %v2651
        %3905 = vmatprep.subr.bf16.mxu0 %v2660
        %3906 = vmatpush1.bf16.msra.mxu0 %v2659
        %3907 = vmatprep.mubr.bf16.mxu0 %v730
        %3908 = vmatmul.mubr.bf16.gmra.mrb[0].mxu0 %v729
        %v3909 = vpop.f32.mrb[0].mxu0
        %v3910 = vadd.f32 %v3869, %v3909
        %v3911 = vpop.f32.mrb[0].mxu0
        %v3912 = vadd.f32 %v3871, %v3911
        %v3913 = vpop.f32.mrb[0].mxu0
        %v3914 = vpop.f32.mrb[0].mxu0
        %3915 = vdwg.mxu0
        %3916 = vmatprep.subr.bf16.mxu0 %v2668
        %3917 = vmatpush1.bf16.msra.mxu0 %v2667
        %3918 = vmatprep.subr.bf16.mxu0 %v2676
        %3919 = vmatpush1.bf16.msra.mxu0 %v2675
        %3920 = vmatprep.subr.bf16.mxu0 %v2684
        %3921 = vmatpush1.bf16.msra.mxu0 %v2683
        %3922 = vmatprep.subr.bf16.mxu0 %v2692
        %3923 = vmatpush1.bf16.msra.mxu0 %v2691
        %3924 = vmatprep.subr.bf16.mxu0 %v2700
        %3925 = vmatpush1.bf16.msra.mxu0 %v2699
        %3926 = vmatprep.subr.bf16.mxu0 %v2708
        %3927 = vmatpush1.bf16.msra.mxu0 %v2707
        %3928 = vmatprep.subr.bf16.mxu0 %v2716
        %3929 = vmatpush1.bf16.msra.mxu0 %v2715
        %3930 = vmatprep.subr.bf16.mxu0 %v2724
        %3931 = vmatpush1.bf16.msra.mxu0 %v2723
        %3932 = vmatprep.subr.bf16.mxu0 %v2732
        %3933 = vmatpush1.bf16.msra.mxu0 %v2731
        %3934 = vmatprep.subr.bf16.mxu0 %v2740
        %3935 = vmatpush1.bf16.msra.mxu0 %v2739
        %3936 = vmatprep.subr.bf16.mxu0 %v2748
        %3937 = vmatpush1.bf16.msra.mxu0 %v2747
        %3938 = vmatprep.subr.bf16.mxu0 %v2756
        %3939 = vmatpush1.bf16.msra.mxu0 %v2755
        %3940 = vmatprep.subr.bf16.mxu0 %v2764
        %3941 = vmatpush1.bf16.msra.mxu0 %v2763
        %3942 = vmatprep.subr.bf16.mxu0 %v2772
        %3943 = vmatpush1.bf16.msra.mxu0 %v2771
        %3944 = vmatprep.subr.bf16.mxu0 %v2780
        %3945 = vmatpush1.bf16.msra.mxu0 %v2779
        %3946 = vmatprep.subr.bf16.mxu0 %v2788
        %3947 = vmatpush1.bf16.msra.mxu0 %v2787
        %3948 = vmatprep.mubr.bf16.mxu0 %v732
        %3949 = vmatmul.mubr.bf16.gmra.mrb[0].mxu0 %v731
        %v3950 = vpop.f32.mrb[0].mxu0
        %v3951 = vadd.f32 %v3910, %v3950
        %v3952 = vpop.f32.mrb[0].mxu0
        %v3953 = vadd.f32 %v3912, %v3952
        %v3954 = vpop.f32.mrb[0].mxu0
        %v3955 = vpop.f32.mrb[0].mxu0
        %3956 = vdwg.mxu0
        %v3957 = vadd.f32 %v3459, %v3461
        %v3958 = vadd.f32 %v3957, %v3623
        %v3959 = vadd.f32 %v3958, %v3625
        %v3960 = vadd.f32 %v3959, %v3787
        %v3961 = vadd.f32 %v3960, %v3789
        %v3962 = vadd.f32 %v3961, %v3951
        %v3963 = vadd.f32 %v3962, %v3953
        %3964 = vadd.xlane.f32.xlu0 %v3963
        %v3965 = vpop.xlane.xlu0 %3964
        %v3966 = vmul.f32 %v3965, 0.0009765625
        %v3967 = vmul.f32 %v3459, %v3459
        %v3968 = vmul.f32 %v3461, %v3461
        %v3969 = vmul.f32 %v3623, %v3623
        %v3970 = vmul.f32 %v3625, %v3625
        %v3971 = vmul.f32 %v3787, %v3787
        %v3972 = vmul.f32 %v3789, %v3789
        %v3973 = vmul.f32 %v3951, %v3951
        %v3974 = vmul.f32 %v3953, %v3953
        %v3975 = vadd.f32 %v3967, %v3968
        %v3976 = vadd.f32 %v3975, %v3969
        %v3977 = vadd.f32 %v3976, %v3970
        %v3978 = vadd.f32 %v3977, %v3971
        %v3979 = vadd.f32 %v3978, %v3972
        %v3980 = vadd.f32 %v3979, %v3973
        %v3981 = vadd.f32 %v3980, %v3974
        %3982 = vadd.xlane.f32.xlu0 %v3981
        %v3983 = vpop.xlane.xlu0 %3982
        %v3984 = vmul.f32 %v3983, 0.0009765625
        %v3985 = vmul.f32 %v3966, %v3966
        %v3986 = vsub.f32 %v3984, %v3985
        %v3987 = vmax.f32 %v3986, 0.0
        %v3988 = vsub.f32 %v3459, %v3966
        %v3989 = vsub.f32 %v3461, %v3966
        %v3990 = vsub.f32 %v3623, %v3966
        %v3991 = vsub.f32 %v3625, %v3966
        %v3992 = vsub.f32 %v3787, %v3966
        %v3993 = vsub.f32 %v3789, %v3966
        %v3994 = vsub.f32 %v3951, %v3966
        %v3995 = vsub.f32 %v3953, %v3966
        %v3996 = vadd.f32 %v3987, 1e-12
        %v3997 = vrsqrt.pop %v3996
        %v3998 = vmul.f32 %v3988, %v3997
        %v3999 = vmul.f32 %v3989, %v3997
        %v4000 = vmul.f32 %v3990, %v3997
        %v4001 = vmul.f32 %v3991, %v3997
        %v4002 = vmul.f32 %v3992, %v3997
        %v4003 = vmul.f32 %v3993, %v3997
        %v4004 = vmul.f32 %v3994, %v3997
        %v4005 = vmul.f32 %v3995, %v3997
        %v4006 = vld [vmem:[%s2] sm:$0xff]
        %v4008 = vlaneseq
        %v4009 = vshrl.u32 %v4008, 7
        %v4010 = vsub.s32 0, %v4009
        %v4011 = vrot.slane %v4006, %v4010
        %v4012 = vlaneseq
        %v4013 = vshrl.u32 %v4012, 7
        %v4014 = vsub.s32 1, %v4013
        %v4015 = vrot.slane %v4006, %v4014
        %v4016 = vlaneseq
        %v4017 = vshrl.u32 %v4016, 7
        %v4018 = vsub.s32 2, %v4017
        %v4019 = vrot.slane %v4006, %v4018
        %v4020 = vlaneseq
        %v4021 = vshrl.u32 %v4020, 7
        %v4022 = vsub.s32 3, %v4021
        %v4023 = vrot.slane %v4006, %v4022
        %v4024 = vlaneseq
        %v4025 = vshrl.u32 %v4024, 7
        %v4026 = vsub.s32 4, %v4025
        %v4027 = vrot.slane %v4006, %v4026
        %v4028 = vlaneseq
        %v4029 = vshrl.u32 %v4028, 7
        %v4030 = vsub.s32 5, %v4029
        %v4031 = vrot.slane %v4006, %v4030
        %v4032 = vlaneseq
        %v4033 = vshrl.u32 %v4032, 7
        %v4034 = vsub.s32 6, %v4033
        %v4035 = vrot.slane %v4006, %v4034
        %v4036 = vlaneseq
        %v4037 = vshrl.u32 %v4036, 7
        %v4038 = vsub.s32 7, %v4037
        %v4039 = vrot.slane %v4006, %v4038
        %v4048 = vmul.f32 %v3998, %v4011
        %v4049 = vmul.f32 %v3999, %v4015
        %v4050 = vmul.f32 %v4000, %v4019
        %v4051 = vmul.f32 %v4001, %v4023
        %v4052 = vmul.f32 %v4002, %v4027
        %v4053 = vmul.f32 %v4003, %v4031
        %v4054 = vmul.f32 %v4004, %v4035
        %v4055 = vmul.f32 %v4005, %v4039
        %v4056 = vtanh.pop %v4048
        %v4057 = vtanh.pop %v4049
        %v4058 = vtanh.pop %v4050
        %v4059 = vtanh.pop %v4051
        %v4060 = vtanh.pop %v4052
        %v4061 = vtanh.pop %v4053
        %v4062 = vtanh.pop %v4054
        %v4063 = vtanh.pop %v4055
        %v4064 = vpack.c.bf16 %v4056, %v4056
        %v4065 = vpack.c.bf16 %v4057, %v4057
        %v4066 = vpack.c.bf16 %v4058, %v4058
        %v4067 = vpack.c.bf16 %v4059, %v4059
        %v4068 = vpack.c.bf16 %v4060, %v4060
        %v4069 = vpack.c.bf16 %v4061, %v4061
        %v4070 = vpack.c.bf16 %v4062, %v4062
        %v4071 = vpack.c.bf16 %v4063, %v4063
        %v4072 = vld [vmem:[%s3] sm:$0xf]
        %v4073 = vld [vmem:[%s3 + $0x4] sm:$0xf]
        %v4074 = vld [vmem:[%s3 + $0x8] sm:$0xf]
        %v4075 = vld [vmem:[%s3 + $0xc] sm:$0xf]
        %v4076 = vld [vmem:[%s3 + $0x10] sm:$0xf]
        %v4077 = vld [vmem:[%s3 + $0x14] sm:$0xf]
        %v4078 = vld [vmem:[%s3 + $0x18] sm:$0xf]
        %v4079 = vld [vmem:[%s3 + $0x1c] sm:$0xf]
        %v4080 = vld [vmem:[%s3 + $0x20] sm:$0xf]
        %v4081 = vld [vmem:[%s3 + $0x24] sm:$0xf]
        %v4082 = vld [vmem:[%s3 + $0x28] sm:$0xf]
        %v4083 = vld [vmem:[%s3 + $0x2c] sm:$0xf]
        %v4084 = vld [vmem:[%s3 + $0x30] sm:$0xf]
        %v4085 = vld [vmem:[%s3 + $0x34] sm:$0xf]
        %v4086 = vld [vmem:[%s3 + $0x38] sm:$0xf]
        %v4087 = vld [vmem:[%s3 + $0x3c] sm:$0xf]
        %v4088 = vld [vmem:[%s3 + $0x40] sm:$0xf]
        %v4089 = vld [vmem:[%s3 + $0x44] sm:$0xf]
        %v4090 = vld [vmem:[%s3 + $0x48] sm:$0xf]
        %v4091 = vld [vmem:[%s3 + $0x4c] sm:$0xf]
        %v4092 = vld [vmem:[%s3 + $0x50] sm:$0xf]
        %v4093 = vld [vmem:[%s3 + $0x54] sm:$0xf]
        %v4094 = vld [vmem:[%s3 + $0x58] sm:$0xf]
        %v4095 = vld [vmem:[%s3 + $0x5c] sm:$0xf]
        %v4096 = vld [vmem:[%s3 + $0x60] sm:$0xf]
        %v4097 = vld [vmem:[%s3 + $0x64] sm:$0xf]
        %v4098 = vld [vmem:[%s3 + $0x68] sm:$0xf]
        %v4099 = vld [vmem:[%s3 + $0x6c] sm:$0xf]
        %v4100 = vld [vmem:[%s3 + $0x70] sm:$0xf]
        %v4101 = vld [vmem:[%s3 + $0x74] sm:$0xf]
        %v4102 = vld [vmem:[%s3 + $0x78] sm:$0xf]
        %v4103 = vld [vmem:[%s3 + $0x7c] sm:$0xf]
        %v4104 = vld [vmem:[%s3 + $0x80] sm:$0xf]
        %v4105 = vld [vmem:[%s3 + $0x84] sm:$0xf]
        %v4106 = vld [vmem:[%s3 + $0x88] sm:$0xf]
        %v4107 = vld [vmem:[%s3 + $0x8c] sm:$0xf]
        %v4108 = vld [vmem:[%s3 + $0x90] sm:$0xf]
        %v4109 = vld [vmem:[%s3 + $0x94] sm:$0xf]
        %v4110 = vld [vmem:[%s3 + $0x98] sm:$0xf]
        %v4111 = vld [vmem:[%s3 + $0x9c] sm:$0xf]
        %v4112 = vld [vmem:[%s3 + $0xa0] sm:$0xf]
        %v4113 = vld [vmem:[%s3 + $0xa4] sm:$0xf]
        %v4114 = vld [vmem:[%s3 + $0xa8] sm:$0xf]
        %v4115 = vld [vmem:[%s3 + $0xac] sm:$0xf]
        %v4116 = vld [vmem:[%s3 + $0xb0] sm:$0xf]
        %v4117 = vld [vmem:[%s3 + $0xb4] sm:$0xf]
        %v4118 = vld [vmem:[%s3 + $0xb8] sm:$0xf]
        %v4119 = vld [vmem:[%s3 + $0xbc] sm:$0xf]
        %v4120 = vld [vmem:[%s3 + $0xc0] sm:$0xf]
        %v4121 = vld [vmem:[%s3 + $0xc4] sm:$0xf]
        %v4122 = vld [vmem:[%s3 + $0xc8] sm:$0xf]
        %v4123 = vld [vmem:[%s3 + $0xcc] sm:$0xf]
        %v4124 = vld [vmem:[%s3 + $0xd0] sm:$0xf]
        %v4125 = vld [vmem:[%s3 + $0xd4] sm:$0xf]
        %v4126 = vld [vmem:[%s3 + $0xd8] sm:$0xf]
        %v4127 = vld [vmem:[%s3 + $0xdc] sm:$0xf]
        %v4128 = vld [vmem:[%s3 + $0xe0] sm:$0xf]
        %v4129 = vld [vmem:[%s3 + $0xe4] sm:$0xf]
        %v4130 = vld [vmem:[%s3 + $0xe8] sm:$0xf]
        %v4131 = vld [vmem:[%s3 + $0xec] sm:$0xf]
        %v4132 = vld [vmem:[%s3 + $0xf0] sm:$0xf]
        %v4133 = vld [vmem:[%s3 + $0xf4] sm:$0xf]
        %v4134 = vld [vmem:[%s3 + $0xf8] sm:$0xf]
        %v4135 = vld [vmem:[%s3 + $0xfc] sm:$0xf]
        %v4136 = vld [vmem:[%s3 + $0x100] sm:$0xf]
        %v4137 = vld [vmem:[%s3 + $0x104] sm:$0xf]
        %v4138 = vld [vmem:[%s3 + $0x108] sm:$0xf]
        %v4139 = vld [vmem:[%s3 + $0x10c] sm:$0xf]
        %v4140 = vld [vmem:[%s3 + $0x110] sm:$0xf]
        %v4141 = vld [vmem:[%s3 + $0x114] sm:$0xf]
        %v4142 = vld [vmem:[%s3 + $0x118] sm:$0xf]
        %v4143 = vld [vmem:[%s3 + $0x11c] sm:$0xf]
        %v4144 = vld [vmem:[%s3 + $0x120] sm:$0xf]
        %v4145 = vld [vmem:[%s3 + $0x124] sm:$0xf]
        %v4146 = vld [vmem:[%s3 + $0x128] sm:$0xf]
        %v4147 = vld [vmem:[%s3 + $0x12c] sm:$0xf]
        %v4148 = vld [vmem:[%s3 + $0x130] sm:$0xf]
        %v4149 = vld [vmem:[%s3 + $0x134] sm:$0xf]
        %v4150 = vld [vmem:[%s3 + $0x138] sm:$0xf]
        %v4151 = vld [vmem:[%s3 + $0x13c] sm:$0xf]
        %v4152 = vld [vmem:[%s3 + $0x140] sm:$0xf]
        %v4153 = vld [vmem:[%s3 + $0x144] sm:$0xf]
        %v4154 = vld [vmem:[%s3 + $0x148] sm:$0xf]
        %v4155 = vld [vmem:[%s3 + $0x14c] sm:$0xf]
        %v4156 = vld [vmem:[%s3 + $0x150] sm:$0xf]
        %v4157 = vld [vmem:[%s3 + $0x154] sm:$0xf]
        %v4158 = vld [vmem:[%s3 + $0x158] sm:$0xf]
        %v4159 = vld [vmem:[%s3 + $0x15c] sm:$0xf]
        %v4160 = vld [vmem:[%s3 + $0x160] sm:$0xf]
        %v4161 = vld [vmem:[%s3 + $0x164] sm:$0xf]
        %v4162 = vld [vmem:[%s3 + $0x168] sm:$0xf]
        %v4163 = vld [vmem:[%s3 + $0x16c] sm:$0xf]
        %v4164 = vld [vmem:[%s3 + $0x170] sm:$0xf]
        %v4165 = vld [vmem:[%s3 + $0x174] sm:$0xf]
        %v4166 = vld [vmem:[%s3 + $0x178] sm:$0xf]
        %v4167 = vld [vmem:[%s3 + $0x17c] sm:$0xf]
        %v4168 = vld [vmem:[%s3 + $0x180] sm:$0xf]
        %v4169 = vld [vmem:[%s3 + $0x184] sm:$0xf]
        %v4170 = vld [vmem:[%s3 + $0x188] sm:$0xf]
        %v4171 = vld [vmem:[%s3 + $0x18c] sm:$0xf]
        %v4172 = vld [vmem:[%s3 + $0x190] sm:$0xf]
        %v4173 = vld [vmem:[%s3 + $0x194] sm:$0xf]
        %v4174 = vld [vmem:[%s3 + $0x198] sm:$0xf]
        %v4175 = vld [vmem:[%s3 + $0x19c] sm:$0xf]
        %v4176 = vld [vmem:[%s3 + $0x1a0] sm:$0xf]
        %v4177 = vld [vmem:[%s3 + $0x1a4] sm:$0xf]
        %v4178 = vld [vmem:[%s3 + $0x1a8] sm:$0xf]
        %v4179 = vld [vmem:[%s3 + $0x1ac] sm:$0xf]
        %v4180 = vld [vmem:[%s3 + $0x1b0] sm:$0xf]
        %v4181 = vld [vmem:[%s3 + $0x1b4] sm:$0xf]
        %v4182 = vld [vmem:[%s3 + $0x1b8] sm:$0xf]
        %v4183 = vld [vmem:[%s3 + $0x1bc] sm:$0xf]
        %v4184 = vld [vmem:[%s3 + $0x1c0] sm:$0xf]
        %v4185 = vld [vmem:[%s3 + $0x1c4] sm:$0xf]
        %v4186 = vld [vmem:[%s3 + $0x1c8] sm:$0xf]
        %v4187 = vld [vmem:[%s3 + $0x1cc] sm:$0xf]
        %v4188 = vld [vmem:[%s3 + $0x1d0] sm:$0xf]
        %v4189 = vld [vmem:[%s3 + $0x1d4] sm:$0xf]
        %v4190 = vld [vmem:[%s3 + $0x1d8] sm:$0xf]
        %v4191 = vld [vmem:[%s3 + $0x1dc] sm:$0xf]
        %v4192 = vld [vmem:[%s3 + $0x1e0] sm:$0xf]
        %v4193 = vld [vmem:[%s3 + $0x1e4] sm:$0xf]
        %v4194 = vld [vmem:[%s3 + $0x1e8] sm:$0xf]
        %v4195 = vld [vmem:[%s3 + $0x1ec] sm:$0xf]
        %v4196 = vld [vmem:[%s3 + $0x1f0] sm:$0xf]
        %v4197 = vld [vmem:[%s3 + $0x1f4] sm:$0xf]
        %v4198 = vld [vmem:[%s3 + $0x1f8] sm:$0xf]
        %v4199 = vld [vmem:[%s3 + $0x1fc] sm:$0xf]
        %v4328 = vunpack.c.l.b16 %v4072
        %v4329 = vunpack.c.l.b16 %v4073
        %v4330 = vunpack.c.l.b16 %v4074
        %v4331 = vunpack.c.l.b16 %v4075
        %v4332 = vunpack.c.l.b16 %v4076
        %v4333 = vunpack.c.l.b16 %v4077
        %v4334 = vunpack.c.l.b16 %v4078
        %v4335 = vunpack.c.l.b16 %v4079
        %v4336 = vunpack.c.l.b16 %v4080
        %v4337 = vunpack.c.l.b16 %v4081
        %v4338 = vunpack.c.l.b16 %v4082
        %v4339 = vunpack.c.l.b16 %v4083
        %v4340 = vunpack.c.l.b16 %v4084
        %v4341 = vunpack.c.l.b16 %v4085
        %v4342 = vunpack.c.l.b16 %v4086
        %v4343 = vunpack.c.l.b16 %v4087
        %v4344 = vunpack.c.l.b16 %v4088
        %v4345 = vunpack.c.l.b16 %v4089
        %v4346 = vunpack.c.l.b16 %v4090
        %v4347 = vunpack.c.l.b16 %v4091
        %v4348 = vunpack.c.l.b16 %v4092
        %v4349 = vunpack.c.l.b16 %v4093
        %v4350 = vunpack.c.l.b16 %v4094
        %v4351 = vunpack.c.l.b16 %v4095
        %v4352 = vunpack.c.l.b16 %v4096
        %v4353 = vunpack.c.l.b16 %v4097
        %v4354 = vunpack.c.l.b16 %v4098
        %v4355 = vunpack.c.l.b16 %v4099
        %v4356 = vunpack.c.l.b16 %v4100
        %v4357 = vunpack.c.l.b16 %v4101
        %v4358 = vunpack.c.l.b16 %v4102
        %v4359 = vunpack.c.l.b16 %v4103
        %v4360 = vunpack.c.l.b16 %v4104
        %v4361 = vunpack.c.l.b16 %v4105
        %v4362 = vunpack.c.l.b16 %v4106
        %v4363 = vunpack.c.l.b16 %v4107
        %v4364 = vunpack.c.l.b16 %v4108
        %v4365 = vunpack.c.l.b16 %v4109
        %v4366 = vunpack.c.l.b16 %v4110
        %v4367 = vunpack.c.l.b16 %v4111
        %v4368 = vunpack.c.l.b16 %v4112
        %v4369 = vunpack.c.l.b16 %v4113
        %v4370 = vunpack.c.l.b16 %v4114
        %v4371 = vunpack.c.l.b16 %v4115
        %v4372 = vunpack.c.l.b16 %v4116
        %v4373 = vunpack.c.l.b16 %v4117
        %v4374 = vunpack.c.l.b16 %v4118
        %v4375 = vunpack.c.l.b16 %v4119
        %v4376 = vunpack.c.l.b16 %v4120
        %v4377 = vunpack.c.l.b16 %v4121
        %v4378 = vunpack.c.l.b16 %v4122
        %v4379 = vunpack.c.l.b16 %v4123
        %v4380 = vunpack.c.l.b16 %v4124
        %v4381 = vunpack.c.l.b16 %v4125
        %v4382 = vunpack.c.l.b16 %v4126
        %v4383 = vunpack.c.l.b16 %v4127
        %v4384 = vunpack.c.l.b16 %v4128
        %v4385 = vunpack.c.l.b16 %v4129
        %v4386 = vunpack.c.l.b16 %v4130
        %v4387 = vunpack.c.l.b16 %v4131
        %v4388 = vunpack.c.l.b16 %v4132
        %v4389 = vunpack.c.l.b16 %v4133
        %v4390 = vunpack.c.l.b16 %v4134
        %v4391 = vunpack.c.l.b16 %v4135
        %v4392 = vunpack.c.l.b16 %v4136
        %v4393 = vunpack.c.l.b16 %v4137
        %v4394 = vunpack.c.l.b16 %v4138
        %v4395 = vunpack.c.l.b16 %v4139
        %v4396 = vunpack.c.l.b16 %v4140
        %v4397 = vunpack.c.l.b16 %v4141
        %v4398 = vunpack.c.l.b16 %v4142
        %v4399 = vunpack.c.l.b16 %v4143
        %v4400 = vunpack.c.l.b16 %v4144
        %v4401 = vunpack.c.l.b16 %v4145
        %v4402 = vunpack.c.l.b16 %v4146
        %v4403 = vunpack.c.l.b16 %v4147
        %v4404 = vunpack.c.l.b16 %v4148
        %v4405 = vunpack.c.l.b16 %v4149
        %v4406 = vunpack.c.l.b16 %v4150
        %v4407 = vunpack.c.l.b16 %v4151
        %v4408 = vunpack.c.l.b16 %v4152
        %v4409 = vunpack.c.l.b16 %v4153
        %v4410 = vunpack.c.l.b16 %v4154
        %v4411 = vunpack.c.l.b16 %v4155
        %v4412 = vunpack.c.l.b16 %v4156
        %v4413 = vunpack.c.l.b16 %v4157
        %v4414 = vunpack.c.l.b16 %v4158
        %v4415 = vunpack.c.l.b16 %v4159
        %v4416 = vunpack.c.l.b16 %v4160
        %v4417 = vunpack.c.l.b16 %v4161
        %v4418 = vunpack.c.l.b16 %v4162
        %v4419 = vunpack.c.l.b16 %v4163
        %v4420 = vunpack.c.l.b16 %v4164
        %v4421 = vunpack.c.l.b16 %v4165
        %v4422 = vunpack.c.l.b16 %v4166
        %v4423 = vunpack.c.l.b16 %v4167
        %v4424 = vunpack.c.l.b16 %v4168
        %v4425 = vunpack.c.l.b16 %v4169
        %v4426 = vunpack.c.l.b16 %v4170
        %v4427 = vunpack.c.l.b16 %v4171
        %v4428 = vunpack.c.l.b16 %v4172
        %v4429 = vunpack.c.l.b16 %v4173
        %v4430 = vunpack.c.l.b16 %v4174
        %v4431 = vunpack.c.l.b16 %v4175
        %v4432 = vunpack.c.l.b16 %v4176
        %v4433 = vunpack.c.l.b16 %v4177
        %v4434 = vunpack.c.l.b16 %v4178
        %v4435 = vunpack.c.l.b16 %v4179
        %v4436 = vunpack.c.l.b16 %v4180
        %v4437 = vunpack.c.l.b16 %v4181
        %v4438 = vunpack.c.l.b16 %v4182
        %v4439 = vunpack.c.l.b16 %v4183
        %v4440 = vunpack.c.l.b16 %v4184
        %v4441 = vunpack.c.l.b16 %v4185
        %v4442 = vunpack.c.l.b16 %v4186
        %v4443 = vunpack.c.l.b16 %v4187
        %v4444 = vunpack.c.l.b16 %v4188
        %v4445 = vunpack.c.l.b16 %v4189
        %v4446 = vunpack.c.l.b16 %v4190
        %v4447 = vunpack.c.l.b16 %v4191
        %v4448 = vunpack.c.l.b16 %v4192
        %v4449 = vunpack.c.l.b16 %v4193
        %v4450 = vunpack.c.l.b16 %v4194
        %v4451 = vunpack.c.l.b16 %v4195
        %v4452 = vunpack.c.l.b16 %v4196
        %v4453 = vunpack.c.l.b16 %v4197
        %v4454 = vunpack.c.l.b16 %v4198
        %v4455 = vunpack.c.l.b16 %v4199
        %v4456 = vpack.c.b16 %v4329, %v4328
        %v4457 = vpack.c.b16 %v4331, %v4330
        %v4458 = vpack.c.b16 %v4333, %v4332
        %v4459 = vpack.c.b16 %v4335, %v4334
        %v4460 = vpack.c.b16 %v4337, %v4336
        %v4461 = vpack.c.b16 %v4339, %v4338
        %v4462 = vpack.c.b16 %v4341, %v4340
        %v4463 = vpack.c.b16 %v4343, %v4342
        %v4464 = vpack.c.b16 %v4345, %v4344
        %v4465 = vpack.c.b16 %v4347, %v4346
        %v4466 = vpack.c.b16 %v4349, %v4348
        %v4467 = vpack.c.b16 %v4351, %v4350
        %v4468 = vpack.c.b16 %v4353, %v4352
        %v4469 = vpack.c.b16 %v4355, %v4354
        %v4470 = vpack.c.b16 %v4357, %v4356
        %v4471 = vpack.c.b16 %v4359, %v4358
        %v4472 = vpack.c.b16 %v4361, %v4360
        %v4473 = vpack.c.b16 %v4363, %v4362
        %v4474 = vpack.c.b16 %v4365, %v4364
        %v4475 = vpack.c.b16 %v4367, %v4366
        %v4476 = vpack.c.b16 %v4369, %v4368
        %v4477 = vpack.c.b16 %v4371, %v4370
        %v4478 = vpack.c.b16 %v4373, %v4372
        %v4479 = vpack.c.b16 %v4375, %v4374
        %v4480 = vpack.c.b16 %v4377, %v4376
        %v4481 = vpack.c.b16 %v4379, %v4378
        %v4482 = vpack.c.b16 %v4381, %v4380
        %v4483 = vpack.c.b16 %v4383, %v4382
        %v4484 = vpack.c.b16 %v4385, %v4384
        %v4485 = vpack.c.b16 %v4387, %v4386
        %v4486 = vpack.c.b16 %v4389, %v4388
        %v4487 = vpack.c.b16 %v4391, %v4390
        %v4488 = vpack.c.b16 %v4393, %v4392
        %v4489 = vpack.c.b16 %v4395, %v4394
        %v4490 = vpack.c.b16 %v4397, %v4396
        %v4491 = vpack.c.b16 %v4399, %v4398
        %v4492 = vpack.c.b16 %v4401, %v4400
        %v4493 = vpack.c.b16 %v4403, %v4402
        %v4494 = vpack.c.b16 %v4405, %v4404
        %v4495 = vpack.c.b16 %v4407, %v4406
        %v4496 = vpack.c.b16 %v4409, %v4408
        %v4497 = vpack.c.b16 %v4411, %v4410
        %v4498 = vpack.c.b16 %v4413, %v4412
        %v4499 = vpack.c.b16 %v4415, %v4414
        %v4500 = vpack.c.b16 %v4417, %v4416
        %v4501 = vpack.c.b16 %v4419, %v4418
        %v4502 = vpack.c.b16 %v4421, %v4420
        %v4503 = vpack.c.b16 %v4423, %v4422
        %v4504 = vpack.c.b16 %v4425, %v4424
        %v4505 = vpack.c.b16 %v4427, %v4426
        %v4506 = vpack.c.b16 %v4429, %v4428
        %v4507 = vpack.c.b16 %v4431, %v4430
        %v4508 = vpack.c.b16 %v4433, %v4432
        %v4509 = vpack.c.b16 %v4435, %v4434
        %v4510 = vpack.c.b16 %v4437, %v4436
        %v4511 = vpack.c.b16 %v4439, %v4438
        %v4512 = vpack.c.b16 %v4441, %v4440
        %v4513 = vpack.c.b16 %v4443, %v4442
        %v4514 = vpack.c.b16 %v4445, %v4444
        %v4515 = vpack.c.b16 %v4447, %v4446
        %v4516 = vpack.c.b16 %v4449, %v4448
        %v4517 = vpack.c.b16 %v4451, %v4450
        %v4518 = vpack.c.b16 %v4453, %v4452
        %v4519 = vpack.c.b16 %v4455, %v4454
        %4584 = vmatprep.subr.bf16.mxu0 0
        %4585 = vmatpush1.bf16.msra.mxu0 %v4456
        %4586 = vmatprep.subr.bf16.mxu0 0
        %4587 = vmatpush1.bf16.msra.mxu0 %v4457
        %4588 = vmatprep.subr.bf16.mxu0 0
        %4589 = vmatpush1.bf16.msra.mxu0 %v4458
        %4590 = vmatprep.subr.bf16.mxu0 0
        %4591 = vmatpush1.bf16.msra.mxu0 %v4459
        %4592 = vmatprep.subr.bf16.mxu0 0
        %4593 = vmatpush1.bf16.msra.mxu0 %v4460
        %4594 = vmatprep.subr.bf16.mxu0 0
        %4595 = vmatpush1.bf16.msra.mxu0 %v4461
        %4596 = vmatprep.subr.bf16.mxu0 0
        %4597 = vmatpush1.bf16.msra.mxu0 %v4462
        %4598 = vmatprep.subr.bf16.mxu0 0
        %4599 = vmatpush1.bf16.msra.mxu0 %v4463
        %4600 = vmatprep.subr.bf16.mxu0 0
        %4601 = vmatpush1.bf16.msra.mxu0 %v4464
        %4602 = vmatprep.subr.bf16.mxu0 0
        %4603 = vmatpush1.bf16.msra.mxu0 %v4465
        %4604 = vmatprep.subr.bf16.mxu0 0
        %4605 = vmatpush1.bf16.msra.mxu0 %v4466
        %4606 = vmatprep.subr.bf16.mxu0 0
        %4607 = vmatpush1.bf16.msra.mxu0 %v4467
        %4608 = vmatprep.subr.bf16.mxu0 0
        %4609 = vmatpush1.bf16.msra.mxu0 %v4468
        %4610 = vmatprep.subr.bf16.mxu0 0
        %4611 = vmatpush1.bf16.msra.mxu0 %v4469
        %4612 = vmatprep.subr.bf16.mxu0 0
        %4613 = vmatpush1.bf16.msra.mxu0 %v4470
        %4614 = vmatprep.subr.bf16.mxu0 0
        %4615 = vmatpush1.bf16.msra.mxu0 %v4471
        %4616 = vmatprep.mubr.bf16.mxu0 %v4065
        %4617 = vmatmul.mubr.bf16.gmra.mrb[0].mxu0 %v4064
        %v4618 = vpop.f32.mrb[0].mxu0
        %v4619 = vadd.f32 0.0, %v4618
        %v4620 = vpop.f32.mrb[0].mxu0
        %v4621 = vpop.f32.mrb[0].mxu0
        %v4622 = vpop.f32.mrb[0].mxu0
        %4623 = vdwg.mxu0
        %4624 = vmatprep.subr.bf16.mxu0 0
        %4625 = vmatpush1.bf16.msra.mxu0 %v4472
        %4626 = vmatprep.subr.bf16.mxu0 0
        %4627 = vmatpush1.bf16.msra.mxu0 %v4473
        %4628 = vmatprep.subr.bf16.mxu0 0
        %4629 = vmatpush1.bf16.msra.mxu0 %v4474
        %4630 = vmatprep.subr.bf16.mxu0 0
        %4631 = vmatpush1.bf16.msra.mxu0 %v4475
        %4632 = vmatprep.subr.bf16.mxu0 0
        %4633 = vmatpush1.bf16.msra.mxu0 %v4476
        %4634 = vmatprep.subr.bf16.mxu0 0
        %4635 = vmatpush1.bf16.msra.mxu0 %v4477
        %4636 = vmatprep.subr.bf16.mxu0 0
        %4637 = vmatpush1.bf16.msra.mxu0 %v4478
        %4638 = vmatprep.subr.bf16.mxu0 0
        %4639 = vmatpush1.bf16.msra.mxu0 %v4479
        %4640 = vmatprep.subr.bf16.mxu0 0
        %4641 = vmatpush1.bf16.msra.mxu0 %v4480
        %4642 = vmatprep.subr.bf16.mxu0 0
        %4643 = vmatpush1.bf16.msra.mxu0 %v4481
        %4644 = vmatprep.subr.bf16.mxu0 0
        %4645 = vmatpush1.bf16.msra.mxu0 %v4482
        %4646 = vmatprep.subr.bf16.mxu0 0
        %4647 = vmatpush1.bf16.msra.mxu0 %v4483
        %4648 = vmatprep.subr.bf16.mxu0 0
        %4649 = vmatpush1.bf16.msra.mxu0 %v4484
        %4650 = vmatprep.subr.bf16.mxu0 0
        %4651 = vmatpush1.bf16.msra.mxu0 %v4485
        %4652 = vmatprep.subr.bf16.mxu0 0
        %4653 = vmatpush1.bf16.msra.mxu0 %v4486
        %4654 = vmatprep.subr.bf16.mxu0 0
        %4655 = vmatpush1.bf16.msra.mxu0 %v4487
        %4656 = vmatprep.mubr.bf16.mxu0 %v4067
        %4657 = vmatmul.mubr.bf16.gmra.mrb[0].mxu0 %v4066
        %v4658 = vpop.f32.mrb[0].mxu0
        %v4659 = vadd.f32 %v4619, %v4658
        %v4660 = vpop.f32.mrb[0].mxu0
        %v4661 = vpop.f32.mrb[0].mxu0
        %v4662 = vpop.f32.mrb[0].mxu0
        %4663 = vdwg.mxu0
        %4664 = vmatprep.subr.bf16.mxu0 0
        %4665 = vmatpush1.bf16.msra.mxu0 %v4488
        %4666 = vmatprep.subr.bf16.mxu0 0
        %4667 = vmatpush1.bf16.msra.mxu0 %v4489
        %4668 = vmatprep.subr.bf16.mxu0 0
        %4669 = vmatpush1.bf16.msra.mxu0 %v4490
        %4670 = vmatprep.subr.bf16.mxu0 0
        %4671 = vmatpush1.bf16.msra.mxu0 %v4491
        %4672 = vmatprep.subr.bf16.mxu0 0
        %4673 = vmatpush1.bf16.msra.mxu0 %v4492
        %4674 = vmatprep.subr.bf16.mxu0 0
        %4675 = vmatpush1.bf16.msra.mxu0 %v4493
        %4676 = vmatprep.subr.bf16.mxu0 0
        %4677 = vmatpush1.bf16.msra.mxu0 %v4494
        %4678 = vmatprep.subr.bf16.mxu0 0
        %4679 = vmatpush1.bf16.msra.mxu0 %v4495
        %4680 = vmatprep.subr.bf16.mxu0 0
        %4681 = vmatpush1.bf16.msra.mxu0 %v4496
        %4682 = vmatprep.subr.bf16.mxu0 0
        %4683 = vmatpush1.bf16.msra.mxu0 %v4497
        %4684 = vmatprep.subr.bf16.mxu0 0
        %4685 = vmatpush1.bf16.msra.mxu0 %v4498
        %4686 = vmatprep.subr.bf16.mxu0 0
        %4687 = vmatpush1.bf16.msra.mxu0 %v4499
        %4688 = vmatprep.subr.bf16.mxu0 0
        %4689 = vmatpush1.bf16.msra.mxu0 %v4500
        %4690 = vmatprep.subr.bf16.mxu0 0
        %4691 = vmatpush1.bf16.msra.mxu0 %v4501
        %4692 = vmatprep.subr.bf16.mxu0 0
        %4693 = vmatpush1.bf16.msra.mxu0 %v4502
        %4694 = vmatprep.subr.bf16.mxu0 0
        %4695 = vmatpush1.bf16.msra.mxu0 %v4503
        %4696 = vmatprep.mubr.bf16.mxu0 %v4069
        %4697 = vmatmul.mubr.bf16.gmra.mrb[0].mxu0 %v4068
        %v4698 = vpop.f32.mrb[0].mxu0
        %v4699 = vadd.f32 %v4659, %v4698
        %v4700 = vpop.f32.mrb[0].mxu0
        %v4701 = vpop.f32.mrb[0].mxu0
        %v4702 = vpop.f32.mrb[0].mxu0
        %4703 = vdwg.mxu0
        %4704 = vmatprep.subr.bf16.mxu0 0
        %4705 = vmatpush1.bf16.msra.mxu0 %v4504
        %4706 = vmatprep.subr.bf16.mxu0 0
        %4707 = vmatpush1.bf16.msra.mxu0 %v4505
        %4708 = vmatprep.subr.bf16.mxu0 0
        %4709 = vmatpush1.bf16.msra.mxu0 %v4506
        %4710 = vmatprep.subr.bf16.mxu0 0
        %4711 = vmatpush1.bf16.msra.mxu0 %v4507
        %4712 = vmatprep.subr.bf16.mxu0 0
        %4713 = vmatpush1.bf16.msra.mxu0 %v4508
        %4714 = vmatprep.subr.bf16.mxu0 0
        %4715 = vmatpush1.bf16.msra.mxu0 %v4509
        %4716 = vmatprep.subr.bf16.mxu0 0
        %4717 = vmatpush1.bf16.msra.mxu0 %v4510
        %4718 = vmatprep.subr.bf16.mxu0 0
        %4719 = vmatpush1.bf16.msra.mxu0 %v4511
        %4720 = vmatprep.subr.bf16.mxu0 0
        %4721 = vmatpush1.bf16.msra.mxu0 %v4512
        %4722 = vmatprep.subr.bf16.mxu0 0
        %4723 = vmatpush1.bf16.msra.mxu0 %v4513
        %4724 = vmatprep.subr.bf16.mxu0 0
        %4725 = vmatpush1.bf16.msra.mxu0 %v4514
        %4726 = vmatprep.subr.bf16.mxu0 0
        %4727 = vmatpush1.bf16.msra.mxu0 %v4515
        %4728 = vmatprep.subr.bf16.mxu0 0
        %4729 = vmatpush1.bf16.msra.mxu0 %v4516
        %4730 = vmatprep.subr.bf16.mxu0 0
        %4731 = vmatpush1.bf16.msra.mxu0 %v4517
        %4732 = vmatprep.subr.bf16.mxu0 0
        %4733 = vmatpush1.bf16.msra.mxu0 %v4518
        %4734 = vmatprep.subr.bf16.mxu0 0
        %4735 = vmatpush1.bf16.msra.mxu0 %v4519
        %4736 = vmatprep.mubr.bf16.mxu0 %v4071
        %4737 = vmatmul.mubr.bf16.gmra.mrb[0].mxu0 %v4070
        %v4738 = vpop.f32.mrb[0].mxu0
        %v4739 = vadd.f32 %v4699, %v4738
        %v4740 = vpop.f32.mrb[0].mxu0
        %v4741 = vpop.f32.mrb[0].mxu0
        %v4742 = vpop.f32.mrb[0].mxu0
        %4743 = vdwg.mxu0
        %4744 = vst [vmem:[%s190] sm:$0xff] %v4739
        %s4745 = sand.u32 %s115, 1
        %s4746 = scalar_lea.sflag [#allocation3], %s4745
        %s4747 = sand.u32 %s115, 1
        %s4748 = smul.addr %s4747, 8
        %s4749 = scalar_lea.vmem [#allocation2], %s4748
        // Predicated region
        $region37: #{fc_cls_forward.1} parent=35 // pred_check
          %p4750 = pneg %p125
        $region38: #{fc_cls_forward.1} parent=35 // pred_check_branch
          %4752 = sbr.rel (%p4750) target = $region40
        $region39: #{fc_cls_forward.1} parent=35 // pred_region
          %s4754 = ssub.s32 128, 128
          %4755 = vsyncadd %s4746, %s4754
          %s4756 = smul.addr %s18, 128
          %s4757 = scalar_lea.hbm %s4, %s4756
          %s4759 = sshll.u32 %s4749, 4
          %s4760 = int_to_ptr.vmem [resolvable:$true] %s4759
          %4762 = dma.vmem_to_hbm [thread:$0]  %s4760, 128, %s4757, %s4746
        $region40: #{fc_cls_forward.1} parent=35 // pred_fallthru
          _
      $region36: #{fc_cls_forward.1} parent=5 // pred_fallthru
        _
      %p4763 = scmp.le.s32.totalorder 2, %s13
      // Predicated region
      $region41: #{fc_cls_forward.1} parent=5 // pred_check
        %p4764 = pneg %p4763
      $region42: #{fc_cls_forward.1} parent=5 // pred_check_branch
        %4766 = sbr.rel (%p4764) target = $region44
      $region43: #{fc_cls_forward.1} parent=5 // pred_region
        %s4767 = ssub.s32 %s13, 2
        // Predicated region
        $region45: #{fc_cls_forward.1} parent=43 // pred_check
          %p4768 = pneg %p131
        $region46: #{fc_cls_forward.1} parent=43 // pred_check_branch
          %4770 = sbr.rel (%p4768) target = $region48
        $region47: #{fc_cls_forward.1} parent=43 // pred_region
          %s4771 = sand.u32 %s116, 1
          %s4772 = scalar_lea.sflag [#allocation3], %s4771
          %s4773 = sand.u32 %s116, 1
          %s4774 = smul.addr %s4773, 8
          %s4775 = scalar_lea.vmem [#allocation2], %s4774
          %4776 = dma.done %s4772, 128
        $region48: #{fc_cls_forward.1} parent=43 // pred_fallthru
          _
      $region44: #{fc_cls_forward.1} parent=5 // pred_fallthru
        _
    $region6: #{fc_cls_forward.1} parent=1 // loop_footer
      %s17 = sadd.s32 1, %s13
    $region7: #{fc_cls_forward.1} parent=1 // loop_footer_branch
      %12 = sbr.rel target = $region3
    $region8: #{fc_cls_forward.1} parent=1 // loop_exit
      _
    %4777 = vsyncpa [#allocation3], 1
    %s4778 = scalar_lea.sflag [#allocation3], 1
    %4779 = vsyncpa %s4778, 1

</llo_original>
